<compile_context>
chip_gen: v6e
topology: v6e:2x2x1
jax: 0.10.0
libtpu: 0.0.40
codegen_flags: <defaults>
</compile_context>

<pallas_src>
import functools
import math

import jax
import jax.numpy as jnp
from jax.experimental import pallas as pl
from jax.experimental.pallas import tpu as pltpu

MASK_NEG = -1e30  # finite "minus infinity": avoids inf - inf = NaN in online softmax


# ---------------------------------------------------------------------------
# Kernel 1: fused Q/K/V input projections (bf16 MXU matmuls, f32 accumulation)
#           emitting head-major (B, H, S, d_k) layouts for the attention kernel.
# ---------------------------------------------------------------------------
def qkv_proj_kernel(q_ref, k_ref, v_ref,
                    wq_ref, bq_ref, wk_ref, bk_ref, wv_ref, bv_ref,
                    qo_ref, ko_ref, vo_ref, *, num_heads, d_k):
    def proj(x_ref, w_ref, b_ref, o_ref):
        # One lane-dense (TS, D) x (D, D) MXU matmul, then split into heads ONCE
        # here (outside the attention hot loop).
        y = jnp.dot(x_ref[0], w_ref[...], preferred_element_type=jnp.float32)
        y = (y + b_ref[...]).astype(jnp.bfloat16)          # (TS, D)
        for h in range(num_heads):                          # H small, once per tile
            o_ref[0, h] = y[:, h * d_k:(h + 1) * d_k]

    proj(q_ref, wq_ref, bq_ref, qo_ref)   # 1/sqrt(d_k) already folded into wq/bq
    proj(k_ref, wk_ref, bk_ref, ko_ref)
    proj(v_ref, wv_ref, bv_ref, vo_ref)


# ---------------------------------------------------------------------------
# Kernel 2: flash-style attention (online softmax over KV tiles, head-batched)
#           with dead-tile skipping + fused output projection.
# ---------------------------------------------------------------------------
def flash_attn_kernel(tile_any_ref, kv_clamp_ref,          # scalar-prefetch (SMEM)
                      q_ref, k_ref, v_ref, mask_ref, wo_ref, bo_ref,
                      o_ref, m_scr, l_scr, acc_scr, *, num_heads):
    b, qi, ki = pl.program_id(0), pl.program_id(1), pl.program_id(2)
    nq, nkv = pl.num_programs(1), pl.num_programs(2)

    @pl.when(ki == 0)
    def _init():
        m_scr[...] = jnp.full_like(m_scr, MASK_NEG)
        l_scr[...] = jnp.zeros_like(l_scr)
        acc_scr[...] = jnp.zeros_like(acc_scr)

    # Skip all MXU/EUP work for fully-masked (b, qi, ki) tiles.
    active = tile_any_ref[(b * nq + qi) * nkv + ki] != 0

    @pl.when(active)
    def _compute():
        q = q_ref[0]                       # (H, TQ, d_k) bf16, scale folded into W_q
        k = k_ref[0]                       # (H, TK, d_k) bf16
        v = v_ref[0]                       # (H, TK, d_k) bf16

        # Additive mask bias, built once per tile and shared by every head.
        bias = jnp.where(mask_ref[0] == 0, MASK_NEG, 0.0).astype(jnp.float32)  # (TQ, TK)

        # Head-batched Q @ K^T (contract d_k, no transpose needed).
        s = jnp.einsum("hqd,hkd->hqk", q, k,
                       preferred_element_type=jnp.float32)   # (H, TQ, TK) f32
        s = s + bias[None]

        m_prev = m_scr[...]                                   # (H, TQ, 1)
        m_new = jnp.maximum(m_prev, jnp.max(s, axis=-1, keepdims=True))
        alpha = jnp.exp(m_prev - m_new)
        # f32 exp everywhere (v5e-safe); bf16 exp is a v6e/v7x-only option.
        p = jnp.exp(s - m_new)                                # (H, TQ, TK) f32
        l_scr[...] = alpha * l_scr[...] + jnp.sum(p, axis=-1, keepdims=True)
        pv = jnp.einsum("hqk,hkd->hqd", p.astype(jnp.bfloat16), v,
                        preferred_element_type=jnp.float32)   # (H, TQ, d_k)
        acc_scr[...] = alpha * acc_scr[...] + pv
        m_scr[...] = m_new
    # TODO(synk): nn.Dropout on attention weights is identity here (inference mode).

    @pl.when(ki == nkv - 1)
    def _finalize():
        l = l_scr[...]
        # Rows masked everywhere (impossible for causal masks) would give l=0
        # (reference yields NaN); emit a finite bias-only row instead of NaN.
        l_safe = jnp.where(l == 0.0, 1.0, l)
        ctx = acc_scr[...] * pl.reciprocal(l_safe, approx=True)      # (H, TQ, d_k)
        ctx2 = jnp.concatenate([ctx[h] for h in range(num_heads)], axis=-1)  # (TQ, D)
        out = jnp.dot(ctx2.astype(jnp.bfloat16), wo_ref[...],
                      preferred_element_type=jnp.float32) + bo_ref[...]
        o_ref[0] = out.astype(o_ref.dtype)


# ---------------------------------------------------------------------------
# VMEM budgeting helpers (generation-aware cap; double-buffering counted).
# ---------------------------------------------------------------------------
def _vmem_limit(footprint_bytes):
    try:
        cap = pltpu.get_tpu_info().vmem_capacity_bytes
    except Exception:
        cap = 64 * 1024 * 1024   # conservative (v7x per-core VMEM)
    limit = max(2 * footprint_bytes, 32 * 1024 * 1024)
    return int(min(limit, int(0.8 * cap)))


def _attn_vmem_bytes(tq, tk, d, num_heads, d_k):
    lane, dbl = 128, 2
    dkp = max(d_k, lane)                                        # lane padding
    qkv_in = dbl * num_heads * (tq + 2 * tk) * dkp * 2          # bf16 Q/K/V tiles
    mask_in = dbl * tq * tk                                     # int8 mask tile
    w_b = dbl * (d * d * 2 + d * 4)                             # wo bf16, bo f32
    out_b = dbl * tq * d * 4                                    # f32 output tile
    scr_b = num_heads * tq * (2 * lane + dkp) * 4               # m, l, acc (padded)
    tmp_b = 2 * num_heads * tq * tk * 4                         # s / p intermediates
    return qkv_in + mask_in + w_b + out_b + scr_b + tmp_b


def _proj_vmem_bytes(ts, d, num_heads, d_k):
    lane, dbl = 128, 2
    return dbl * (3 * ts * d * 2 + 3 * (d * d * 2 + d * 4)
                  + 3 * num_heads * ts * max(d_k, lane) * 2)


# ---------------------------------------------------------------------------
# Wrapper
# ---------------------------------------------------------------------------
def masked_multi_head_attention(q, k, v, mask, params, num_heads,
                                *, q_tile=256, kv_tile=256, proj_tile=256):
    B, S, D = q.shape
    assert D % num_heads == 0
    d_k = D // num_heads
    wq, bq, wk, bk, wv, bv, wo, bo = params

    TQ, TK, TS = min(q_tile, S), min(kv_tile, S), min(proj_tile, S)
    assert S % TQ == 0 and S % TK == 0 and S % TS == 0, "S must be divisible by tile sizes"
    nq, nkv = S // TQ, S // TK

    bf16 = jnp.bfloat16
    scale = 1.0 / math.sqrt(d_k)

    # bf16 operands for the MXU (f32 accumulation inside the kernels).
    qb, kb, vb = (x.astype(bf16) for x in (q, k, v))
    # Fold 1/sqrt(d_k) into the Q projection weights/bias (no in-kernel scale pass).
    wqb = (wq * scale).astype(bf16)
    bqf = (bq * scale).astype(jnp.float32)
    wkb, wvb, wob = (w.astype(bf16) for w in (wk, wv, wo))
    bkf, bvf, bof = (b.astype(jnp.float32) for b in (bk, bv, bo))

    # int8 mask stream (nonzero = attend): 4x less HBM/VMEM than f32.
    mask_bool = (mask != 0)
    mask_i8 = mask_bool.astype(jnp.int8)

    # -------------------- kernel 1: q/k/v projections (head-major out) ------
    seq_spec = pl.BlockSpec((1, TS, D), lambda b, s: (b, s, 0))
    w_spec = pl.BlockSpec((D, D), lambda b, s: (0, 0))
    b_spec = pl.BlockSpec((1, D), lambda b, s: (0, 0))
    hm_spec = pl.BlockSpec((1, num_heads, TS, d_k), lambda b, s: (b, 0, s, 0))
    hm_shape = jax.ShapeDtypeStruct((B, num_heads, S, d_k), bf16)

    Qh, Kh, Vh = pl.pallas_call(
        functools.partial(qkv_proj_kernel, num_heads=num_heads, d_k=d_k),
        grid=(B, S // TS),
        in_specs=[seq_spec, seq_spec, seq_spec,
                  w_spec, b_spec, w_spec, b_spec, w_spec, b_spec],
        out_specs=[hm_spec, hm_spec, hm_spec],
        out_shape=[hm_shape, hm_shape, hm_shape],
        compiler_params=pltpu.CompilerParams(
            dimension_semantics=("parallel", "parallel"),
            vmem_limit_bytes=_vmem_limit(_proj_vmem_bytes(TS, D, num_heads, d_k))),
    )(qb, kb, vb, wqb, bqf, wkb, bkf, wvb, bvf)

    # -------------------- kernel 2: flash attention + output projection -----
    # Per-tile "any attend" table and per-(b, q-tile) last-active kv-tile clamp.
    tile_any = mask_bool.reshape(B, nq, TQ, nkv, TK).any(axis=(2, 4))     # (B, nq, nkv)
    kv_idx = jax.lax.broadcasted_iota(jnp.int32, tile_any.shape, 2)
    kv_last = jnp.max(jnp.where(tile_any, kv_idx, -1), axis=-1)           # (B, nq)
    kv_clamp = jnp.maximum(kv_last, 0).astype(jnp.int32).reshape(-1)      # (B*nq,)
    tile_any_i32 = tile_any.astype(jnp.int32).reshape(-1)                 # (B*nq*nkv,)

    def kv_map(b, qi, ki, ta, cl):    # clamp dead tail tiles -> no re-DMA
        return (b, 0, jnp.minimum(ki, cl[b * nq + qi]), 0)

    def mask_map(b, qi, ki, ta, cl):
        return (b, qi, jnp.minimum(ki, cl[b * nq + qi]))

    grid_spec = pltpu.PrefetchScalarGridSpec(
        num_scalar_prefetch=2,
        grid=(B, nq, nkv),
        in_specs=[
            pl.BlockSpec((1, num_heads, TQ, d_k),
                         lambda b, qi, ki, ta, cl: (b, 0, qi, 0)),         # Q
            pl.BlockSpec((1, num_heads, TK, d_k), kv_map),                 # K
            pl.BlockSpec((1, num_heads, TK, d_k), kv_map),                 # V
            pl.BlockSpec((1, TQ, TK), mask_map),                           # mask (int8)
            pl.BlockSpec((D, D), lambda b, qi, ki, ta, cl: (0, 0)),        # wo (bf16)
            pl.BlockSpec((1, D), lambda b, qi, ki, ta, cl: (0, 0)),        # bo (f32)
        ],
        out_specs=pl.BlockSpec((1, TQ, D), lambda b, qi, ki, ta, cl: (b, qi, 0)),
        scratch_shapes=[
            pltpu.VMEM((num_heads, TQ, 1), jnp.float32),     # running max  m
            pltpu.VMEM((num_heads, TQ, 1), jnp.float32),     # running sum  l
            pltpu.VMEM((num_heads, TQ, d_k), jnp.float32),   # running ctx  acc
        ])

    out = pl.pallas_call(
        functools.partial(flash_attn_kernel, num_heads=num_heads),
        grid_spec=grid_spec,
        out_shape=jax.ShapeDtypeStruct((B, S, D), jnp.float32),
        compiler_params=pltpu.CompilerParams(
            dimension_semantics=("parallel", "parallel", "arbitrary"),
            vmem_limit_bytes=_vmem_limit(_attn_vmem_bytes(TQ, TK, D, num_heads, d_k))),
    )(tile_any_i32, kv_clamp, Qh, Kh, Vh, mask_i8, wob, bof)
    return out


def reference_mha(q, k, v, mask, params, num_heads):
    """Pure-JAX f32 reference replicating the PyTorch forward (dropout = identity)."""
    wq, bq, wk, bk, wv, bv, wo, bo = params
    B, S, D = q.shape
    d_k = D // num_heads

    def proj(x, w, b):
        return x @ w + b  # w already (D_in, D_out)

    def split(x):
        return x.reshape(B, S, num_heads, d_k).transpose(0, 2, 1, 3)  # (B,H,S,dk)

    Q, K, V = split(proj(q, wq, bq)), split(proj(k, wk, bk)), split(proj(v, wv, bv))
    scores = jnp.einsum("bhqd,bhkd->bhqk", Q, K) / math.sqrt(d_k)
    scores = jnp.where(mask[:, None, :, :] == 0, -jnp.inf, scores)
    attn = jax.nn.softmax(scores, axis=-1)
    out = jnp.einsum("bhqk,bhkd->bhqd", attn, V)
    out = out.transpose(0, 2, 1, 3).reshape(B, S, D)
    return out @ wo + bo


if __name__ == "__main__":
    # Small but tile-exercising shapes: 2x2 q/kv tiles at the default TQ=TK=256
    # (so the causal mask actually skips the (qi=0, ki=1) tile), lane-dense
    # D=128, H=4 heads (d_k=32).
    B, S, D, H = 2, 512, 128, 4

    key = jax.random.PRNGKey(0)
    keys = jax.random.split(key, 12)

    # Deterministic synthetic parameters (already transposed to (D_in, D_out)).
    wscale = 1.0 / math.sqrt(D)
    wq = jax.random.uniform(keys[0], (D, D), jnp.float32, -wscale, wscale)
    bq = jax.random.uniform(keys[1], (1, D), jnp.float32, -wscale, wscale)
    wk = jax.random.uniform(keys[2], (D, D), jnp.float32, -wscale, wscale)
    bk = jax.random.uniform(keys[3], (1, D), jnp.float32, -wscale, wscale)
    wv = jax.random.uniform(keys[4], (D, D), jnp.float32, -wscale, wscale)
    bv = jax.random.uniform(keys[5], (1, D), jnp.float32, -wscale, wscale)
    wo = jax.random.uniform(keys[6], (D, D), jnp.float32, -wscale, wscale)
    bo = jax.random.uniform(keys[7], (1, D), jnp.float32, -wscale, wscale)
    params = (wq, bq, wk, bk, wv, bv, wo, bo)

    q_in = jax.random.normal(keys[8], (B, S, D), jnp.float32)
    k_in = jax.random.normal(keys[9], (B, S, D), jnp.float32)
    v_in = jax.random.normal(keys[10], (B, S, D), jnp.float32)

    # Causal mask, broadcast over batch: 1 = attend, 0 = masked.
    mask = jnp.broadcast_to(jnp.tril(jnp.ones((S, S), jnp.float32)), (B, S, S))

    out = masked_multi_head_attention(q_in, k_in, v_in, mask, params, H)
    out = jax.block_until_ready(out)

    ref = reference_mha(q_in, k_in, v_in, mask, params, H)
    # bf16 MXU operands + approx reciprocal => relaxed tolerance vs f32 reference.
    assert jnp.allclose(out, ref, atol=5e-2, rtol=5e-2), "Pallas output mismatch vs reference"

    print("KERNEL_OK")
</pallas_src>

<mosaic_0001>
module attributes {stable_mosaic.version = 11 : i64} {
  func.func @qkv_proj_kernel(%arg0: i32, %arg1: i32, %arg2: memref<1x256x128xbf16, #tpu.memory_space<vmem>>, %arg3: memref<1x256x128xbf16, #tpu.memory_space<vmem>>, %arg4: memref<1x256x128xbf16, #tpu.memory_space<vmem>>, %arg5: memref<128x128xbf16, #tpu.memory_space<vmem>>, %arg6: memref<1x128xf32, #tpu.memory_space<vmem>>, %arg7: memref<128x128xbf16, #tpu.memory_space<vmem>>, %arg8: memref<1x128xf32, #tpu.memory_space<vmem>>, %arg9: memref<128x128xbf16, #tpu.memory_space<vmem>>, %arg10: memref<1x128xf32, #tpu.memory_space<vmem>>, %arg11: memref<1x4x256x32xbf16, #tpu.memory_space<vmem>>, %arg12: memref<1x4x256x32xbf16, #tpu.memory_space<vmem>>, %arg13: memref<1x4x256x32xbf16, #tpu.memory_space<vmem>>) attributes {dimension_semantics = [#tpu.dimension_semantics<parallel>, #tpu.dimension_semantics<parallel>], iteration_bounds = array<i64: 2, 2>, scalar_prefetch = 0 : i64, scratch_operands = 0 : i64, tpu.core_type = #tpu.core_type<tc>, window_params = [{transform_indices = @transform_0, window_bounds = array<i64: 1, 256, 128>}, {transform_indices = @transform_1, window_bounds = array<i64: 1, 256, 128>}, {transform_indices = @transform_2, window_bounds = array<i64: 1, 256, 128>}, {pipeline_mode = #tpu.pipeline_mode<synchronous>, transform_indices = @transform_3, window_bounds = array<i64: 128, 128>}, {pipeline_mode = #tpu.pipeline_mode<synchronous>, transform_indices = @transform_4, window_bounds = array<i64: 1, 128>}, {pipeline_mode = #tpu.pipeline_mode<synchronous>, transform_indices = @transform_5, window_bounds = array<i64: 128, 128>}, {pipeline_mode = #tpu.pipeline_mode<synchronous>, transform_indices = @transform_6, window_bounds = array<i64: 1, 128>}, {pipeline_mode = #tpu.pipeline_mode<synchronous>, transform_indices = @transform_7, window_bounds = array<i64: 128, 128>}, {pipeline_mode = #tpu.pipeline_mode<synchronous>, transform_indices = @transform_8, window_bounds = array<i64: 1, 128>}, {transform_indices = @transform_9, window_bounds = array<i64: 1, 4, 256, 32>}, {transform_indices = @transform_10, window_bounds = array<i64: 1, 4, 256, 32>}, {transform_indices = @transform_11, window_bounds = array<i64: 1, 4, 256, 32>}]} {
    %c0 = arith.constant 0 : index
    %c0_0 = arith.constant 0 : index
    %c0_1 = arith.constant 0 : index
    %0 = vector.load %arg2[%c0, %c0_0, %c0_1] : memref<1x256x128xbf16, #tpu.memory_space<vmem>>, vector<1x256x128xbf16>
    %1 = vector.shape_cast %0 : vector<1x256x128xbf16> to vector<256x128xbf16>
    %c0_2 = arith.constant 0 : index
    %c0_3 = arith.constant 0 : index
    %2 = vector.load %arg5[%c0_2, %c0_3] : memref<128x128xbf16, #tpu.memory_space<vmem>>, vector<128x128xbf16>
    %cst = arith.constant dense<0.000000e+00> : vector<256x128xf32>
    %3 = tpu.matmul %1, %2, %cst {dimension_numbers = #tpu.dot_dimension_numbers<[1], [0], [0], [1], [0, 0, 1, 1], [], []>} : vector<256x128xbf16>, vector<128x128xbf16>, vector<256x128xf32> -> vector<256x128xf32>
    %c0_4 = arith.constant 0 : index
    %c0_5 = arith.constant 0 : index
    %4 = vector.load %arg6[%c0_4, %c0_5] : memref<1x128xf32, #tpu.memory_space<vmem>>, vector<1x128xf32>
    %5 = vector.broadcast %4 : vector<1x128xf32> to vector<256x128xf32>
    %6 = arith.addf %3, %5 : vector<256x128xf32>
    %7 = arith.truncf %6 : vector<256x128xf32> to vector<256x128xbf16>
    %8 = vector.extract_strided_slice %7 {offsets = [0, 0], sizes = [256, 32], strides = [1, 1]} : vector<256x128xbf16> to vector<256x32xbf16>
    %c0_6 = arith.constant 0 : index
    %c0_7 = arith.constant 0 : index
    %c0_8 = arith.constant 0 : index
    %c0_9 = arith.constant 0 : index
    %9 = vector.load %arg11[%c0_6, %c0_7, %c0_8, %c0_9] : memref<1x4x256x32xbf16, #tpu.memory_space<vmem>>, vector<1x1x256x32xbf16>
    %10 = vector.shape_cast %9 : vector<1x1x256x32xbf16> to vector<256x32xbf16>
    %11 = vector.shape_cast %8 : vector<256x32xbf16> to vector<1x1x256x32xbf16>
    tpu.vector_store %arg11[%c0_6, %c0_7, %c0_8, %c0_9], %11 {strides = array<i32>} : memref<1x4x256x32xbf16, #tpu.memory_space<vmem>>, vector<1x1x256x32xbf16>,
    %12 = vector.extract_strided_slice %7 {offsets = [0, 32], sizes = [256, 32], strides = [1, 1]} : vector<256x128xbf16> to vector<256x32xbf16>
    %c0_10 = arith.constant 0 : index
    %c1 = arith.constant 1 : index
    %c0_11 = arith.constant 0 : index
    %c0_12 = arith.constant 0 : index
    %13 = vector.load %arg11[%c0_10, %c1, %c0_11, %c0_12] : memref<1x4x256x32xbf16, #tpu.memory_space<vmem>>, vector<1x1x256x32xbf16>
    %14 = vector.shape_cast %13 : vector<1x1x256x32xbf16> to vector<256x32xbf16>
    %15 = vector.shape_cast %12 : vector<256x32xbf16> to vector<1x1x256x32xbf16>
    tpu.vector_store %arg11[%c0_10, %c1, %c0_11, %c0_12], %15 {strides = array<i32>} : memref<1x4x256x32xbf16, #tpu.memory_space<vmem>>, vector<1x1x256x32xbf16>,
    %16 = vector.extract_strided_slice %7 {offsets = [0, 64], sizes = [256, 32], strides = [1, 1]} : vector<256x128xbf16> to vector<256x32xbf16>
    %c0_13 = arith.constant 0 : index
    %c2 = arith.constant 2 : index
    %c0_14 = arith.constant 0 : index
    %c0_15 = arith.constant 0 : index
    %17 = vector.load %arg11[%c0_13, %c2, %c0_14, %c0_15] : memref<1x4x256x32xbf16, #tpu.memory_space<vmem>>, vector<1x1x256x32xbf16>
    %18 = vector.shape_cast %17 : vector<1x1x256x32xbf16> to vector<256x32xbf16>
    %19 = vector.shape_cast %16 : vector<256x32xbf16> to vector<1x1x256x32xbf16>
    tpu.vector_store %arg11[%c0_13, %c2, %c0_14, %c0_15], %19 {strides = array<i32>} : memref<1x4x256x32xbf16, #tpu.memory_space<vmem>>, vector<1x1x256x32xbf16>,
    %20 = vector.extract_strided_slice %7 {offsets = [0, 96], sizes = [256, 32], strides = [1, 1]} : vector<256x128xbf16> to vector<256x32xbf16>
    %c0_16 = arith.constant 0 : index
    %c3 = arith.constant 3 : index
    %c0_17 = arith.constant 0 : index
    %c0_18 = arith.constant 0 : index
    %21 = vector.load %arg11[%c0_16, %c3, %c0_17, %c0_18] : memref<1x4x256x32xbf16, #tpu.memory_space<vmem>>, vector<1x1x256x32xbf16>
    %22 = vector.shape_cast %21 : vector<1x1x256x32xbf16> to vector<256x32xbf16>
    %23 = vector.shape_cast %20 : vector<256x32xbf16> to vector<1x1x256x32xbf16>
    tpu.vector_store %arg11[%c0_16, %c3, %c0_17, %c0_18], %23 {strides = array<i32>} : memref<1x4x256x32xbf16, #tpu.memory_space<vmem>>, vector<1x1x256x32xbf16>,
    %c0_19 = arith.constant 0 : index
    %c0_20 = arith.constant 0 : index
    %c0_21 = arith.constant 0 : index
    %24 = vector.load %arg3[%c0_19, %c0_20, %c0_21] : memref<1x256x128xbf16, #tpu.memory_space<vmem>>, vector<1x256x128xbf16>
    %25 = vector.shape_cast %24 : vector<1x256x128xbf16> to vector<256x128xbf16>
    %c0_22 = arith.constant 0 : index
    %c0_23 = arith.constant 0 : index
    %26 = vector.load %arg7[%c0_22, %c0_23] : memref<128x128xbf16, #tpu.memory_space<vmem>>, vector<128x128xbf16>
    %cst_24 = arith.constant dense<0.000000e+00> : vector<256x128xf32>
    %27 = tpu.matmul %25, %26, %cst_24 {dimension_numbers = #tpu.dot_dimension_numbers<[1], [0], [0], [1], [0, 0, 1, 1], [], []>} : vector<256x128xbf16>, vector<128x128xbf16>, vector<256x128xf32> -> vector<256x128xf32>
    %c0_25 = arith.constant 0 : index
    %c0_26 = arith.constant 0 : index
    %28 = vector.load %arg8[%c0_25, %c0_26] : memref<1x128xf32, #tpu.memory_space<vmem>>, vector<1x128xf32>
    %29 = vector.broadcast %28 : vector<1x128xf32> to vector<256x128xf32>
    %30 = arith.addf %27, %29 : vector<256x128xf32>
    %31 = arith.truncf %30 : vector<256x128xf32> to vector<256x128xbf16>
    %32 = vector.extract_strided_slice %31 {offsets = [0, 0], sizes = [256, 32], strides = [1, 1]} : vector<256x128xbf16> to vector<256x32xbf16>
    %c0_27 = arith.constant 0 : index
    %c0_28 = arith.constant 0 : index
    %c0_29 = arith.constant 0 : index
    %c0_30 = arith.constant 0 : index
    %33 = vector.load %arg12[%c0_27, %c0_28, %c0_29, %c0_30] : memref<1x4x256x32xbf16, #tpu.memory_space<vmem>>, vector<1x1x256x32xbf16>
    %34 = vector.shape_cast %33 : vector<1x1x256x32xbf16> to vector<256x32xbf16>
    %35 = vector.shape_cast %32 : vector<256x32xbf16> to vector<1x1x256x32xbf16>
    tpu.vector_store %arg12[%c0_27, %c0_28, %c0_29, %c0_30], %35 {strides = array<i32>} : memref<1x4x256x32xbf16, #tpu.memory_space<vmem>>, vector<1x1x256x32xbf16>,
    %36 = vector.extract_strided_slice %31 {offsets = [0, 32], sizes = [256, 32], strides = [1, 1]} : vector<256x128xbf16> to vector<256x32xbf16>
    %c0_31 = arith.constant 0 : index
    %c1_32 = arith.constant 1 : index
    %c0_33 = arith.constant 0 : index
    %c0_34 = arith.constant 0 : index
    %37 = vector.load %arg12[%c0_31, %c1_32, %c0_33, %c0_34] : memref<1x4x256x32xbf16, #tpu.memory_space<vmem>>, vector<1x1x256x32xbf16>
    %38 = vector.shape_cast %37 : vector<1x1x256x32xbf16> to vector<256x32xbf16>
    %39 = vector.shape_cast %36 : vector<256x32xbf16> to vector<1x1x256x32xbf16>
    tpu.vector_store %arg12[%c0_31, %c1_32, %c0_33, %c0_34], %39 {strides = array<i32>} : memref<1x4x256x32xbf16, #tpu.memory_space<vmem>>, vector<1x1x256x32xbf16>,
    %40 = vector.extract_strided_slice %31 {offsets = [0, 64], sizes = [256, 32], strides = [1, 1]} : vector<256x128xbf16> to vector<256x32xbf16>
    %c0_35 = arith.constant 0 : index
    %c2_36 = arith.constant 2 : index
    %c0_37 = arith.constant 0 : index
    %c0_38 = arith.constant 0 : index
    %41 = vector.load %arg12[%c0_35, %c2_36, %c0_37, %c0_38] : memref<1x4x256x32xbf16, #tpu.memory_space<vmem>>, vector<1x1x256x32xbf16>
    %42 = vector.shape_cast %41 : vector<1x1x256x32xbf16> to vector<256x32xbf16>
    %43 = vector.shape_cast %40 : vector<256x32xbf16> to vector<1x1x256x32xbf16>
    tpu.vector_store %arg12[%c0_35, %c2_36, %c0_37, %c0_38], %43 {strides = array<i32>} : memref<1x4x256x32xbf16, #tpu.memory_space<vmem>>, vector<1x1x256x32xbf16>,
    %44 = vector.extract_strided_slice %31 {offsets = [0, 96], sizes = [256, 32], strides = [1, 1]} : vector<256x128xbf16> to vector<256x32xbf16>
    %c0_39 = arith.constant 0 : index
    %c3_40 = arith.constant 3 : index
    %c0_41 = arith.constant 0 : index
    %c0_42 = arith.constant 0 : index
    %45 = vector.load %arg12[%c0_39, %c3_40, %c0_41, %c0_42] : memref<1x4x256x32xbf16, #tpu.memory_space<vmem>>, vector<1x1x256x32xbf16>
    %46 = vector.shape_cast %45 : vector<1x1x256x32xbf16> to vector<256x32xbf16>
    %47 = vector.shape_cast %44 : vector<256x32xbf16> to vector<1x1x256x32xbf16>
    tpu.vector_store %arg12[%c0_39, %c3_40, %c0_41, %c0_42], %47 {strides = array<i32>} : memref<1x4x256x32xbf16, #tpu.memory_space<vmem>>, vector<1x1x256x32xbf16>,
    %c0_43 = arith.constant 0 : index
    %c0_44 = arith.constant 0 : index
    %c0_45 = arith.constant 0 : index
    %48 = vector.load %arg4[%c0_43, %c0_44, %c0_45] : memref<1x256x128xbf16, #tpu.memory_space<vmem>>, vector<1x256x128xbf16>
    %49 = vector.shape_cast %48 : vector<1x256x128xbf16> to vector<256x128xbf16>
    %c0_46 = arith.constant 0 : index
    %c0_47 = arith.constant 0 : index
    %50 = vector.load %arg9[%c0_46, %c0_47] : memref<128x128xbf16, #tpu.memory_space<vmem>>, vector<128x128xbf16>
    %cst_48 = arith.constant dense<0.000000e+00> : vector<256x128xf32>
    %51 = tpu.matmul %49, %50, %cst_48 {dimension_numbers = #tpu.dot_dimension_numbers<[1], [0], [0], [1], [0, 0, 1, 1], [], []>} : vector<256x128xbf16>, vector<128x128xbf16>, vector<256x128xf32> -> vector<256x128xf32>
    %c0_49 = arith.constant 0 : index
    %c0_50 = arith.constant 0 : index
    %52 = vector.load %arg10[%c0_49, %c0_50] : memref<1x128xf32, #tpu.memory_space<vmem>>, vector<1x128xf32>
    %53 = vector.broadcast %52 : vector<1x128xf32> to vector<256x128xf32>
    %54 = arith.addf %51, %53 : vector<256x128xf32>
    %55 = arith.truncf %54 : vector<256x128xf32> to vector<256x128xbf16>
    %56 = vector.extract_strided_slice %55 {offsets = [0, 0], sizes = [256, 32], strides = [1, 1]} : vector<256x128xbf16> to vector<256x32xbf16>
    %c0_51 = arith.constant 0 : index
    %c0_52 = arith.constant 0 : index
    %c0_53 = arith.constant 0 : index
    %c0_54 = arith.constant 0 : index
    %57 = vector.load %arg13[%c0_51, %c0_52, %c0_53, %c0_54] : memref<1x4x256x32xbf16, #tpu.memory_space<vmem>>, vector<1x1x256x32xbf16>
    %58 = vector.shape_cast %57 : vector<1x1x256x32xbf16> to vector<256x32xbf16>
    %59 = vector.shape_cast %56 : vector<256x32xbf16> to vector<1x1x256x32xbf16>
    tpu.vector_store %arg13[%c0_51, %c0_52, %c0_53, %c0_54], %59 {strides = array<i32>} : memref<1x4x256x32xbf16, #tpu.memory_space<vmem>>, vector<1x1x256x32xbf16>,
    %60 = vector.extract_strided_slice %55 {offsets = [0, 32], sizes = [256, 32], strides = [1, 1]} : vector<256x128xbf16> to vector<256x32xbf16>
    %c0_55 = arith.constant 0 : index
    %c1_56 = arith.constant 1 : index
    %c0_57 = arith.constant 0 : index
    %c0_58 = arith.constant 0 : index
    %61 = vector.load %arg13[%c0_55, %c1_56, %c0_57, %c0_58] : memref<1x4x256x32xbf16, #tpu.memory_space<vmem>>, vector<1x1x256x32xbf16>
    %62 = vector.shape_cast %61 : vector<1x1x256x32xbf16> to vector<256x32xbf16>
    %63 = vector.shape_cast %60 : vector<256x32xbf16> to vector<1x1x256x32xbf16>
    tpu.vector_store %arg13[%c0_55, %c1_56, %c0_57, %c0_58], %63 {strides = array<i32>} : memref<1x4x256x32xbf16, #tpu.memory_space<vmem>>, vector<1x1x256x32xbf16>,
    %64 = vector.extract_strided_slice %55 {offsets = [0, 64], sizes = [256, 32], strides = [1, 1]} : vector<256x128xbf16> to vector<256x32xbf16>
    %c0_59 = arith.constant 0 : index
    %c2_60 = arith.constant 2 : index
    %c0_61 = arith.constant 0 : index
    %c0_62 = arith.constant 0 : index
    %65 = vector.load %arg13[%c0_59, %c2_60, %c0_61, %c0_62] : memref<1x4x256x32xbf16, #tpu.memory_space<vmem>>, vector<1x1x256x32xbf16>
    %66 = vector.shape_cast %65 : vector<1x1x256x32xbf16> to vector<256x32xbf16>
    %67 = vector.shape_cast %64 : vector<256x32xbf16> to vector<1x1x256x32xbf16>
    tpu.vector_store %arg13[%c0_59, %c2_60, %c0_61, %c0_62], %67 {strides = array<i32>} : memref<1x4x256x32xbf16, #tpu.memory_space<vmem>>, vector<1x1x256x32xbf16>,
    %68 = vector.extract_strided_slice %55 {offsets = [0, 96], sizes = [256, 32], strides = [1, 1]} : vector<256x128xbf16> to vector<256x32xbf16>
    %c0_63 = arith.constant 0 : index
    %c3_64 = arith.constant 3 : index
    %c0_65 = arith.constant 0 : index
    %c0_66 = arith.constant 0 : index
    %69 = vector.load %arg13[%c0_63, %c3_64, %c0_65, %c0_66] : memref<1x4x256x32xbf16, #tpu.memory_space<vmem>>, vector<1x1x256x32xbf16>
    %70 = vector.shape_cast %69 : vector<1x1x256x32xbf16> to vector<256x32xbf16>
    %71 = vector.shape_cast %68 : vector<256x32xbf16> to vector<1x1x256x32xbf16>
    tpu.vector_store %arg13[%c0_63, %c3_64, %c0_65, %c0_66], %71 {strides = array<i32>} : memref<1x4x256x32xbf16, #tpu.memory_space<vmem>>, vector<1x1x256x32xbf16>,
    return
  }
  func.func @transform_0(%arg0: i32, %arg1: i32) -> (i32, i32, i32) {
    %c0_i32 = arith.constant 0 : i32
    %c0_i32_0 = arith.constant 0 : i32
    return %arg0, %arg1, %c0_i32 : i32, i32, i32
  }
  func.func @transform_1(%arg0: i32, %arg1: i32) -> (i32, i32, i32) {
    %c0_i32 = arith.constant 0 : i32
    %c0_i32_0 = arith.constant 0 : i32
    return %arg0, %arg1, %c0_i32 : i32, i32, i32
  }
  func.func @transform_2(%arg0: i32, %arg1: i32) -> (i32, i32, i32) {
    %c0_i32 = arith.constant 0 : i32
    %c0_i32_0 = arith.constant 0 : i32
    return %arg0, %arg1, %c0_i32 : i32, i32, i32
  }
  func.func @transform_3(%arg0: i32, %arg1: i32) -> (i32, i32) {
    %c0_i32 = arith.constant 0 : i32
    %c0_i32_0 = arith.constant 0 : i32
    %c0_i32_1 = arith.constant 0 : i32
    return %c0_i32, %c0_i32_0 : i32, i32
  }
  func.func @transform_4(%arg0: i32, %arg1: i32) -> (i32, i32) {
    %c0_i32 = arith.constant 0 : i32
    %c0_i32_0 = arith.constant 0 : i32
    %c0_i32_1 = arith.constant 0 : i32
    return %c0_i32, %c0_i32_0 : i32, i32
  }
  func.func @transform_5(%arg0: i32, %arg1: i32) -> (i32, i32) {
    %c0_i32 = arith.constant 0 : i32
    %c0_i32_0 = arith.constant 0 : i32
    %c0_i32_1 = arith.constant 0 : i32
    return %c0_i32, %c0_i32_0 : i32, i32
  }
  func.func @transform_6(%arg0: i32, %arg1: i32) -> (i32, i32) {
    %c0_i32 = arith.constant 0 : i32
    %c0_i32_0 = arith.constant 0 : i32
    %c0_i32_1 = arith.constant 0 : i32
    return %c0_i32, %c0_i32_0 : i32, i32
  }
  func.func @transform_7(%arg0: i32, %arg1: i32) -> (i32, i32) {
    %c0_i32 = arith.constant 0 : i32
    %c0_i32_0 = arith.constant 0 : i32
    %c0_i32_1 = arith.constant 0 : i32
    return %c0_i32, %c0_i32_0 : i32, i32
  }
  func.func @transform_8(%arg0: i32, %arg1: i32) -> (i32, i32) {
    %c0_i32 = arith.constant 0 : i32
    %c0_i32_0 = arith.constant 0 : i32
    %c0_i32_1 = arith.constant 0 : i32
    return %c0_i32, %c0_i32_0 : i32, i32
  }
  func.func @transform_9(%arg0: i32, %arg1: i32) -> (i32, i32, i32, i32) {
    %c0_i32 = arith.constant 0 : i32
    %c0_i32_0 = arith.constant 0 : i32
    %c0_i32_1 = arith.constant 0 : i32
    return %arg0, %c0_i32, %arg1, %c0_i32_0 : i32, i32, i32, i32
  }
  func.func @transform_10(%arg0: i32, %arg1: i32) -> (i32, i32, i32, i32) {
    %c0_i32 = arith.constant 0 : i32
    %c0_i32_0 = arith.constant 0 : i32
    %c0_i32_1 = arith.constant 0 : i32
    return %arg0, %c0_i32, %arg1, %c0_i32_0 : i32, i32, i32, i32
  }
  func.func @transform_11(%arg0: i32, %arg1: i32) -> (i32, i32, i32, i32) {
    %c0_i32 = arith.constant 0 : i32
    %c0_i32_0 = arith.constant 0 : i32
    %c0_i32_1 = arith.constant 0 : i32
    return %arg0, %c0_i32, %arg1, %c0_i32_0 : i32, i32, i32, i32
  }
}

</mosaic_0001>

<llo_original>
// kernel: tpu_custom_call.1
$region0: #{tpu_custom_call.1}
  #allocation0 [shape = 'u32[]', space=smem, size = 0x4, offset = 0x4, fixed_abs, tag = 'smem constant byte address 0x4 - core index']
  #allocation1 [shape = 'u32[144,128]{1,0:T(1,128)}', space=vmem, size = 0x12000, scoped, tag = 'internal scratch']
  %s0 = inlined_call_operand.hbm [shape: bf16[2,512,128], index: 0, kind: input, shape index: {}]
  %s1 = inlined_call_operand.hbm [shape: bf16[2,512,128], index: 1, kind: input, shape index: {}]
  %s2 = inlined_call_operand.hbm [shape: bf16[2,512,128], index: 2, kind: input, shape index: {}]
  %s3 = inlined_call_operand.hbm [shape: bf16[128,128], index: 3, kind: input, shape index: {}]
  %s4 = inlined_call_operand.vmem [shape: f32[1,128], index: 4, kind: input, shape index: {}]
  %s5 = inlined_call_operand.hbm [shape: bf16[128,128], index: 5, kind: input, shape index: {}]
  %s6 = inlined_call_operand.vmem [shape: f32[1,128], index: 6, kind: input, shape index: {}]
  %s7 = inlined_call_operand.hbm [shape: bf16[128,128], index: 7, kind: input, shape index: {}]
  %s8 = inlined_call_operand.vmem [shape: f32[1,128], index: 8, kind: input, shape index: {}]
  %s9 = inlined_call_operand.vmem [shape: bf16[2,4,512,32], index: 9, kind: output, shape index: {0}]
  %s10 = inlined_call_operand.vmem [shape: bf16[2,4,512,32], index: 10, kind: output, shape index: {1}]
  %s11 = inlined_call_operand.vmem [shape: bf16[2,4,512,32], index: 11, kind: output, shape index: {2}]
  %12 = xla_tuple %s9, %s10, %s11
  %s13 = sld [smem:[#allocation0]]
  $region220: #{tpu_custom_call.1} parent=0
    _
  %s15 = ssub.s32 1, %s13
  %s16 = scalar_select 0, %s15, %s13
  $region1: #{tpu_custom_call.1} parent=0
    #allocation2 [shape = 'u8[131072]{0}', space=vmem, size = 0x20000, scoped, tag = 'input window, operand 0']
    #allocation3 [shape = 's32[2]{0}', space=sflag, size = 0x8, scoped, tag = 'scoped memory for tpu_custom_call.1']
    #allocation4 [shape = 'u8[131072]{0}', space=vmem, size = 0x20000, scoped, tag = 'input window, operand 1']
    #allocation5 [shape = 's32[2]{0}', space=sflag, size = 0x8, scoped, tag = 'scoped memory for tpu_custom_call.1']
    #allocation6 [shape = 'u8[131072]{0}', space=vmem, size = 0x20000, scoped, tag = 'input window, operand 2']
    #allocation7 [shape = 'u8[32768]{0}', space=vmem, size = 0x8000, scoped, tag = 'input window, operand 3, single buffered']
    #allocation8 [shape = 's32[1]{0}', space=sflag, size = 0x4, scoped, tag = 'scoped memory for tpu_custom_call.1']
    #allocation9 [shape = 'u8[32768]{0}', space=vmem, size = 0x8000, scoped, tag = 'input window, operand 5, single buffered']
    #allocation10 [shape = 'u8[32768]{0}', space=vmem, size = 0x8000, scoped, tag = 'input window, operand 7, single buffered']
    #allocation11 [shape = 's32[1]{0}', space=sflag, size = 0x4, scoped, tag = 'scoped memory for tpu_custom_call.1']
    #allocation12 [shape = 'u8[524288]{0}', space=vmem, size = 0x80000, scoped, tag = 'output window, operand 0']
    #allocation13 [shape = 'u8[524288]{0}', space=vmem, size = 0x80000, scoped, tag = 'output window, operand 1']
    #allocation14 [shape = 'u8[524288]{0}', space=vmem, size = 0x80000, scoped, tag = 'output window, operand 2']
    %17 = vsyncpa [#allocation3], 0
    %s18 = scalar_lea.sflag [#allocation3], 1
    %19 = vsyncpa %s18, 0
    %20 = vsyncpa [#allocation5], 0
    %s21 = scalar_lea.sflag [#allocation5], 1
    %22 = vsyncpa %s21, 0
    %23 = vsyncpa [#allocation8], 0
    %24 = vsyncpa [#allocation11], 0
    loop: start=0, step=1, limit=6
    $region2: #{tpu_custom_call.1} parent=1 // loop_pre_header
      _
    $region3: #{tpu_custom_call.1} parent=1 // loop_header
      %s26 = sphi 0, %s30
      %p27 = scmp.ge.s32.totalorder %s26, 6
      %s33 = sphi 0, %s45
      %s34 = sphi 0, %s41
      %s35 = sphi 0, %s33
      %s36 = sphi 0, %s34
      %s37 = sphi 0, %s35
      %s38 = sphi 0, %s36
      %s50 = sphi 0, %s52
      %s53 = sphi 0, %s50
      %s54 = sphi 0, %s53
      %s70 = sphi 0, %s54
      %s78 = sphi 0, %s80
      %s81 = sphi 0, %s78
      %s82 = sphi 0, %s81
      %s98 = sphi 0, %s82
      %s106 = sphi 0, %s108
      %s109 = sphi 0, %s106
      %s110 = sphi 0, %s109
      %s126 = sphi 0, %s110
      %s130 = sphi 0, %s130
      %s132 = sphi 0, %s130
      %s133 = sphi 0, %s132
      %s147 = sphi 0, %s133
      %s151 = sphi 0, %s151
      %s153 = sphi 0, %s151
      %s154 = sphi 0, %s153
      %s168 = sphi 0, %s154
      %s172 = sphi 0, %s172
      %s174 = sphi 0, %s172
      %s175 = sphi 0, %s174
      %s189 = sphi 0, %s175
      %s193 = sphi 0, %s193
      %s195 = sphi 0, %s193
      %s196 = sphi 0, %s195
      %s210 = sphi 0, %s196
      %s214 = sphi 0, %s214
      %s216 = sphi 0, %s214
      %s217 = sphi 0, %s216
      %s231 = sphi 0, %s217
      %s235 = sphi 0, %s235
      %s237 = sphi 0, %s235
      %s238 = sphi 0, %s237
      %s252 = sphi 0, %s238
      %s260 = sphi 0, %s262
      %s263 = sphi 0, %s260
      %s264 = sphi 0, %s263
      %s280 = sphi 0, %s264
      %s288 = sphi 0, %s290
      %s291 = sphi 0, %s288
      %s292 = sphi 0, %s291
      %s308 = sphi 0, %s292
      %s316 = sphi 0, %s318
      %s319 = sphi 0, %s316
      %s320 = sphi 0, %s319
      %s336 = sphi 0, %s320
    $region4: #{tpu_custom_call.1} parent=1 // loop_header_branch
      %29 = sbr.rel (%p27) target = $region8
    $region5: #{tpu_custom_call.1} parent=1 // loop_body
      %s31 = ssub.s32 %s26, 1
      %s32 = ssub.s32 %s26, 2
      %s39 = sadd.s32 1, %s34
      %p40 = scmp.ge.s32.totalorder %s39, 2
      %s41 = scalar_select %p40, 0, %s39
      %s42 = sadd.s32 1, %s33
      %s43 = scalar_select %p40, %s42, %s33
      %p44 = scmp.ge.s32.totalorder %s43, 2
      %s45 = scalar_select %p44, 0, %s43
      %s46 = ssub.s32 %s33, %s45
      %s47 = ssub.s32 %s34, %s41
      %s48 = sor.u32 %s46, %s47
      %p49 = scmp.eq.s32.totalorder %s48, 0
      %s51 = sadd.s32 %s50, 1
      %s52 = scalar_select %p49, %s50, %s51
      %p55 = pneg %p49
      %p56 = scmp.eq.s32.totalorder %s26, 3
      %p57 = por %p55, %p56
      %p58 = scmp.ne.s32.totalorder %s50, %s53
      %p59 = scmp.eq.s32.totalorder %s26, 0
      %p60 = por %p58, %p59
      %p61 = scmp.ne.s32.totalorder %s50, %s53
      %p62 = scmp.eq.s32.totalorder %s31, 3
      %p63 = por %p61, %p62
      %p64 = scmp.ne.s32.totalorder %s53, %s54
      %p65 = scmp.eq.s32.totalorder %s31, 0
      %p66 = por %p64, %p65
      %p67 = scmp.ne.s32.totalorder %s53, %s54
      %p68 = scmp.eq.s32.totalorder %s32, 3
      %p69 = por %p67, %p68
      %p71 = scmp.ne.s32.totalorder %s54, %s70
      %p72 = scmp.eq.s32.totalorder %s32, 0
      %p73 = por %p71, %p72
      %s74 = ssub.s32 %s33, %s45
      %s75 = ssub.s32 %s34, %s41
      %s76 = sor.u32 %s74, %s75
      %p77 = scmp.eq.s32.totalorder %s76, 0
      %s79 = sadd.s32 %s78, 1
      %s80 = scalar_select %p77, %s78, %s79
      %p83 = pneg %p77
      %p84 = scmp.eq.s32.totalorder %s26, 3
      %p85 = por %p83, %p84
      %p86 = scmp.ne.s32.totalorder %s78, %s81
      %p87 = scmp.eq.s32.totalorder %s26, 0
      %p88 = por %p86, %p87
      %p89 = scmp.ne.s32.totalorder %s78, %s81
      %p90 = scmp.eq.s32.totalorder %s31, 3
      %p91 = por %p89, %p90
      %p92 = scmp.ne.s32.totalorder %s81, %s82
      %p93 = scmp.eq.s32.totalorder %s31, 0
      %p94 = por %p92, %p93
      %p95 = scmp.ne.s32.totalorder %s81, %s82
      %p96 = scmp.eq.s32.totalorder %s32, 3
      %p97 = por %p95, %p96
      %p99 = scmp.ne.s32.totalorder %s82, %s98
      %p100 = scmp.eq.s32.totalorder %s32, 0
      %p101 = por %p99, %p100
      %s102 = ssub.s32 %s33, %s45
      %s103 = ssub.s32 %s34, %s41
      %s104 = sor.u32 %s102, %s103
      %p105 = scmp.eq.s32.totalorder %s104, 0
      %s107 = sadd.s32 %s106, 1
      %s108 = scalar_select %p105, %s106, %s107
      %p111 = pneg %p105
      %p112 = scmp.eq.s32.totalorder %s26, 3
      %p113 = por %p111, %p112
      %p114 = scmp.ne.s32.totalorder %s106, %s109
      %p115 = scmp.eq.s32.totalorder %s26, 0
      %p116 = por %p114, %p115
      %p117 = scmp.ne.s32.totalorder %s106, %s109
      %p118 = scmp.eq.s32.totalorder %s31, 3
      %p119 = por %p117, %p118
      %p120 = scmp.ne.s32.totalorder %s109, %s110
      %p121 = scmp.eq.s32.totalorder %s31, 0
      %p122 = por %p120, %p121
      %p123 = scmp.ne.s32.totalorder %s109, %s110
      %p124 = scmp.eq.s32.totalorder %s32, 3
      %p125 = por %p123, %p124
      %p127 = scmp.ne.s32.totalorder %s110, %s126
      %p128 = scmp.eq.s32.totalorder %s32, 0
      %p129 = por %p127, %p128
      %s131 = sadd.s32 %s130, 1
      %p134 = scmp.eq.s32.totalorder %s26, 3
      %p135 = scmp.ne.s32.totalorder %s130, %s132
      %p136 = scmp.eq.s32.totalorder %s26, 0
      %p137 = por %p135, %p136
      %p138 = scmp.ne.s32.totalorder %s130, %s132
      %p139 = scmp.eq.s32.totalorder %s31, 3
      %p140 = por %p138, %p139
      %p141 = scmp.ne.s32.totalorder %s132, %s133
      %p142 = scmp.eq.s32.totalorder %s31, 0
      %p143 = por %p141, %p142
      %p144 = scmp.ne.s32.totalorder %s132, %s133
      %p145 = scmp.eq.s32.totalorder %s32, 3
      %p146 = por %p144, %p145
      %p148 = scmp.ne.s32.totalorder %s133, %s147
      %p149 = scmp.eq.s32.totalorder %s32, 0
      %p150 = por %p148, %p149
      %s152 = sadd.s32 %s151, 1
      %p155 = scmp.eq.s32.totalorder %s26, 3
      %p156 = scmp.ne.s32.totalorder %s151, %s153
      %p157 = scmp.eq.s32.totalorder %s26, 0
      %p158 = por %p156, %p157
      %p159 = scmp.ne.s32.totalorder %s151, %s153
      %p160 = scmp.eq.s32.totalorder %s31, 3
      %p161 = por %p159, %p160
      %p162 = scmp.ne.s32.totalorder %s153, %s154
      %p163 = scmp.eq.s32.totalorder %s31, 0
      %p164 = por %p162, %p163
      %p165 = scmp.ne.s32.totalorder %s153, %s154
      %p166 = scmp.eq.s32.totalorder %s32, 3
      %p167 = por %p165, %p166
      %p169 = scmp.ne.s32.totalorder %s154, %s168
      %p170 = scmp.eq.s32.totalorder %s32, 0
      %p171 = por %p169, %p170
      %s173 = sadd.s32 %s172, 1
      %p176 = scmp.eq.s32.totalorder %s26, 3
      %p177 = scmp.ne.s32.totalorder %s172, %s174
      %p178 = scmp.eq.s32.totalorder %s26, 0
      %p179 = por %p177, %p178
      %p180 = scmp.ne.s32.totalorder %s172, %s174
      %p181 = scmp.eq.s32.totalorder %s31, 3
      %p182 = por %p180, %p181
      %p183 = scmp.ne.s32.totalorder %s174, %s175
      %p184 = scmp.eq.s32.totalorder %s31, 0
      %p185 = por %p183, %p184
      %p186 = scmp.ne.s32.totalorder %s174, %s175
      %p187 = scmp.eq.s32.totalorder %s32, 3
      %p188 = por %p186, %p187
      %p190 = scmp.ne.s32.totalorder %s175, %s189
      %p191 = scmp.eq.s32.totalorder %s32, 0
      %p192 = por %p190, %p191
      %s194 = sadd.s32 %s193, 1
      %p197 = scmp.eq.s32.totalorder %s26, 3
      %p198 = scmp.ne.s32.totalorder %s193, %s195
      %p199 = scmp.eq.s32.totalorder %s26, 0
      %p200 = por %p198, %p199
      %p201 = scmp.ne.s32.totalorder %s193, %s195
      %p202 = scmp.eq.s32.totalorder %s31, 3
      %p203 = por %p201, %p202
      %p204 = scmp.ne.s32.totalorder %s195, %s196
      %p205 = scmp.eq.s32.totalorder %s31, 0
      %p206 = por %p204, %p205
      %p207 = scmp.ne.s32.totalorder %s195, %s196
      %p208 = scmp.eq.s32.totalorder %s32, 3
      %p209 = por %p207, %p208
      %p211 = scmp.ne.s32.totalorder %s196, %s210
      %p212 = scmp.eq.s32.totalorder %s32, 0
      %p213 = por %p211, %p212
      %s215 = sadd.s32 %s214, 1
      %p218 = scmp.eq.s32.totalorder %s26, 3
      %p219 = scmp.ne.s32.totalorder %s214, %s216
      %p220 = scmp.eq.s32.totalorder %s26, 0
      %p221 = por %p219, %p220
      %p222 = scmp.ne.s32.totalorder %s214, %s216
      %p223 = scmp.eq.s32.totalorder %s31, 3
      %p224 = por %p222, %p223
      %p225 = scmp.ne.s32.totalorder %s216, %s217
      %p226 = scmp.eq.s32.totalorder %s31, 0
      %p227 = por %p225, %p226
      %p228 = scmp.ne.s32.totalorder %s216, %s217
      %p229 = scmp.eq.s32.totalorder %s32, 3
      %p230 = por %p228, %p229
      %p232 = scmp.ne.s32.totalorder %s217, %s231
      %p233 = scmp.eq.s32.totalorder %s32, 0
      %p234 = por %p232, %p233
      %s236 = sadd.s32 %s235, 1
      %p239 = scmp.eq.s32.totalorder %s26, 3
      %p240 = scmp.ne.s32.totalorder %s235, %s237
      %p241 = scmp.eq.s32.totalorder %s26, 0
      %p242 = por %p240, %p241
      %p243 = scmp.ne.s32.totalorder %s235, %s237
      %p244 = scmp.eq.s32.totalorder %s31, 3
      %p245 = por %p243, %p244
      %p246 = scmp.ne.s32.totalorder %s237, %s238
      %p247 = scmp.eq.s32.totalorder %s31, 0
      %p248 = por %p246, %p247
      %p249 = scmp.ne.s32.totalorder %s237, %s238
      %p250 = scmp.eq.s32.totalorder %s32, 3
      %p251 = por %p249, %p250
      %p253 = scmp.ne.s32.totalorder %s238, %s252
      %p254 = scmp.eq.s32.totalorder %s32, 0
      %p255 = por %p253, %p254
      %s256 = ssub.s32 %s33, %s45
      %s257 = ssub.s32 %s34, %s41
      %s258 = sor.u32 %s256, %s257
      %p259 = scmp.eq.s32.totalorder %s258, 0
      %s261 = sadd.s32 %s260, 1
      %s262 = scalar_select %p259, %s260, %s261
      %p265 = pneg %p259
      %p266 = scmp.eq.s32.totalorder %s26, 3
      %p267 = por %p265, %p266
      %p268 = scmp.ne.s32.totalorder %s260, %s263
      %p269 = scmp.eq.s32.totalorder %s26, 0
      %p270 = por %p268, %p269
      %p271 = scmp.ne.s32.totalorder %s260, %s263
      %p272 = scmp.eq.s32.totalorder %s31, 3
      %p273 = por %p271, %p272
      %p274 = scmp.ne.s32.totalorder %s263, %s264
      %p275 = scmp.eq.s32.totalorder %s31, 0
      %p276 = por %p274, %p275
      %p277 = scmp.ne.s32.totalorder %s263, %s264
      %p278 = scmp.eq.s32.totalorder %s32, 3
      %p279 = por %p277, %p278
      %p281 = scmp.ne.s32.totalorder %s264, %s280
      %p282 = scmp.eq.s32.totalorder %s32, 0
      %p283 = por %p281, %p282
      %s284 = ssub.s32 %s33, %s45
      %s285 = ssub.s32 %s34, %s41
      %s286 = sor.u32 %s284, %s285
      %p287 = scmp.eq.s32.totalorder %s286, 0
      %s289 = sadd.s32 %s288, 1
      %s290 = scalar_select %p287, %s288, %s289
      %p293 = pneg %p287
      %p294 = scmp.eq.s32.totalorder %s26, 3
      %p295 = por %p293, %p294
      %p296 = scmp.ne.s32.totalorder %s288, %s291
      %p297 = scmp.eq.s32.totalorder %s26, 0
      %p298 = por %p296, %p297
      %p299 = scmp.ne.s32.totalorder %s288, %s291
      %p300 = scmp.eq.s32.totalorder %s31, 3
      %p301 = por %p299, %p300
      %p302 = scmp.ne.s32.totalorder %s291, %s292
      %p303 = scmp.eq.s32.totalorder %s31, 0
      %p304 = por %p302, %p303
      %p305 = scmp.ne.s32.totalorder %s291, %s292
      %p306 = scmp.eq.s32.totalorder %s32, 3
      %p307 = por %p305, %p306
      %p309 = scmp.ne.s32.totalorder %s292, %s308
      %p310 = scmp.eq.s32.totalorder %s32, 0
      %p311 = por %p309, %p310
      %s312 = ssub.s32 %s33, %s45
      %s313 = ssub.s32 %s34, %s41
      %s314 = sor.u32 %s312, %s313
      %p315 = scmp.eq.s32.totalorder %s314, 0
      %s317 = sadd.s32 %s316, 1
      %s318 = scalar_select %p315, %s316, %s317
      %p321 = pneg %p315
      %p322 = scmp.eq.s32.totalorder %s26, 3
      %p323 = por %p321, %p322
      %p324 = scmp.ne.s32.totalorder %s316, %s319
      %p325 = scmp.eq.s32.totalorder %s26, 0
      %p326 = por %p324, %p325
      %p327 = scmp.ne.s32.totalorder %s316, %s319
      %p328 = scmp.eq.s32.totalorder %s31, 3
      %p329 = por %p327, %p328
      %p330 = scmp.ne.s32.totalorder %s319, %s320
      %p331 = scmp.eq.s32.totalorder %s31, 0
      %p332 = por %p330, %p331
      %p333 = scmp.ne.s32.totalorder %s319, %s320
      %p334 = scmp.eq.s32.totalorder %s32, 3
      %p335 = por %p333, %p334
      %p337 = scmp.ne.s32.totalorder %s320, %s336
      %p338 = scmp.eq.s32.totalorder %s32, 0
      %p339 = por %p337, %p338
      %p340 = scmp.le.s32.totalorder 1, %s26
      %p341 = scmp.lt.s32.totalorder %s26, 5
      %p342 = pnand %p340, %p341
      %p343 = pneg %p342
      // Predicated region
      $region9: #{tpu_custom_call.1} parent=5 // pred_check
        _
      $region10: #{tpu_custom_call.1} parent=5 // pred_check_branch
        %345 = sbr.rel (%p342) target = $region12
      $region11: #{tpu_custom_call.1} parent=5 // pred_region
        %s346 = ssub.s32 %s26, 1
        // Predicated region
        $region13: #{tpu_custom_call.1} parent=11 // pred_check
          %p347 = pneg %p143
        $region14: #{tpu_custom_call.1} parent=11 // pred_check_branch
          %349 = sbr.rel (%p347) target = $region16
        $region15: #{tpu_custom_call.1} parent=11 // pred_region
          %s351 = ssub.s32 1024, 1024
          %352 = vsyncadd [#allocation8], %s351
          %s353 = sshll.u32 [#allocation7], 4
          %s354 = int_to_ptr.vmem [resolvable:$true] %s353
          %359 = dma.hbm_to_vmem [thread:$0]  %s3, 1024, %s354, [#allocation8], 64, 64, 4
        $region16: #{tpu_custom_call.1} parent=11 // pred_fallthru
          _
        // Predicated region
        $region17: #{tpu_custom_call.1} parent=11 // pred_check
          %p360 = pneg %p164
        $region18: #{tpu_custom_call.1} parent=11 // pred_check_branch
          %362 = sbr.rel (%p360) target = $region20
        $region19: #{tpu_custom_call.1} parent=11 // pred_region
          _
        $region20: #{tpu_custom_call.1} parent=11 // pred_fallthru
          _
        // Predicated region
        $region21: #{tpu_custom_call.1} parent=11 // pred_check
          %p363 = pneg %p185
        $region22: #{tpu_custom_call.1} parent=11 // pred_check_branch
          %365 = sbr.rel (%p363) target = $region24
        $region23: #{tpu_custom_call.1} parent=11 // pred_region
          %s367 = ssub.s32 1024, 1024
          %368 = vsyncadd [#allocation8], %s367
          %s369 = sshll.u32 [#allocation9], 4
          %s370 = int_to_ptr.vmem [resolvable:$true] %s369
          %375 = dma.hbm_to_vmem [thread:$0]  %s5, 1024, %s370, [#allocation8], 64, 64, 4
        $region24: #{tpu_custom_call.1} parent=11 // pred_fallthru
          _
        // Predicated region
        $region25: #{tpu_custom_call.1} parent=11 // pred_check
          %p376 = pneg %p206
        $region26: #{tpu_custom_call.1} parent=11 // pred_check_branch
          %378 = sbr.rel (%p376) target = $region28
        $region27: #{tpu_custom_call.1} parent=11 // pred_region
          _
        $region28: #{tpu_custom_call.1} parent=11 // pred_fallthru
          _
        // Predicated region
        $region29: #{tpu_custom_call.1} parent=11 // pred_check
          %p379 = pneg %p227
        $region30: #{tpu_custom_call.1} parent=11 // pred_check_branch
          %381 = sbr.rel (%p379) target = $region32
        $region31: #{tpu_custom_call.1} parent=11 // pred_region
          %s383 = ssub.s32 1024, 1024
          %384 = vsyncadd [#allocation11], %s383
          %s385 = sshll.u32 [#allocation10], 4
          %s386 = int_to_ptr.vmem [resolvable:$true] %s385
          %391 = dma.hbm_to_vmem [thread:$0]  %s7, 1024, %s386, [#allocation11], 64, 64, 4
        $region32: #{tpu_custom_call.1} parent=11 // pred_fallthru
          _
        // Predicated region
        $region33: #{tpu_custom_call.1} parent=11 // pred_check
          %p392 = pneg %p248
        $region34: #{tpu_custom_call.1} parent=11 // pred_check_branch
          %394 = sbr.rel (%p392) target = $region36
        $region35: #{tpu_custom_call.1} parent=11 // pred_region
          _
        $region36: #{tpu_custom_call.1} parent=11 // pred_fallthru
          _
      $region12: #{tpu_custom_call.1} parent=5 // pred_fallthru
        _
      %p395 = scmp.lt.s32.totalorder %s26, 4
      // Predicated region
      $region37: #{tpu_custom_call.1} parent=5 // pred_check
        %p396 = pneg %p395
      $region38: #{tpu_custom_call.1} parent=5 // pred_check_branch
        %398 = sbr.rel (%p396) target = $region40
      $region39: #{tpu_custom_call.1} parent=5 // pred_region
        // Predicated region
        $region41: #{tpu_custom_call.1} parent=39 // pred_check
          %p399 = pneg %p60
        $region42: #{tpu_custom_call.1} parent=39 // pred_check_branch
          %401 = sbr.rel (%p399) target = $region44
        $region43: #{tpu_custom_call.1} parent=39 // pred_region
          %s402 = sand.u32 %s50, 1
          %s403 = scalar_lea.sflag [#allocation3], %s402
          %s404 = sand.u32 %s50, 1
          %s405 = smul.addr %s404, 128
          %s406 = scalar_lea.vmem [#allocation2], %s405
          %s407 = smul.u32 32, %s34
          %s409 = ssub.s32 2048, 2048
          %410 = vsyncadd %s403, %s409
          %s411 = smul.addr %s33, 64
          %s412 = sadd.s32 %s407, %s411
          %s413 = smul.addr %s412, 64
          %s414 = scalar_lea.hbm %s0, %s413
          %s415 = sshll.u32 %s406, 4
          %s416 = int_to_ptr.vmem [resolvable:$true] %s415
          %421 = dma.hbm_to_vmem [thread:$0]  %s414, 2048, %s416, %s403, 64, 64, 4
        $region44: #{tpu_custom_call.1} parent=39 // pred_fallthru
          _
        // Predicated region
        $region45: #{tpu_custom_call.1} parent=39 // pred_check
          %p422 = pneg %p88
        $region46: #{tpu_custom_call.1} parent=39 // pred_check_branch
          %424 = sbr.rel (%p422) target = $region48
        $region47: #{tpu_custom_call.1} parent=39 // pred_region
          %s425 = sand.u32 %s26, 1
          %s426 = scalar_lea.sflag [#allocation5], %s425
          %s427 = sand.u32 %s78, 1
          %s428 = smul.addr %s427, 128
          %s429 = scalar_lea.vmem [#allocation4], %s428
          %s430 = smul.u32 32, %s34
          %s432 = ssub.s32 2048, 2048
          %433 = vsyncadd %s426, %s432
          %s434 = smul.addr %s33, 64
          %s435 = sadd.s32 %s430, %s434
          %s436 = smul.addr %s435, 64
          %s437 = scalar_lea.hbm %s1, %s436
          %s438 = sshll.u32 %s429, 4
          %s439 = int_to_ptr.vmem [resolvable:$true] %s438
          %444 = dma.hbm_to_vmem [thread:$0]  %s437, 2048, %s439, %s426, 64, 64, 4
        $region48: #{tpu_custom_call.1} parent=39 // pred_fallthru
          _
        // Predicated region
        $region49: #{tpu_custom_call.1} parent=39 // pred_check
          %p445 = pneg %p116
        $region50: #{tpu_custom_call.1} parent=39 // pred_check_branch
          %447 = sbr.rel (%p445) target = $region52
        $region51: #{tpu_custom_call.1} parent=39 // pred_region
          %s448 = sand.u32 %s26, 1
          %s449 = scalar_lea.sflag [#allocation5], %s448
          %s450 = sand.u32 %s106, 1
          %s451 = smul.addr %s450, 128
          %s452 = scalar_lea.vmem [#allocation6], %s451
          %s453 = smul.u32 32, %s34
          %s455 = ssub.s32 2048, 2048
          %456 = vsyncadd %s449, %s455
          %s457 = smul.addr %s33, 64
          %s458 = sadd.s32 %s453, %s457
          %s459 = smul.addr %s458, 64
          %s460 = scalar_lea.hbm %s2, %s459
          %s461 = sshll.u32 %s452, 4
          %s462 = int_to_ptr.vmem [resolvable:$true] %s461
          %467 = dma.hbm_to_vmem [thread:$0]  %s460, 2048, %s462, %s449, 64, 64, 4
        $region52: #{tpu_custom_call.1} parent=39 // pred_fallthru
          _
      $region40: #{tpu_custom_call.1} parent=5 // pred_fallthru
        _
      %p468 = scmp.le.s32.totalorder 1, %s26
      %p469 = scmp.lt.s32.totalorder %s26, 5
      %p470 = pnand %p468, %p469
      %p471 = pneg %p470
      // Predicated region
      $region53: #{tpu_custom_call.1} parent=5 // pred_check
        _
      $region54: #{tpu_custom_call.1} parent=5 // pred_check_branch
        %473 = sbr.rel (%p470) target = $region56
      $region55: #{tpu_custom_call.1} parent=5 // pred_region
        %s474 = ssub.s32 %s26, 1
        %s475 = sand.u32 %s53, 1
        %s476 = scalar_lea.sflag [#allocation3], %s475
        %s477 = sand.u32 %s53, 1
        %s478 = smul.addr %s477, 128
        %s479 = scalar_lea.vmem [#allocation2], %s478
        // Predicated region
        $region57: #{tpu_custom_call.1} parent=55 // pred_check
          %p480 = pneg %p66
        $region58: #{tpu_custom_call.1} parent=55 // pred_check_branch
          %482 = sbr.rel (%p480) target = $region60
        $region59: #{tpu_custom_call.1} parent=55 // pred_region
          %483 = dma.done %s476, 2048
        $region60: #{tpu_custom_call.1} parent=55 // pred_fallthru
          _
        %s484 = sand.u32 %s31, 1
        %s485 = scalar_lea.sflag [#allocation5], %s484
        %s486 = sand.u32 %s81, 1
        %s487 = smul.addr %s486, 128
        %s488 = scalar_lea.vmem [#allocation4], %s487
        // Predicated region
        $region61: #{tpu_custom_call.1} parent=55 // pred_check
          %p489 = pneg %p94
        $region62: #{tpu_custom_call.1} parent=55 // pred_check_branch
          %491 = sbr.rel (%p489) target = $region64
        $region63: #{tpu_custom_call.1} parent=55 // pred_region
          %492 = dma.done %s485, 2048
        $region64: #{tpu_custom_call.1} parent=55 // pred_fallthru
          _
        %s493 = sand.u32 %s31, 1
        %s494 = scalar_lea.sflag [#allocation5], %s493
        %s495 = sand.u32 %s109, 1
        %s496 = smul.addr %s495, 128
        %s497 = scalar_lea.vmem [#allocation6], %s496
        // Predicated region
        $region65: #{tpu_custom_call.1} parent=55 // pred_check
          %p498 = pneg %p122
        $region66: #{tpu_custom_call.1} parent=55 // pred_check_branch
          %500 = sbr.rel (%p498) target = $region68
        $region67: #{tpu_custom_call.1} parent=55 // pred_region
          %501 = dma.done %s494, 2048
        $region68: #{tpu_custom_call.1} parent=55 // pred_fallthru
          _
        // Predicated region
        $region69: #{tpu_custom_call.1} parent=55 // pred_check
          %p502 = pneg %p143
        $region70: #{tpu_custom_call.1} parent=55 // pred_check_branch
          %504 = sbr.rel (%p502) target = $region72
        $region71: #{tpu_custom_call.1} parent=55 // pred_region
          %505 = dma.done [#allocation8], 1024
        $region72: #{tpu_custom_call.1} parent=55 // pred_fallthru
          _
        // Predicated region
        $region73: #{tpu_custom_call.1} parent=55 // pred_check
          %p506 = pneg %p185
        $region74: #{tpu_custom_call.1} parent=55 // pred_check_branch
          %508 = sbr.rel (%p506) target = $region76
        $region75: #{tpu_custom_call.1} parent=55 // pred_region
          %509 = dma.done [#allocation8], 1024
        $region76: #{tpu_custom_call.1} parent=55 // pred_fallthru
          _
        // Predicated region
        $region77: #{tpu_custom_call.1} parent=55 // pred_check
          %p510 = pneg %p227
        $region78: #{tpu_custom_call.1} parent=55 // pred_check_branch
          %512 = sbr.rel (%p510) target = $region80
        $region79: #{tpu_custom_call.1} parent=55 // pred_region
          %513 = dma.done [#allocation11], 1024
        $region80: #{tpu_custom_call.1} parent=55 // pred_fallthru
          _
        %s514 = sand.u32 %s53, 1
        %s515 = scalar_lea.sflag [#allocation3], %s514
        %s516 = sand.u32 %s53, 1
        %s517 = smul.addr %s516, 128
        %s518 = scalar_lea.vmem [#allocation2], %s517
        %p519 = pneg %p66
        %p520 = pneg %p63
        %s521 = sand.u32 %s31, 1
        %s522 = scalar_lea.sflag [#allocation5], %s521
        %s523 = sand.u32 %s81, 1
        %s524 = smul.addr %s523, 128
        %s525 = scalar_lea.vmem [#allocation4], %s524
        %p526 = pneg %p94
        %p527 = pneg %p91
        %s528 = sand.u32 %s31, 1
        %s529 = scalar_lea.sflag [#allocation5], %s528
        %s530 = sand.u32 %s109, 1
        %s531 = smul.addr %s530, 128
        %s532 = scalar_lea.vmem [#allocation6], %s531
        %p533 = pneg %p122
        %p534 = pneg %p119
        %p535 = pneg %p143
        %p536 = pneg %p140
        %p537 = pneg %p164
        %p538 = pneg %p161
        %p539 = pneg %p185
        %p540 = pneg %p182
        %p541 = pneg %p206
        %p542 = pneg %p203
        %p543 = pneg %p227
        %p544 = pneg %p224
        %p545 = pneg %p248
        %p546 = pneg %p245
        %p547 = pneg %p276
        %p548 = pneg %p273
        %s549 = sand.u32 %s263, 1
        %s550 = sand.u32 %s263, 1
        %s551 = smul.addr %s550, 512
        %s552 = scalar_lea.vmem [#allocation12], %s551
        %p553 = pneg %p304
        %p554 = pneg %p301
        %s555 = sand.u32 %s291, 1
        %s556 = sand.u32 %s291, 1
        %s557 = smul.addr %s556, 512
        %s558 = scalar_lea.vmem [#allocation13], %s557
        %p559 = pneg %p332
        %p560 = pneg %p329
        %s561 = sand.u32 %s319, 1
        %s562 = sand.u32 %s319, 1
        %s563 = smul.addr %s562, 512
        %s564 = scalar_lea.vmem [#allocation14], %s563
        %s565 = smul.u32 32, %s36
        %s566 = smul.u32 32, %s36
        %s567 = smul.u32 32, %s36
        %s568 = smul.u32 32, %s36
        %s569 = smul.u32 32, %s36
        %s570 = smul.u32 32, %s36
        %v572 = vld [vmem:[%s479] sm:$0xf]
        %v573 = vld [vmem:[%s479 + $0x4] sm:$0xf]
        %v574 = vld [vmem:[%s479 + $0x8] sm:$0xf]
        %v575 = vld [vmem:[%s479 + $0xc] sm:$0xf]
        %v576 = vld [vmem:[%s479 + $0x10] sm:$0xf]
        %v577 = vld [vmem:[%s479 + $0x14] sm:$0xf]
        %v578 = vld [vmem:[%s479 + $0x18] sm:$0xf]
        %v579 = vld [vmem:[%s479 + $0x1c] sm:$0xf]
        %v580 = vld [vmem:[%s479 + $0x20] sm:$0xf]
        %v581 = vld [vmem:[%s479 + $0x24] sm:$0xf]
        %v582 = vld [vmem:[%s479 + $0x28] sm:$0xf]
        %v583 = vld [vmem:[%s479 + $0x2c] sm:$0xf]
        %v584 = vld [vmem:[%s479 + $0x30] sm:$0xf]
        %v585 = vld [vmem:[%s479 + $0x34] sm:$0xf]
        %v586 = vld [vmem:[%s479 + $0x38] sm:$0xf]
        %v587 = vld [vmem:[%s479 + $0x3c] sm:$0xf]
        %v588 = vld [vmem:[%s479 + $0x40] sm:$0xf]
        %v589 = vld [vmem:[%s479 + $0x44] sm:$0xf]
        %v590 = vld [vmem:[%s479 + $0x48] sm:$0xf]
        %v591 = vld [vmem:[%s479 + $0x4c] sm:$0xf]
        %v592 = vld [vmem:[%s479 + $0x50] sm:$0xf]
        %v593 = vld [vmem:[%s479 + $0x54] sm:$0xf]
        %v594 = vld [vmem:[%s479 + $0x58] sm:$0xf]
        %v595 = vld [vmem:[%s479 + $0x5c] sm:$0xf]
        %v596 = vld [vmem:[%s479 + $0x60] sm:$0xf]
        %v597 = vld [vmem:[%s479 + $0x64] sm:$0xf]
        %v598 = vld [vmem:[%s479 + $0x68] sm:$0xf]
        %v599 = vld [vmem:[%s479 + $0x6c] sm:$0xf]
        %v600 = vld [vmem:[%s479 + $0x70] sm:$0xf]
        %v601 = vld [vmem:[%s479 + $0x74] sm:$0xf]
        %v602 = vld [vmem:[%s479 + $0x78] sm:$0xf]
        %v603 = vld [vmem:[%s479 + $0x7c] sm:$0xf]
        %v604 = vld [vmem:[#allocation7] sm:$0xf]
        %v605 = vld [vmem:[#allocation7 + $0x4] sm:$0xf]
        %v606 = vld [vmem:[#allocation7 + $0x8] sm:$0xf]
        %v607 = vld [vmem:[#allocation7 + $0xc] sm:$0xf]
        %v608 = vld [vmem:[#allocation7 + $0x10] sm:$0xf]
        %v609 = vld [vmem:[#allocation7 + $0x14] sm:$0xf]
        %v610 = vld [vmem:[#allocation7 + $0x18] sm:$0xf]
        %v611 = vld [vmem:[#allocation7 + $0x1c] sm:$0xf]
        %v612 = vld [vmem:[#allocation7 + $0x20] sm:$0xf]
        %v613 = vld [vmem:[#allocation7 + $0x24] sm:$0xf]
        %v614 = vld [vmem:[#allocation7 + $0x28] sm:$0xf]
        %v615 = vld [vmem:[#allocation7 + $0x2c] sm:$0xf]
        %v616 = vld [vmem:[#allocation7 + $0x30] sm:$0xf]
        %v617 = vld [vmem:[#allocation7 + $0x34] sm:$0xf]
        %v618 = vld [vmem:[#allocation7 + $0x38] sm:$0xf]
        %v619 = vld [vmem:[#allocation7 + $0x3c] sm:$0xf]
        %v620 = vld [vmem:[%s4] sm:$0x1]
        %v622 = vlaneseq
        %v623 = vshrl.u32 %v622, 7
        %v624 = vsub.s32 0, %v623
        %v625 = vrot.slane %v620, %v624
        %v659 = vunpack.c.l.b16 %v572
        %v660 = vunpack.c.l.b16 %v573
        %v661 = vunpack.c.l.b16 %v574
        %v662 = vunpack.c.l.b16 %v575
        %v663 = vunpack.c.l.b16 %v576
        %v664 = vunpack.c.l.b16 %v577
        %v665 = vunpack.c.l.b16 %v578
        %v666 = vunpack.c.l.b16 %v579
        %v667 = vunpack.c.l.b16 %v580
        %v668 = vunpack.c.l.b16 %v581
        %v669 = vunpack.c.l.b16 %v582
        %v670 = vunpack.c.l.b16 %v583
        %v671 = vunpack.c.l.b16 %v584
        %v672 = vunpack.c.l.b16 %v585
        %v673 = vunpack.c.l.b16 %v586
        %v674 = vunpack.c.l.b16 %v587
        %v675 = vunpack.c.l.b16 %v588
        %v676 = vunpack.c.l.b16 %v589
        %v677 = vunpack.c.l.b16 %v590
        %v678 = vunpack.c.l.b16 %v591
        %v679 = vunpack.c.l.b16 %v592
        %v680 = vunpack.c.l.b16 %v593
        %v681 = vunpack.c.l.b16 %v594
        %v682 = vunpack.c.l.b16 %v595
        %v683 = vunpack.c.l.b16 %v596
        %v684 = vunpack.c.l.b16 %v597
        %v685 = vunpack.c.l.b16 %v598
        %v686 = vunpack.c.l.b16 %v599
        %v687 = vunpack.c.l.b16 %v600
        %v688 = vunpack.c.l.b16 %v601
        %v689 = vunpack.c.l.b16 %v602
        %v690 = vunpack.c.l.b16 %v603
        %v691 = vpack.c.b16 %v660, %v659
        %v692 = vpack.c.b16 %v662, %v661
        %v693 = vpack.c.b16 %v664, %v663
        %v694 = vpack.c.b16 %v666, %v665
        %v695 = vpack.c.b16 %v668, %v667
        %v696 = vpack.c.b16 %v670, %v669
        %v697 = vpack.c.b16 %v672, %v671
        %v698 = vpack.c.b16 %v674, %v673
        %v699 = vpack.c.b16 %v676, %v675
        %v700 = vpack.c.b16 %v678, %v677
        %v701 = vpack.c.b16 %v680, %v679
        %v702 = vpack.c.b16 %v682, %v681
        %v703 = vpack.c.b16 %v684, %v683
        %v704 = vpack.c.b16 %v686, %v685
        %v705 = vpack.c.b16 %v688, %v687
        %v706 = vpack.c.b16 %v690, %v689
        %v739 = vunpack.c.l.b16 %v604
        %v740 = vunpack.c.l.b16 %v605
        %v741 = vunpack.c.l.b16 %v606
        %v742 = vunpack.c.l.b16 %v607
        %v743 = vunpack.c.l.b16 %v608
        %v744 = vunpack.c.l.b16 %v609
        %v745 = vunpack.c.l.b16 %v610
        %v746 = vunpack.c.l.b16 %v611
        %v747 = vunpack.c.l.b16 %v612
        %v748 = vunpack.c.l.b16 %v613
        %v749 = vunpack.c.l.b16 %v614
        %v750 = vunpack.c.l.b16 %v615
        %v751 = vunpack.c.l.b16 %v616
        %v752 = vunpack.c.l.b16 %v617
        %v753 = vunpack.c.l.b16 %v618
        %v754 = vunpack.c.l.b16 %v619
        %v755 = vpack.c.b16 %v740, %v739
        %v756 = vpack.c.b16 %v742, %v741
        %v757 = vpack.c.b16 %v744, %v743
        %v758 = vpack.c.b16 %v746, %v745
        %v759 = vpack.c.b16 %v748, %v747
        %v760 = vpack.c.b16 %v750, %v749
        %v761 = vpack.c.b16 %v752, %v751
        %v762 = vpack.c.b16 %v754, %v753
        %771 = vmatprep.subr.bf16.mxu0 0
        %772 = vmatpush1.bf16.msra.mxu0 %v762
        %773 = vmatprep.subr.bf16.mxu0 0
        %774 = vmatpush1.bf16.msra.mxu0 %v761
        %775 = vmatprep.subr.bf16.mxu0 0
        %776 = vmatpush1.bf16.msra.mxu0 %v760
        %777 = vmatprep.subr.bf16.mxu0 0
        %778 = vmatpush1.bf16.msra.mxu0 %v759
        %779 = vmatprep.subr.bf16.mxu0 0
        %780 = vmatpush1.bf16.msra.mxu0 %v758
        %781 = vmatprep.subr.bf16.mxu0 0
        %782 = vmatpush1.bf16.msra.mxu0 %v757
        %783 = vmatprep.subr.bf16.mxu0 0
        %784 = vmatpush1.bf16.msra.mxu0 %v756
        %785 = vmatprep.subr.bf16.mxu0 0
        %786 = vmatpush1.bf16.msra.mxu0 %v755
        %787 = vmatprep.subr.bf16.mxu0 0
        %788 = vmatpush2.bf16.msra.mxu0 0
        %789 = vmatprep.subr.bf16.mxu0 0
        %790 = vmatpush2.bf16.msra.mxu0 0
        %791 = vmatprep.subr.bf16.mxu0 0
        %792 = vmatpush2.bf16.msra.mxu0 0
        %793 = vmatprep.subr.bf16.mxu0 0
        %794 = vmatpush2.bf16.msra.mxu0 0
        %795 = vmatprep.subr.bf16.mxu0 0
        %796 = vmatpush2.bf16.msra.mxu0 0
        %797 = vmatprep.subr.bf16.mxu0 0
        %798 = vmatpush2.bf16.msra.mxu0 0
        %799 = vmatprep.subr.bf16.mxu0 0
        %800 = vmatpush2.bf16.msra.mxu0 0
        %801 = vmatprep.subr.bf16.mxu0 0
        %802 = vmatpush2.bf16.msra.mxu0 0
        %803 = vmatprep.mubr.bf16.mxu0 0
        %804 = vmatmul.mubr.bf16.gmra.mxu0 %v691
        %v805 = vpop.f32.mrf.mxu0
        %v806 = vadd.f32 %v625, %v805
        %v807 = vpop.f32.mrf.mxu0
        %v808 = vpop.f32.mrf.mxu0
        %v809 = vadd.f32 %v625, %v808
        %v810 = vpop.f32.mrf.mxu0
        %811 = vmatprep.mubr.bf16.mxu0 0
        %812 = vmatmul.mubr.bf16.gmra.mxu0 %v692
        %v813 = vpop.f32.mrf.mxu0
        %v814 = vadd.f32 %v625, %v813
        %v815 = vpop.f32.mrf.mxu0
        %v816 = vpop.f32.mrf.mxu0
        %v817 = vadd.f32 %v625, %v816
        %v818 = vpop.f32.mrf.mxu0
        %819 = vmatprep.mubr.bf16.mxu0 0
        %820 = vmatmul.mubr.bf16.gmra.mxu0 %v693
        %v821 = vpop.f32.mrf.mxu0
        %v822 = vadd.f32 %v625, %v821
        %v823 = vpop.f32.mrf.mxu0
        %v824 = vpop.f32.mrf.mxu0
        %v825 = vadd.f32 %v625, %v824
        %v826 = vpop.f32.mrf.mxu0
        %827 = vmatprep.mubr.bf16.mxu0 0
        %828 = vmatmul.mubr.bf16.gmra.mxu0 %v694
        %v829 = vpop.f32.mrf.mxu0
        %v830 = vadd.f32 %v625, %v829
        %v831 = vpop.f32.mrf.mxu0
        %v832 = vpop.f32.mrf.mxu0
        %v833 = vadd.f32 %v625, %v832
        %v834 = vpop.f32.mrf.mxu0
        %835 = vmatprep.mubr.bf16.mxu0 0
        %836 = vmatmul.mubr.bf16.gmra.mxu0 %v695
        %v837 = vpop.f32.mrf.mxu0
        %v838 = vadd.f32 %v625, %v837
        %v839 = vpop.f32.mrf.mxu0
        %v840 = vpop.f32.mrf.mxu0
        %v841 = vadd.f32 %v625, %v840
        %v842 = vpop.f32.mrf.mxu0
        %843 = vmatprep.mubr.bf16.mxu0 0
        %844 = vmatmul.mubr.bf16.gmra.mxu0 %v696
        %v845 = vpop.f32.mrf.mxu0
        %v846 = vadd.f32 %v625, %v845
        %v847 = vpop.f32.mrf.mxu0
        %v848 = vpop.f32.mrf.mxu0
        %v849 = vadd.f32 %v625, %v848
        %v850 = vpop.f32.mrf.mxu0
        %851 = vmatprep.mubr.bf16.mxu0 0
        %852 = vmatmul.mubr.bf16.gmra.mxu0 %v697
        %v853 = vpop.f32.mrf.mxu0
        %v854 = vadd.f32 %v625, %v853
        %v855 = vpop.f32.mrf.mxu0
        %v856 = vpop.f32.mrf.mxu0
        %v857 = vadd.f32 %v625, %v856
        %v858 = vpop.f32.mrf.mxu0
        %859 = vmatprep.mubr.bf16.mxu0 0
        %860 = vmatmul.mubr.bf16.gmra.mxu0 %v698
        %v861 = vpop.f32.mrf.mxu0
        %v862 = vadd.f32 %v625, %v861
        %v863 = vpop.f32.mrf.mxu0
        %v864 = vpop.f32.mrf.mxu0
        %v865 = vadd.f32 %v625, %v864
        %v866 = vpop.f32.mrf.mxu0
        %867 = vmatprep.mubr.bf16.mxu0 0
        %868 = vmatmul.mubr.bf16.gmra.mxu0 %v699
        %v869 = vpop.f32.mrf.mxu0
        %v870 = vadd.f32 %v625, %v869
        %v871 = vpop.f32.mrf.mxu0
        %v872 = vpop.f32.mrf.mxu0
        %v873 = vadd.f32 %v625, %v872
        %v874 = vpop.f32.mrf.mxu0
        %875 = vmatprep.mubr.bf16.mxu0 0
        %876 = vmatmul.mubr.bf16.gmra.mxu0 %v700
        %v877 = vpop.f32.mrf.mxu0
        %v878 = vadd.f32 %v625, %v877
        %v879 = vpop.f32.mrf.mxu0
        %v880 = vpop.f32.mrf.mxu0
        %v881 = vadd.f32 %v625, %v880
        %v882 = vpop.f32.mrf.mxu0
        %883 = vmatprep.mubr.bf16.mxu0 0
        %884 = vmatmul.mubr.bf16.gmra.mxu0 %v701
        %v885 = vpop.f32.mrf.mxu0
        %v886 = vadd.f32 %v625, %v885
        %v887 = vpop.f32.mrf.mxu0
        %v888 = vpop.f32.mrf.mxu0
        %v889 = vadd.f32 %v625, %v888
        %v890 = vpop.f32.mrf.mxu0
        %891 = vmatprep.mubr.bf16.mxu0 0
        %892 = vmatmul.mubr.bf16.gmra.mxu0 %v702
        %v893 = vpop.f32.mrf.mxu0
        %v894 = vadd.f32 %v625, %v893
        %v895 = vpop.f32.mrf.mxu0
        %v896 = vpop.f32.mrf.mxu0
        %v897 = vadd.f32 %v625, %v896
        %v898 = vpop.f32.mrf.mxu0
        %899 = vmatprep.mubr.bf16.mxu0 0
        %900 = vmatmul.mubr.bf16.gmra.mxu0 %v703
        %v901 = vpop.f32.mrf.mxu0
        %v902 = vadd.f32 %v625, %v901
        %v903 = vpop.f32.mrf.mxu0
        %v904 = vpop.f32.mrf.mxu0
        %v905 = vadd.f32 %v625, %v904
        %v906 = vpop.f32.mrf.mxu0
        %907 = vmatprep.mubr.bf16.mxu0 0
        %908 = vmatmul.mubr.bf16.gmra.mxu0 %v704
        %v909 = vpop.f32.mrf.mxu0
        %v910 = vadd.f32 %v625, %v909
        %v911 = vpop.f32.mrf.mxu0
        %v912 = vpop.f32.mrf.mxu0
        %v913 = vadd.f32 %v625, %v912
        %v914 = vpop.f32.mrf.mxu0
        %915 = vmatprep.mubr.bf16.mxu0 0
        %916 = vmatmul.mubr.bf16.gmra.mxu0 %v705
        %v917 = vpop.f32.mrf.mxu0
        %v918 = vadd.f32 %v625, %v917
        %v919 = vpop.f32.mrf.mxu0
        %v920 = vpop.f32.mrf.mxu0
        %v921 = vadd.f32 %v625, %v920
        %v922 = vpop.f32.mrf.mxu0
        %923 = vmatprep.mubr.bf16.mxu0 0
        %924 = vmatmul.mubr.bf16.gmra.mxu0 %v706
        %v925 = vpop.f32.mrf.mxu0
        %v926 = vadd.f32 %v625, %v925
        %v927 = vpop.f32.mrf.mxu0
        %v928 = vpop.f32.mrf.mxu0
        %v929 = vadd.f32 %v625, %v928
        %v930 = vpop.f32.mrf.mxu0
        %931 = vdwg.mxu0
        %v932 = vpack.c.bf16 %v809, %v806
        %v933 = vpack.c.bf16 %v817, %v814
        %v934 = vpack.c.bf16 %v825, %v822
        %v935 = vpack.c.bf16 %v833, %v830
        %v936 = vpack.c.bf16 %v841, %v838
        %v937 = vpack.c.bf16 %v849, %v846
        %v938 = vpack.c.bf16 %v857, %v854
        %v939 = vpack.c.bf16 %v865, %v862
        %v940 = vpack.c.bf16 %v873, %v870
        %v941 = vpack.c.bf16 %v881, %v878
        %v942 = vpack.c.bf16 %v889, %v886
        %v943 = vpack.c.bf16 %v897, %v894
        %v944 = vpack.c.bf16 %v905, %v902
        %v945 = vpack.c.bf16 %v913, %v910
        %v946 = vpack.c.bf16 %v921, %v918
        %v947 = vpack.c.bf16 %v929, %v926
        %v964 = vunpack.c.l.b16 %v932
        %v965 = vunpack.c.h.b16 %v932
        %v966 = vunpack.c.l.b16 %v933
        %v967 = vunpack.c.h.b16 %v933
        %v968 = vunpack.c.l.b16 %v934
        %v969 = vunpack.c.h.b16 %v934
        %v970 = vunpack.c.l.b16 %v935
        %v971 = vunpack.c.h.b16 %v935
        %v972 = vunpack.c.l.b16 %v936
        %v973 = vunpack.c.h.b16 %v936
        %v974 = vunpack.c.l.b16 %v937
        %v975 = vunpack.c.h.b16 %v937
        %v976 = vunpack.c.l.b16 %v938
        %v977 = vunpack.c.h.b16 %v938
        %v978 = vunpack.c.l.b16 %v939
        %v979 = vunpack.c.h.b16 %v939
        %v980 = vunpack.c.l.b16 %v940
        %v981 = vunpack.c.h.b16 %v940
        %v982 = vunpack.c.l.b16 %v941
        %v983 = vunpack.c.h.b16 %v941
        %v984 = vunpack.c.l.b16 %v942
        %v985 = vunpack.c.h.b16 %v942
        %v986 = vunpack.c.l.b16 %v943
        %v987 = vunpack.c.h.b16 %v943
        %v988 = vunpack.c.l.b16 %v944
        %v989 = vunpack.c.h.b16 %v944
        %v990 = vunpack.c.l.b16 %v945
        %v991 = vunpack.c.h.b16 %v945
        %v992 = vunpack.c.l.b16 %v946
        %v993 = vunpack.c.h.b16 %v946
        %v994 = vunpack.c.l.b16 %v947
        %v995 = vunpack.c.h.b16 %v947
        %v996 = vpack.c.b16 %v964, %v964
        %v997 = vpack.c.b16 %v965, %v965
        %v998 = vpack.c.b16 %v966, %v966
        %v999 = vpack.c.b16 %v967, %v967
        %v1000 = vpack.c.b16 %v968, %v968
        %v1001 = vpack.c.b16 %v969, %v969
        %v1002 = vpack.c.b16 %v970, %v970
        %v1003 = vpack.c.b16 %v971, %v971
        %v1004 = vpack.c.b16 %v972, %v972
        %v1005 = vpack.c.b16 %v973, %v973
        %v1006 = vpack.c.b16 %v974, %v974
        %v1007 = vpack.c.b16 %v975, %v975
        %v1008 = vpack.c.b16 %v976, %v976
        %v1009 = vpack.c.b16 %v977, %v977
        %v1010 = vpack.c.b16 %v978, %v978
        %v1011 = vpack.c.b16 %v979, %v979
        %v1012 = vpack.c.b16 %v980, %v980
        %v1013 = vpack.c.b16 %v981, %v981
        %v1014 = vpack.c.b16 %v982, %v982
        %v1015 = vpack.c.b16 %v983, %v983
        %v1016 = vpack.c.b16 %v984, %v984
        %v1017 = vpack.c.b16 %v985, %v985
        %v1018 = vpack.c.b16 %v986, %v986
        %v1019 = vpack.c.b16 %v987, %v987
        %v1020 = vpack.c.b16 %v988, %v988
        %v1021 = vpack.c.b16 %v989, %v989
        %v1022 = vpack.c.b16 %v990, %v990
        %v1023 = vpack.c.b16 %v991, %v991
        %v1024 = vpack.c.b16 %v992, %v992
        %v1025 = vpack.c.b16 %v993, %v993
        %v1026 = vpack.c.b16 %v994, %v994
        %v1027 = vpack.c.b16 %v995, %v995
        %vm1060 = vcmask 257024
        %1061 = vst.msk [vmem:[%s552] sm:$0xf] %vm1060, %v996
        %1062 = vst.msk [vmem:[%s552 + $0x4] sm:$0xf] %vm1060, %v997
        %1063 = vst.msk [vmem:[%s552 + $0x8] sm:$0xf] %vm1060, %v998
        %1064 = vst.msk [vmem:[%s552 + $0xc] sm:$0xf] %vm1060, %v999
        %1065 = vst.msk [vmem:[%s552 + $0x10] sm:$0xf] %vm1060, %v1000
        %1066 = vst.msk [vmem:[%s552 + $0x14] sm:$0xf] %vm1060, %v1001
        %1067 = vst.msk [vmem:[%s552 + $0x18] sm:$0xf] %vm1060, %v1002
        %1068 = vst.msk [vmem:[%s552 + $0x1c] sm:$0xf] %vm1060, %v1003
        %1069 = vst.msk [vmem:[%s552 + $0x20] sm:$0xf] %vm1060, %v1004
        %1070 = vst.msk [vmem:[%s552 + $0x24] sm:$0xf] %vm1060, %v1005
        %1071 = vst.msk [vmem:[%s552 + $0x28] sm:$0xf] %vm1060, %v1006
        %1072 = vst.msk [vmem:[%s552 + $0x2c] sm:$0xf] %vm1060, %v1007
        %1073 = vst.msk [vmem:[%s552 + $0x30] sm:$0xf] %vm1060, %v1008
        %1074 = vst.msk [vmem:[%s552 + $0x34] sm:$0xf] %vm1060, %v1009
        %1075 = vst.msk [vmem:[%s552 + $0x38] sm:$0xf] %vm1060, %v1010
        %1076 = vst.msk [vmem:[%s552 + $0x3c] sm:$0xf] %vm1060, %v1011
        %1077 = vst.msk [vmem:[%s552 + $0x40] sm:$0xf] %vm1060, %v1012
        %1078 = vst.msk [vmem:[%s552 + $0x44] sm:$0xf] %vm1060, %v1013
        %1079 = vst.msk [vmem:[%s552 + $0x48] sm:$0xf] %vm1060, %v1014
        %1080 = vst.msk [vmem:[%s552 + $0x4c] sm:$0xf] %vm1060, %v1015
        %1081 = vst.msk [vmem:[%s552 + $0x50] sm:$0xf] %vm1060, %v1016
        %1082 = vst.msk [vmem:[%s552 + $0x54] sm:$0xf] %vm1060, %v1017
        %1083 = vst.msk [vmem:[%s552 + $0x58] sm:$0xf] %vm1060, %v1018
        %1084 = vst.msk [vmem:[%s552 + $0x5c] sm:$0xf] %vm1060, %v1019
        %1085 = vst.msk [vmem:[%s552 + $0x60] sm:$0xf] %vm1060, %v1020
        %1086 = vst.msk [vmem:[%s552 + $0x64] sm:$0xf] %vm1060, %v1021
        %1087 = vst.msk [vmem:[%s552 + $0x68] sm:$0xf] %vm1060, %v1022
        %1088 = vst.msk [vmem:[%s552 + $0x6c] sm:$0xf] %vm1060, %v1023
        %1089 = vst.msk [vmem:[%s552 + $0x70] sm:$0xf] %vm1060, %v1024
        %1090 = vst.msk [vmem:[%s552 + $0x74] sm:$0xf] %vm1060, %v1025
        %1091 = vst.msk [vmem:[%s552 + $0x78] sm:$0xf] %vm1060, %v1026
        %1092 = vst.msk [vmem:[%s552 + $0x7c] sm:$0xf] %vm1060, %v1027
        %1093 = vrot.lane.b32.xlu0 %v996, 96
        %v1094 = vpop.permute.xlu0 %1093
        %1095 = vrot.lane.b32.xlu0 %v997, 96
        %v1096 = vpop.permute.xlu0 %1095
        %1097 = vrot.lane.b32.xlu0 %v998, 96
        %v1098 = vpop.permute.xlu0 %1097
        %1099 = vrot.lane.b32.xlu0 %v999, 96
        %v1100 = vpop.permute.xlu0 %1099
        %1101 = vrot.lane.b32.xlu0 %v1000, 96
        %v1102 = vpop.permute.xlu0 %1101
        %1103 = vrot.lane.b32.xlu0 %v1001, 96
        %v1104 = vpop.permute.xlu0 %1103
        %1105 = vrot.lane.b32.xlu0 %v1002, 96
        %v1106 = vpop.permute.xlu0 %1105
        %1107 = vrot.lane.b32.xlu0 %v1003, 96
        %v1108 = vpop.permute.xlu0 %1107
        %1109 = vrot.lane.b32.xlu0 %v1004, 96
        %v1110 = vpop.permute.xlu0 %1109
        %1111 = vrot.lane.b32.xlu0 %v1005, 96
        %v1112 = vpop.permute.xlu0 %1111
        %1113 = vrot.lane.b32.xlu0 %v1006, 96
        %v1114 = vpop.permute.xlu0 %1113
        %1115 = vrot.lane.b32.xlu0 %v1007, 96
        %v1116 = vpop.permute.xlu0 %1115
        %1117 = vrot.lane.b32.xlu0 %v1008, 96
        %v1118 = vpop.permute.xlu0 %1117
        %1119 = vrot.lane.b32.xlu0 %v1009, 96
        %v1120 = vpop.permute.xlu0 %1119
        %1121 = vrot.lane.b32.xlu0 %v1010, 96
        %v1122 = vpop.permute.xlu0 %1121
        %1123 = vrot.lane.b32.xlu0 %v1011, 96
        %v1124 = vpop.permute.xlu0 %1123
        %1125 = vrot.lane.b32.xlu0 %v1012, 96
        %v1126 = vpop.permute.xlu0 %1125
        %1127 = vrot.lane.b32.xlu0 %v1013, 96
        %v1128 = vpop.permute.xlu0 %1127
        %1129 = vrot.lane.b32.xlu0 %v1014, 96
        %v1130 = vpop.permute.xlu0 %1129
        %1131 = vrot.lane.b32.xlu0 %v1015, 96
        %v1132 = vpop.permute.xlu0 %1131
        %1133 = vrot.lane.b32.xlu0 %v1016, 96
        %v1134 = vpop.permute.xlu0 %1133
        %1135 = vrot.lane.b32.xlu0 %v1017, 96
        %v1136 = vpop.permute.xlu0 %1135
        %1137 = vrot.lane.b32.xlu0 %v1018, 96
        %v1138 = vpop.permute.xlu0 %1137
        %1139 = vrot.lane.b32.xlu0 %v1019, 96
        %v1140 = vpop.permute.xlu0 %1139
        %1141 = vrot.lane.b32.xlu0 %v1020, 96
        %v1142 = vpop.permute.xlu0 %1141
        %1143 = vrot.lane.b32.xlu0 %v1021, 96
        %v1144 = vpop.permute.xlu0 %1143
        %1145 = vrot.lane.b32.xlu0 %v1022, 96
        %v1146 = vpop.permute.xlu0 %1145
        %1147 = vrot.lane.b32.xlu0 %v1023, 96
        %v1148 = vpop.permute.xlu0 %1147
        %1149 = vrot.lane.b32.xlu0 %v1024, 96
        %v1150 = vpop.permute.xlu0 %1149
        %1151 = vrot.lane.b32.xlu0 %v1025, 96
        %v1152 = vpop.permute.xlu0 %1151
        %1153 = vrot.lane.b32.xlu0 %v1026, 96
        %v1154 = vpop.permute.xlu0 %1153
        %1155 = vrot.lane.b32.xlu0 %v1027, 96
        %v1156 = vpop.permute.xlu0 %1155
        %s1189 = scalar_lea.vmem %s552, 128 [#allocation12]
        %1190 = vst.msk [vmem:[%s1189] sm:$0xf] %vm1060, %v1094
        %1191 = vst.msk [vmem:[%s1189 + $0x4] sm:$0xf] %vm1060, %v1096
        %1192 = vst.msk [vmem:[%s1189 + $0x8] sm:$0xf] %vm1060, %v1098
        %1193 = vst.msk [vmem:[%s1189 + $0xc] sm:$0xf] %vm1060, %v1100
        %1194 = vst.msk [vmem:[%s1189 + $0x10] sm:$0xf] %vm1060, %v1102
        %1195 = vst.msk [vmem:[%s1189 + $0x14] sm:$0xf] %vm1060, %v1104
        %1196 = vst.msk [vmem:[%s1189 + $0x18] sm:$0xf] %vm1060, %v1106
        %1197 = vst.msk [vmem:[%s1189 + $0x1c] sm:$0xf] %vm1060, %v1108
        %1198 = vst.msk [vmem:[%s1189 + $0x20] sm:$0xf] %vm1060, %v1110
        %1199 = vst.msk [vmem:[%s1189 + $0x24] sm:$0xf] %vm1060, %v1112
        %1200 = vst.msk [vmem:[%s1189 + $0x28] sm:$0xf] %vm1060, %v1114
        %1201 = vst.msk [vmem:[%s1189 + $0x2c] sm:$0xf] %vm1060, %v1116
        %1202 = vst.msk [vmem:[%s1189 + $0x30] sm:$0xf] %vm1060, %v1118
        %1203 = vst.msk [vmem:[%s1189 + $0x34] sm:$0xf] %vm1060, %v1120
        %1204 = vst.msk [vmem:[%s1189 + $0x38] sm:$0xf] %vm1060, %v1122
        %1205 = vst.msk [vmem:[%s1189 + $0x3c] sm:$0xf] %vm1060, %v1124
        %1206 = vst.msk [vmem:[%s1189 + $0x40] sm:$0xf] %vm1060, %v1126
        %1207 = vst.msk [vmem:[%s1189 + $0x44] sm:$0xf] %vm1060, %v1128
        %1208 = vst.msk [vmem:[%s1189 + $0x48] sm:$0xf] %vm1060, %v1130
        %1209 = vst.msk [vmem:[%s1189 + $0x4c] sm:$0xf] %vm1060, %v1132
        %1210 = vst.msk [vmem:[%s1189 + $0x50] sm:$0xf] %vm1060, %v1134
        %1211 = vst.msk [vmem:[%s1189 + $0x54] sm:$0xf] %vm1060, %v1136
        %1212 = vst.msk [vmem:[%s1189 + $0x58] sm:$0xf] %vm1060, %v1138
        %1213 = vst.msk [vmem:[%s1189 + $0x5c] sm:$0xf] %vm1060, %v1140
        %1214 = vst.msk [vmem:[%s1189 + $0x60] sm:$0xf] %vm1060, %v1142
        %1215 = vst.msk [vmem:[%s1189 + $0x64] sm:$0xf] %vm1060, %v1144
        %1216 = vst.msk [vmem:[%s1189 + $0x68] sm:$0xf] %vm1060, %v1146
        %1217 = vst.msk [vmem:[%s1189 + $0x6c] sm:$0xf] %vm1060, %v1148
        %1218 = vst.msk [vmem:[%s1189 + $0x70] sm:$0xf] %vm1060, %v1150
        %1219 = vst.msk [vmem:[%s1189 + $0x74] sm:$0xf] %vm1060, %v1152
        %1220 = vst.msk [vmem:[%s1189 + $0x78] sm:$0xf] %vm1060, %v1154
        %1221 = vst.msk [vmem:[%s1189 + $0x7c] sm:$0xf] %vm1060, %v1156
        %1222 = vrot.lane.b32.xlu0 %v996, 64
        %v1223 = vpop.permute.xlu0 %1222
        %1224 = vrot.lane.b32.xlu0 %v997, 64
        %v1225 = vpop.permute.xlu0 %1224
        %1226 = vrot.lane.b32.xlu0 %v998, 64
        %v1227 = vpop.permute.xlu0 %1226
        %1228 = vrot.lane.b32.xlu0 %v999, 64
        %v1229 = vpop.permute.xlu0 %1228
        %1230 = vrot.lane.b32.xlu0 %v1000, 64
        %v1231 = vpop.permute.xlu0 %1230
        %1232 = vrot.lane.b32.xlu0 %v1001, 64
        %v1233 = vpop.permute.xlu0 %1232
        %1234 = vrot.lane.b32.xlu0 %v1002, 64
        %v1235 = vpop.permute.xlu0 %1234
        %1236 = vrot.lane.b32.xlu0 %v1003, 64
        %v1237 = vpop.permute.xlu0 %1236
        %1238 = vrot.lane.b32.xlu0 %v1004, 64
        %v1239 = vpop.permute.xlu0 %1238
        %1240 = vrot.lane.b32.xlu0 %v1005, 64
        %v1241 = vpop.permute.xlu0 %1240
        %1242 = vrot.lane.b32.xlu0 %v1006, 64
        %v1243 = vpop.permute.xlu0 %1242
        %1244 = vrot.lane.b32.xlu0 %v1007, 64
        %v1245 = vpop.permute.xlu0 %1244
        %1246 = vrot.lane.b32.xlu0 %v1008, 64
        %v1247 = vpop.permute.xlu0 %1246
        %1248 = vrot.lane.b32.xlu0 %v1009, 64
        %v1249 = vpop.permute.xlu0 %1248
        %1250 = vrot.lane.b32.xlu0 %v1010, 64
        %v1251 = vpop.permute.xlu0 %1250
        %1252 = vrot.lane.b32.xlu0 %v1011, 64
        %v1253 = vpop.permute.xlu0 %1252
        %1254 = vrot.lane.b32.xlu0 %v1012, 64
        %v1255 = vpop.permute.xlu0 %1254
        %1256 = vrot.lane.b32.xlu0 %v1013, 64
        %v1257 = vpop.permute.xlu0 %1256
        %1258 = vrot.lane.b32.xlu0 %v1014, 64
        %v1259 = vpop.permute.xlu0 %1258
        %1260 = vrot.lane.b32.xlu0 %v1015, 64
        %v1261 = vpop.permute.xlu0 %1260
        %1262 = vrot.lane.b32.xlu0 %v1016, 64
        %v1263 = vpop.permute.xlu0 %1262
        %1264 = vrot.lane.b32.xlu0 %v1017, 64
        %v1265 = vpop.permute.xlu0 %1264
        %1266 = vrot.lane.b32.xlu0 %v1018, 64
        %v1267 = vpop.permute.xlu0 %1266
        %1268 = vrot.lane.b32.xlu0 %v1019, 64
        %v1269 = vpop.permute.xlu0 %1268
        %1270 = vrot.lane.b32.xlu0 %v1020, 64
        %v1271 = vpop.permute.xlu0 %1270
        %1272 = vrot.lane.b32.xlu0 %v1021, 64
        %v1273 = vpop.permute.xlu0 %1272
        %1274 = vrot.lane.b32.xlu0 %v1022, 64
        %v1275 = vpop.permute.xlu0 %1274
        %1276 = vrot.lane.b32.xlu0 %v1023, 64
        %v1277 = vpop.permute.xlu0 %1276
        %1278 = vrot.lane.b32.xlu0 %v1024, 64
        %v1279 = vpop.permute.xlu0 %1278
        %1280 = vrot.lane.b32.xlu0 %v1025, 64
        %v1281 = vpop.permute.xlu0 %1280
        %1282 = vrot.lane.b32.xlu0 %v1026, 64
        %v1283 = vpop.permute.xlu0 %1282
        %1284 = vrot.lane.b32.xlu0 %v1027, 64
        %v1285 = vpop.permute.xlu0 %1284
        %s1318 = scalar_lea.vmem %s552, 256 [#allocation12]
        %1319 = vst.msk [vmem:[%s1318] sm:$0xf] %vm1060, %v1223
        %1320 = vst.msk [vmem:[%s1318 + $0x4] sm:$0xf] %vm1060, %v1225
        %1321 = vst.msk [vmem:[%s1318 + $0x8] sm:$0xf] %vm1060, %v1227
        %1322 = vst.msk [vmem:[%s1318 + $0xc] sm:$0xf] %vm1060, %v1229
        %1323 = vst.msk [vmem:[%s1318 + $0x10] sm:$0xf] %vm1060, %v1231
        %1324 = vst.msk [vmem:[%s1318 + $0x14] sm:$0xf] %vm1060, %v1233
        %1325 = vst.msk [vmem:[%s1318 + $0x18] sm:$0xf] %vm1060, %v1235
        %1326 = vst.msk [vmem:[%s1318 + $0x1c] sm:$0xf] %vm1060, %v1237
        %1327 = vst.msk [vmem:[%s1318 + $0x20] sm:$0xf] %vm1060, %v1239
        %1328 = vst.msk [vmem:[%s1318 + $0x24] sm:$0xf] %vm1060, %v1241
        %1329 = vst.msk [vmem:[%s1318 + $0x28] sm:$0xf] %vm1060, %v1243
        %1330 = vst.msk [vmem:[%s1318 + $0x2c] sm:$0xf] %vm1060, %v1245
        %1331 = vst.msk [vmem:[%s1318 + $0x30] sm:$0xf] %vm1060, %v1247
        %1332 = vst.msk [vmem:[%s1318 + $0x34] sm:$0xf] %vm1060, %v1249
        %1333 = vst.msk [vmem:[%s1318 + $0x38] sm:$0xf] %vm1060, %v1251
        %1334 = vst.msk [vmem:[%s1318 + $0x3c] sm:$0xf] %vm1060, %v1253
        %1335 = vst.msk [vmem:[%s1318 + $0x40] sm:$0xf] %vm1060, %v1255
        %1336 = vst.msk [vmem:[%s1318 + $0x44] sm:$0xf] %vm1060, %v1257
        %1337 = vst.msk [vmem:[%s1318 + $0x48] sm:$0xf] %vm1060, %v1259
        %1338 = vst.msk [vmem:[%s1318 + $0x4c] sm:$0xf] %vm1060, %v1261
        %1339 = vst.msk [vmem:[%s1318 + $0x50] sm:$0xf] %vm1060, %v1263
        %1340 = vst.msk [vmem:[%s1318 + $0x54] sm:$0xf] %vm1060, %v1265
        %1341 = vst.msk [vmem:[%s1318 + $0x58] sm:$0xf] %vm1060, %v1267
        %1342 = vst.msk [vmem:[%s1318 + $0x5c] sm:$0xf] %vm1060, %v1269
        %1343 = vst.msk [vmem:[%s1318 + $0x60] sm:$0xf] %vm1060, %v1271
        %1344 = vst.msk [vmem:[%s1318 + $0x64] sm:$0xf] %vm1060, %v1273
        %1345 = vst.msk [vmem:[%s1318 + $0x68] sm:$0xf] %vm1060, %v1275
        %1346 = vst.msk [vmem:[%s1318 + $0x6c] sm:$0xf] %vm1060, %v1277
        %1347 = vst.msk [vmem:[%s1318 + $0x70] sm:$0xf] %vm1060, %v1279
        %1348 = vst.msk [vmem:[%s1318 + $0x74] sm:$0xf] %vm1060, %v1281
        %1349 = vst.msk [vmem:[%s1318 + $0x78] sm:$0xf] %vm1060, %v1283
        %1350 = vst.msk [vmem:[%s1318 + $0x7c] sm:$0xf] %vm1060, %v1285
        %1351 = vrot.lane.b32.xlu0 %v996, 32
        %v1352 = vpop.permute.xlu0 %1351
        %1353 = vrot.lane.b32.xlu0 %v997, 32
        %v1354 = vpop.permute.xlu0 %1353
        %1355 = vrot.lane.b32.xlu0 %v998, 32
        %v1356 = vpop.permute.xlu0 %1355
        %1357 = vrot.lane.b32.xlu0 %v999, 32
        %v1358 = vpop.permute.xlu0 %1357
        %1359 = vrot.lane.b32.xlu0 %v1000, 32
        %v1360 = vpop.permute.xlu0 %1359
        %1361 = vrot.lane.b32.xlu0 %v1001, 32
        %v1362 = vpop.permute.xlu0 %1361
        %1363 = vrot.lane.b32.xlu0 %v1002, 32
        %v1364 = vpop.permute.xlu0 %1363
        %1365 = vrot.lane.b32.xlu0 %v1003, 32
        %v1366 = vpop.permute.xlu0 %1365
        %1367 = vrot.lane.b32.xlu0 %v1004, 32
        %v1368 = vpop.permute.xlu0 %1367
        %1369 = vrot.lane.b32.xlu0 %v1005, 32
        %v1370 = vpop.permute.xlu0 %1369
        %1371 = vrot.lane.b32.xlu0 %v1006, 32
        %v1372 = vpop.permute.xlu0 %1371
        %1373 = vrot.lane.b32.xlu0 %v1007, 32
        %v1374 = vpop.permute.xlu0 %1373
        %1375 = vrot.lane.b32.xlu0 %v1008, 32
        %v1376 = vpop.permute.xlu0 %1375
        %1377 = vrot.lane.b32.xlu0 %v1009, 32
        %v1378 = vpop.permute.xlu0 %1377
        %1379 = vrot.lane.b32.xlu0 %v1010, 32
        %v1380 = vpop.permute.xlu0 %1379
        %1381 = vrot.lane.b32.xlu0 %v1011, 32
        %v1382 = vpop.permute.xlu0 %1381
        %1383 = vrot.lane.b32.xlu0 %v1012, 32
        %v1384 = vpop.permute.xlu0 %1383
        %1385 = vrot.lane.b32.xlu0 %v1013, 32
        %v1386 = vpop.permute.xlu0 %1385
        %1387 = vrot.lane.b32.xlu0 %v1014, 32
        %v1388 = vpop.permute.xlu0 %1387
        %1389 = vrot.lane.b32.xlu0 %v1015, 32
        %v1390 = vpop.permute.xlu0 %1389
        %1391 = vrot.lane.b32.xlu0 %v1016, 32
        %v1392 = vpop.permute.xlu0 %1391
        %1393 = vrot.lane.b32.xlu0 %v1017, 32
        %v1394 = vpop.permute.xlu0 %1393
        %1395 = vrot.lane.b32.xlu0 %v1018, 32
        %v1396 = vpop.permute.xlu0 %1395
        %1397 = vrot.lane.b32.xlu0 %v1019, 32
        %v1398 = vpop.permute.xlu0 %1397
        %1399 = vrot.lane.b32.xlu0 %v1020, 32
        %v1400 = vpop.permute.xlu0 %1399
        %1401 = vrot.lane.b32.xlu0 %v1021, 32
        %v1402 = vpop.permute.xlu0 %1401
        %1403 = vrot.lane.b32.xlu0 %v1022, 32
        %v1404 = vpop.permute.xlu0 %1403
        %1405 = vrot.lane.b32.xlu0 %v1023, 32
        %v1406 = vpop.permute.xlu0 %1405
        %1407 = vrot.lane.b32.xlu0 %v1024, 32
        %v1408 = vpop.permute.xlu0 %1407
        %1409 = vrot.lane.b32.xlu0 %v1025, 32
        %v1410 = vpop.permute.xlu0 %1409
        %1411 = vrot.lane.b32.xlu0 %v1026, 32
        %v1412 = vpop.permute.xlu0 %1411
        %1413 = vrot.lane.b32.xlu0 %v1027, 32
        %v1414 = vpop.permute.xlu0 %1413
        %s1447 = scalar_lea.vmem %s552, 384 [#allocation12]
        %1448 = vst.msk [vmem:[%s1447] sm:$0xf] %vm1060, %v1352
        %1449 = vst.msk [vmem:[%s1447 + $0x4] sm:$0xf] %vm1060, %v1354
        %1450 = vst.msk [vmem:[%s1447 + $0x8] sm:$0xf] %vm1060, %v1356
        %1451 = vst.msk [vmem:[%s1447 + $0xc] sm:$0xf] %vm1060, %v1358
        %1452 = vst.msk [vmem:[%s1447 + $0x10] sm:$0xf] %vm1060, %v1360
        %1453 = vst.msk [vmem:[%s1447 + $0x14] sm:$0xf] %vm1060, %v1362
        %1454 = vst.msk [vmem:[%s1447 + $0x18] sm:$0xf] %vm1060, %v1364
        %1455 = vst.msk [vmem:[%s1447 + $0x1c] sm:$0xf] %vm1060, %v1366
        %1456 = vst.msk [vmem:[%s1447 + $0x20] sm:$0xf] %vm1060, %v1368
        %1457 = vst.msk [vmem:[%s1447 + $0x24] sm:$0xf] %vm1060, %v1370
        %1458 = vst.msk [vmem:[%s1447 + $0x28] sm:$0xf] %vm1060, %v1372
        %1459 = vst.msk [vmem:[%s1447 + $0x2c] sm:$0xf] %vm1060, %v1374
        %1460 = vst.msk [vmem:[%s1447 + $0x30] sm:$0xf] %vm1060, %v1376
        %1461 = vst.msk [vmem:[%s1447 + $0x34] sm:$0xf] %vm1060, %v1378
        %1462 = vst.msk [vmem:[%s1447 + $0x38] sm:$0xf] %vm1060, %v1380
        %1463 = vst.msk [vmem:[%s1447 + $0x3c] sm:$0xf] %vm1060, %v1382
        %1464 = vst.msk [vmem:[%s1447 + $0x40] sm:$0xf] %vm1060, %v1384
        %1465 = vst.msk [vmem:[%s1447 + $0x44] sm:$0xf] %vm1060, %v1386
        %1466 = vst.msk [vmem:[%s1447 + $0x48] sm:$0xf] %vm1060, %v1388
        %1467 = vst.msk [vmem:[%s1447 + $0x4c] sm:$0xf] %vm1060, %v1390
        %1468 = vst.msk [vmem:[%s1447 + $0x50] sm:$0xf] %vm1060, %v1392
        %1469 = vst.msk [vmem:[%s1447 + $0x54] sm:$0xf] %vm1060, %v1394
        %1470 = vst.msk [vmem:[%s1447 + $0x58] sm:$0xf] %vm1060, %v1396
        %1471 = vst.msk [vmem:[%s1447 + $0x5c] sm:$0xf] %vm1060, %v1398
        %1472 = vst.msk [vmem:[%s1447 + $0x60] sm:$0xf] %vm1060, %v1400
        %1473 = vst.msk [vmem:[%s1447 + $0x64] sm:$0xf] %vm1060, %v1402
        %1474 = vst.msk [vmem:[%s1447 + $0x68] sm:$0xf] %vm1060, %v1404
        %1475 = vst.msk [vmem:[%s1447 + $0x6c] sm:$0xf] %vm1060, %v1406
        %1476 = vst.msk [vmem:[%s1447 + $0x70] sm:$0xf] %vm1060, %v1408
        %1477 = vst.msk [vmem:[%s1447 + $0x74] sm:$0xf] %vm1060, %v1410
        %1478 = vst.msk [vmem:[%s1447 + $0x78] sm:$0xf] %vm1060, %v1412
        %1479 = vst.msk [vmem:[%s1447 + $0x7c] sm:$0xf] %vm1060, %v1414
        %v1480 = vld [vmem:[%s488] sm:$0xf]
        %v1481 = vld [vmem:[%s488 + $0x4] sm:$0xf]
        %v1482 = vld [vmem:[%s488 + $0x8] sm:$0xf]
        %v1483 = vld [vmem:[%s488 + $0xc] sm:$0xf]
        %v1484 = vld [vmem:[%s488 + $0x10] sm:$0xf]
        %v1485 = vld [vmem:[%s488 + $0x14] sm:$0xf]
        %v1486 = vld [vmem:[%s488 + $0x18] sm:$0xf]
        %v1487 = vld [vmem:[%s488 + $0x1c] sm:$0xf]
        %v1488 = vld [vmem:[%s488 + $0x20] sm:$0xf]
        %v1489 = vld [vmem:[%s488 + $0x24] sm:$0xf]
        %v1490 = vld [vmem:[%s488 + $0x28] sm:$0xf]
        %v1491 = vld [vmem:[%s488 + $0x2c] sm:$0xf]
        %v1492 = vld [vmem:[%s488 + $0x30] sm:$0xf]
        %v1493 = vld [vmem:[%s488 + $0x34] sm:$0xf]
        %v1494 = vld [vmem:[%s488 + $0x38] sm:$0xf]
        %v1495 = vld [vmem:[%s488 + $0x3c] sm:$0xf]
        %v1496 = vld [vmem:[%s488 + $0x40] sm:$0xf]
        %v1497 = vld [vmem:[%s488 + $0x44] sm:$0xf]
        %v1498 = vld [vmem:[%s488 + $0x48] sm:$0xf]
        %v1499 = vld [vmem:[%s488 + $0x4c] sm:$0xf]
        %v1500 = vld [vmem:[%s488 + $0x50] sm:$0xf]
        %v1501 = vld [vmem:[%s488 + $0x54] sm:$0xf]
        %v1502 = vld [vmem:[%s488 + $0x58] sm:$0xf]
        %v1503 = vld [vmem:[%s488 + $0x5c] sm:$0xf]
        %v1504 = vld [vmem:[%s488 + $0x60] sm:$0xf]
        %v1505 = vld [vmem:[%s488 + $0x64] sm:$0xf]
        %v1506 = vld [vmem:[%s488 + $0x68] sm:$0xf]
        %v1507 = vld [vmem:[%s488 + $0x6c] sm:$0xf]
        %v1508 = vld [vmem:[%s488 + $0x70] sm:$0xf]
        %v1509 = vld [vmem:[%s488 + $0x74] sm:$0xf]
        %v1510 = vld [vmem:[%s488 + $0x78] sm:$0xf]
        %v1511 = vld [vmem:[%s488 + $0x7c] sm:$0xf]
        %v1512 = vld [vmem:[#allocation9] sm:$0xf]
        %v1513 = vld [vmem:[#allocation9 + $0x4] sm:$0xf]
        %v1514 = vld [vmem:[#allocation9 + $0x8] sm:$0xf]
        %v1515 = vld [vmem:[#allocation9 + $0xc] sm:$0xf]
        %v1516 = vld [vmem:[#allocation9 + $0x10] sm:$0xf]
        %v1517 = vld [vmem:[#allocation9 + $0x14] sm:$0xf]
        %v1518 = vld [vmem:[#allocation9 + $0x18] sm:$0xf]
        %v1519 = vld [vmem:[#allocation9 + $0x1c] sm:$0xf]
        %v1520 = vld [vmem:[#allocation9 + $0x20] sm:$0xf]
        %v1521 = vld [vmem:[#allocation9 + $0x24] sm:$0xf]
        %v1522 = vld [vmem:[#allocation9 + $0x28] sm:$0xf]
        %v1523 = vld [vmem:[#allocation9 + $0x2c] sm:$0xf]
        %v1524 = vld [vmem:[#allocation9 + $0x30] sm:$0xf]
        %v1525 = vld [vmem:[#allocation9 + $0x34] sm:$0xf]
        %v1526 = vld [vmem:[#allocation9 + $0x38] sm:$0xf]
        %v1527 = vld [vmem:[#allocation9 + $0x3c] sm:$0xf]
        %v1528 = vld [vmem:[%s6] sm:$0x1]
        %v1530 = vlaneseq
        %v1531 = vshrl.u32 %v1530, 7
        %v1532 = vsub.s32 0, %v1531
        %v1533 = vrot.slane %v1528, %v1532
        %v1567 = vunpack.c.l.b16 %v1480
        %v1568 = vunpack.c.l.b16 %v1481
        %v1569 = vunpack.c.l.b16 %v1482
        %v1570 = vunpack.c.l.b16 %v1483
        %v1571 = vunpack.c.l.b16 %v1484
        %v1572 = vunpack.c.l.b16 %v1485
        %v1573 = vunpack.c.l.b16 %v1486
        %v1574 = vunpack.c.l.b16 %v1487
        %v1575 = vunpack.c.l.b16 %v1488
        %v1576 = vunpack.c.l.b16 %v1489
        %v1577 = vunpack.c.l.b16 %v1490
        %v1578 = vunpack.c.l.b16 %v1491
        %v1579 = vunpack.c.l.b16 %v1492
        %v1580 = vunpack.c.l.b16 %v1493
        %v1581 = vunpack.c.l.b16 %v1494
        %v1582 = vunpack.c.l.b16 %v1495
        %v1583 = vunpack.c.l.b16 %v1496
        %v1584 = vunpack.c.l.b16 %v1497
        %v1585 = vunpack.c.l.b16 %v1498
        %v1586 = vunpack.c.l.b16 %v1499
        %v1587 = vunpack.c.l.b16 %v1500
        %v1588 = vunpack.c.l.b16 %v1501
        %v1589 = vunpack.c.l.b16 %v1502
        %v1590 = vunpack.c.l.b16 %v1503
        %v1591 = vunpack.c.l.b16 %v1504
        %v1592 = vunpack.c.l.b16 %v1505
        %v1593 = vunpack.c.l.b16 %v1506
        %v1594 = vunpack.c.l.b16 %v1507
        %v1595 = vunpack.c.l.b16 %v1508
        %v1596 = vunpack.c.l.b16 %v1509
        %v1597 = vunpack.c.l.b16 %v1510
        %v1598 = vunpack.c.l.b16 %v1511
        %v1599 = vpack.c.b16 %v1568, %v1567
        %v1600 = vpack.c.b16 %v1570, %v1569
        %v1601 = vpack.c.b16 %v1572, %v1571
        %v1602 = vpack.c.b16 %v1574, %v1573
        %v1603 = vpack.c.b16 %v1576, %v1575
        %v1604 = vpack.c.b16 %v1578, %v1577
        %v1605 = vpack.c.b16 %v1580, %v1579
        %v1606 = vpack.c.b16 %v1582, %v1581
        %v1607 = vpack.c.b16 %v1584, %v1583
        %v1608 = vpack.c.b16 %v1586, %v1585
        %v1609 = vpack.c.b16 %v1588, %v1587
        %v1610 = vpack.c.b16 %v1590, %v1589
        %v1611 = vpack.c.b16 %v1592, %v1591
        %v1612 = vpack.c.b16 %v1594, %v1593
        %v1613 = vpack.c.b16 %v1596, %v1595
        %v1614 = vpack.c.b16 %v1598, %v1597
        %v1647 = vunpack.c.l.b16 %v1512
        %v1648 = vunpack.c.l.b16 %v1513
        %v1649 = vunpack.c.l.b16 %v1514
        %v1650 = vunpack.c.l.b16 %v1515
        %v1651 = vunpack.c.l.b16 %v1516
        %v1652 = vunpack.c.l.b16 %v1517
        %v1653 = vunpack.c.l.b16 %v1518
        %v1654 = vunpack.c.l.b16 %v1519
        %v1655 = vunpack.c.l.b16 %v1520
        %v1656 = vunpack.c.l.b16 %v1521
        %v1657 = vunpack.c.l.b16 %v1522
        %v1658 = vunpack.c.l.b16 %v1523
        %v1659 = vunpack.c.l.b16 %v1524
        %v1660 = vunpack.c.l.b16 %v1525
        %v1661 = vunpack.c.l.b16 %v1526
        %v1662 = vunpack.c.l.b16 %v1527
        %v1663 = vpack.c.b16 %v1648, %v1647
        %v1664 = vpack.c.b16 %v1650, %v1649
        %v1665 = vpack.c.b16 %v1652, %v1651
        %v1666 = vpack.c.b16 %v1654, %v1653
        %v1667 = vpack.c.b16 %v1656, %v1655
        %v1668 = vpack.c.b16 %v1658, %v1657
        %v1669 = vpack.c.b16 %v1660, %v1659
        %v1670 = vpack.c.b16 %v1662, %v1661
        %1679 = vmatprep.subr.bf16.mxu0 0
        %1680 = vmatpush1.bf16.msra.mxu0 %v1670
        %1681 = vmatprep.subr.bf16.mxu0 0
        %1682 = vmatpush1.bf16.msra.mxu0 %v1669
        %1683 = vmatprep.subr.bf16.mxu0 0
        %1684 = vmatpush1.bf16.msra.mxu0 %v1668
        %1685 = vmatprep.subr.bf16.mxu0 0
        %1686 = vmatpush1.bf16.msra.mxu0 %v1667
        %1687 = vmatprep.subr.bf16.mxu0 0
        %1688 = vmatpush1.bf16.msra.mxu0 %v1666
        %1689 = vmatprep.subr.bf16.mxu0 0
        %1690 = vmatpush1.bf16.msra.mxu0 %v1665
        %1691 = vmatprep.subr.bf16.mxu0 0
        %1692 = vmatpush1.bf16.msra.mxu0 %v1664
        %1693 = vmatprep.subr.bf16.mxu0 0
        %1694 = vmatpush1.bf16.msra.mxu0 %v1663
        %1695 = vmatprep.subr.bf16.mxu0 0
        %1696 = vmatpush2.bf16.msra.mxu0 0
        %1697 = vmatprep.subr.bf16.mxu0 0
        %1698 = vmatpush2.bf16.msra.mxu0 0
        %1699 = vmatprep.subr.bf16.mxu0 0
        %1700 = vmatpush2.bf16.msra.mxu0 0
        %1701 = vmatprep.subr.bf16.mxu0 0
        %1702 = vmatpush2.bf16.msra.mxu0 0
        %1703 = vmatprep.subr.bf16.mxu0 0
        %1704 = vmatpush2.bf16.msra.mxu0 0
        %1705 = vmatprep.subr.bf16.mxu0 0
        %1706 = vmatpush2.bf16.msra.mxu0 0
        %1707 = vmatprep.subr.bf16.mxu0 0
        %1708 = vmatpush2.bf16.msra.mxu0 0
        %1709 = vmatprep.subr.bf16.mxu0 0
        %1710 = vmatpush2.bf16.msra.mxu0 0
        %1711 = vmatprep.mubr.bf16.mxu0 0
        %1712 = vmatmul.mubr.bf16.gmra.mxu0 %v1599
        %v1713 = vpop.f32.mrf.mxu0
        %v1714 = vadd.f32 %v1533, %v1713
        %v1715 = vpop.f32.mrf.mxu0
        %v1716 = vpop.f32.mrf.mxu0
        %v1717 = vadd.f32 %v1533, %v1716
        %v1718 = vpop.f32.mrf.mxu0
        %1719 = vmatprep.mubr.bf16.mxu0 0
        %1720 = vmatmul.mubr.bf16.gmra.mxu0 %v1600
        %v1721 = vpop.f32.mrf.mxu0
        %v1722 = vadd.f32 %v1533, %v1721
        %v1723 = vpop.f32.mrf.mxu0
        %v1724 = vpop.f32.mrf.mxu0
        %v1725 = vadd.f32 %v1533, %v1724
        %v1726 = vpop.f32.mrf.mxu0
        %1727 = vmatprep.mubr.bf16.mxu0 0
        %1728 = vmatmul.mubr.bf16.gmra.mxu0 %v1601
        %v1729 = vpop.f32.mrf.mxu0
        %v1730 = vadd.f32 %v1533, %v1729
        %v1731 = vpop.f32.mrf.mxu0
        %v1732 = vpop.f32.mrf.mxu0
        %v1733 = vadd.f32 %v1533, %v1732
        %v1734 = vpop.f32.mrf.mxu0
        %1735 = vmatprep.mubr.bf16.mxu0 0
        %1736 = vmatmul.mubr.bf16.gmra.mxu0 %v1602
        %v1737 = vpop.f32.mrf.mxu0
        %v1738 = vadd.f32 %v1533, %v1737
        %v1739 = vpop.f32.mrf.mxu0
        %v1740 = vpop.f32.mrf.mxu0
        %v1741 = vadd.f32 %v1533, %v1740
        %v1742 = vpop.f32.mrf.mxu0
        %1743 = vmatprep.mubr.bf16.mxu0 0
        %1744 = vmatmul.mubr.bf16.gmra.mxu0 %v1603
        %v1745 = vpop.f32.mrf.mxu0
        %v1746 = vadd.f32 %v1533, %v1745
        %v1747 = vpop.f32.mrf.mxu0
        %v1748 = vpop.f32.mrf.mxu0
        %v1749 = vadd.f32 %v1533, %v1748
        %v1750 = vpop.f32.mrf.mxu0
        %1751 = vmatprep.mubr.bf16.mxu0 0
        %1752 = vmatmul.mubr.bf16.gmra.mxu0 %v1604
        %v1753 = vpop.f32.mrf.mxu0
        %v1754 = vadd.f32 %v1533, %v1753
        %v1755 = vpop.f32.mrf.mxu0
        %v1756 = vpop.f32.mrf.mxu0
        %v1757 = vadd.f32 %v1533, %v1756
        %v1758 = vpop.f32.mrf.mxu0
        %1759 = vmatprep.mubr.bf16.mxu0 0
        %1760 = vmatmul.mubr.bf16.gmra.mxu0 %v1605
        %v1761 = vpop.f32.mrf.mxu0
        %v1762 = vadd.f32 %v1533, %v1761
        %v1763 = vpop.f32.mrf.mxu0
        %v1764 = vpop.f32.mrf.mxu0
        %v1765 = vadd.f32 %v1533, %v1764
        %v1766 = vpop.f32.mrf.mxu0
        %1767 = vmatprep.mubr.bf16.mxu0 0
        %1768 = vmatmul.mubr.bf16.gmra.mxu0 %v1606
        %v1769 = vpop.f32.mrf.mxu0
        %v1770 = vadd.f32 %v1533, %v1769
        %v1771 = vpop.f32.mrf.mxu0
        %v1772 = vpop.f32.mrf.mxu0
        %v1773 = vadd.f32 %v1533, %v1772
        %v1774 = vpop.f32.mrf.mxu0
        %1775 = vmatprep.mubr.bf16.mxu0 0
        %1776 = vmatmul.mubr.bf16.gmra.mxu0 %v1607
        %v1777 = vpop.f32.mrf.mxu0
        %v1778 = vadd.f32 %v1533, %v1777
        %v1779 = vpop.f32.mrf.mxu0
        %v1780 = vpop.f32.mrf.mxu0
        %v1781 = vadd.f32 %v1533, %v1780
        %v1782 = vpop.f32.mrf.mxu0
        %1783 = vmatprep.mubr.bf16.mxu0 0
        %1784 = vmatmul.mubr.bf16.gmra.mxu0 %v1608
        %v1785 = vpop.f32.mrf.mxu0
        %v1786 = vadd.f32 %v1533, %v1785
        %v1787 = vpop.f32.mrf.mxu0
        %v1788 = vpop.f32.mrf.mxu0
        %v1789 = vadd.f32 %v1533, %v1788
        %v1790 = vpop.f32.mrf.mxu0
        %1791 = vmatprep.mubr.bf16.mxu0 0
        %1792 = vmatmul.mubr.bf16.gmra.mxu0 %v1609
        %v1793 = vpop.f32.mrf.mxu0
        %v1794 = vadd.f32 %v1533, %v1793
        %v1795 = vpop.f32.mrf.mxu0
        %v1796 = vpop.f32.mrf.mxu0
        %v1797 = vadd.f32 %v1533, %v1796
        %v1798 = vpop.f32.mrf.mxu0
        %1799 = vmatprep.mubr.bf16.mxu0 0
        %1800 = vmatmul.mubr.bf16.gmra.mxu0 %v1610
        %v1801 = vpop.f32.mrf.mxu0
        %v1802 = vadd.f32 %v1533, %v1801
        %v1803 = vpop.f32.mrf.mxu0
        %v1804 = vpop.f32.mrf.mxu0
        %v1805 = vadd.f32 %v1533, %v1804
        %v1806 = vpop.f32.mrf.mxu0
        %1807 = vmatprep.mubr.bf16.mxu0 0
        %1808 = vmatmul.mubr.bf16.gmra.mxu0 %v1611
        %v1809 = vpop.f32.mrf.mxu0
        %v1810 = vadd.f32 %v1533, %v1809
        %v1811 = vpop.f32.mrf.mxu0
        %v1812 = vpop.f32.mrf.mxu0
        %v1813 = vadd.f32 %v1533, %v1812
        %v1814 = vpop.f32.mrf.mxu0
        %1815 = vmatprep.mubr.bf16.mxu0 0
        %1816 = vmatmul.mubr.bf16.gmra.mxu0 %v1612
        %v1817 = vpop.f32.mrf.mxu0
        %v1818 = vadd.f32 %v1533, %v1817
        %v1819 = vpop.f32.mrf.mxu0
        %v1820 = vpop.f32.mrf.mxu0
        %v1821 = vadd.f32 %v1533, %v1820
        %v1822 = vpop.f32.mrf.mxu0
        %1823 = vmatprep.mubr.bf16.mxu0 0
        %1824 = vmatmul.mubr.bf16.gmra.mxu0 %v1613
        %v1825 = vpop.f32.mrf.mxu0
        %v1826 = vadd.f32 %v1533, %v1825
        %v1827 = vpop.f32.mrf.mxu0
        %v1828 = vpop.f32.mrf.mxu0
        %v1829 = vadd.f32 %v1533, %v1828
        %v1830 = vpop.f32.mrf.mxu0
        %1831 = vmatprep.mubr.bf16.mxu0 0
        %1832 = vmatmul.mubr.bf16.gmra.mxu0 %v1614
        %v1833 = vpop.f32.mrf.mxu0
        %v1834 = vadd.f32 %v1533, %v1833
        %v1835 = vpop.f32.mrf.mxu0
        %v1836 = vpop.f32.mrf.mxu0
        %v1837 = vadd.f32 %v1533, %v1836
        %v1838 = vpop.f32.mrf.mxu0
        %1839 = vdwg.mxu0
        %v1840 = vpack.c.bf16 %v1717, %v1714
        %v1841 = vpack.c.bf16 %v1725, %v1722
        %v1842 = vpack.c.bf16 %v1733, %v1730
        %v1843 = vpack.c.bf16 %v1741, %v1738
        %v1844 = vpack.c.bf16 %v1749, %v1746
        %v1845 = vpack.c.bf16 %v1757, %v1754
        %v1846 = vpack.c.bf16 %v1765, %v1762
        %v1847 = vpack.c.bf16 %v1773, %v1770
        %v1848 = vpack.c.bf16 %v1781, %v1778
        %v1849 = vpack.c.bf16 %v1789, %v1786
        %v1850 = vpack.c.bf16 %v1797, %v1794
        %v1851 = vpack.c.bf16 %v1805, %v1802
        %v1852 = vpack.c.bf16 %v1813, %v1810
        %v1853 = vpack.c.bf16 %v1821, %v1818
        %v1854 = vpack.c.bf16 %v1829, %v1826
        %v1855 = vpack.c.bf16 %v1837, %v1834
        %v1872 = vunpack.c.l.b16 %v1840
        %v1873 = vunpack.c.h.b16 %v1840
        %v1874 = vunpack.c.l.b16 %v1841
        %v1875 = vunpack.c.h.b16 %v1841
        %v1876 = vunpack.c.l.b16 %v1842
        %v1877 = vunpack.c.h.b16 %v1842
        %v1878 = vunpack.c.l.b16 %v1843
        %v1879 = vunpack.c.h.b16 %v1843
        %v1880 = vunpack.c.l.b16 %v1844
        %v1881 = vunpack.c.h.b16 %v1844
        %v1882 = vunpack.c.l.b16 %v1845
        %v1883 = vunpack.c.h.b16 %v1845
        %v1884 = vunpack.c.l.b16 %v1846
        %v1885 = vunpack.c.h.b16 %v1846
        %v1886 = vunpack.c.l.b16 %v1847
        %v1887 = vunpack.c.h.b16 %v1847
        %v1888 = vunpack.c.l.b16 %v1848
        %v1889 = vunpack.c.h.b16 %v1848
        %v1890 = vunpack.c.l.b16 %v1849
        %v1891 = vunpack.c.h.b16 %v1849
        %v1892 = vunpack.c.l.b16 %v1850
        %v1893 = vunpack.c.h.b16 %v1850
        %v1894 = vunpack.c.l.b16 %v1851
        %v1895 = vunpack.c.h.b16 %v1851
        %v1896 = vunpack.c.l.b16 %v1852
        %v1897 = vunpack.c.h.b16 %v1852
        %v1898 = vunpack.c.l.b16 %v1853
        %v1899 = vunpack.c.h.b16 %v1853
        %v1900 = vunpack.c.l.b16 %v1854
        %v1901 = vunpack.c.h.b16 %v1854
        %v1902 = vunpack.c.l.b16 %v1855
        %v1903 = vunpack.c.h.b16 %v1855
        %v1904 = vpack.c.b16 %v1872, %v1872
        %v1905 = vpack.c.b16 %v1873, %v1873
        %v1906 = vpack.c.b16 %v1874, %v1874
        %v1907 = vpack.c.b16 %v1875, %v1875
        %v1908 = vpack.c.b16 %v1876, %v1876
        %v1909 = vpack.c.b16 %v1877, %v1877
        %v1910 = vpack.c.b16 %v1878, %v1878
        %v1911 = vpack.c.b16 %v1879, %v1879
        %v1912 = vpack.c.b16 %v1880, %v1880
        %v1913 = vpack.c.b16 %v1881, %v1881
        %v1914 = vpack.c.b16 %v1882, %v1882
        %v1915 = vpack.c.b16 %v1883, %v1883
        %v1916 = vpack.c.b16 %v1884, %v1884
        %v1917 = vpack.c.b16 %v1885, %v1885
        %v1918 = vpack.c.b16 %v1886, %v1886
        %v1919 = vpack.c.b16 %v1887, %v1887
        %v1920 = vpack.c.b16 %v1888, %v1888
        %v1921 = vpack.c.b16 %v1889, %v1889
        %v1922 = vpack.c.b16 %v1890, %v1890
        %v1923 = vpack.c.b16 %v1891, %v1891
        %v1924 = vpack.c.b16 %v1892, %v1892
        %v1925 = vpack.c.b16 %v1893, %v1893
        %v1926 = vpack.c.b16 %v1894, %v1894
        %v1927 = vpack.c.b16 %v1895, %v1895
        %v1928 = vpack.c.b16 %v1896, %v1896
        %v1929 = vpack.c.b16 %v1897, %v1897
        %v1930 = vpack.c.b16 %v1898, %v1898
        %v1931 = vpack.c.b16 %v1899, %v1899
        %v1932 = vpack.c.b16 %v1900, %v1900
        %v1933 = vpack.c.b16 %v1901, %v1901
        %v1934 = vpack.c.b16 %v1902, %v1902
        %v1935 = vpack.c.b16 %v1903, %v1903
        %1968 = vst.msk [vmem:[%s558] sm:$0xf] %vm1060, %v1904
        %1969 = vst.msk [vmem:[%s558 + $0x4] sm:$0xf] %vm1060, %v1905
        %1970 = vst.msk [vmem:[%s558 + $0x8] sm:$0xf] %vm1060, %v1906
        %1971 = vst.msk [vmem:[%s558 + $0xc] sm:$0xf] %vm1060, %v1907
        %1972 = vst.msk [vmem:[%s558 + $0x10] sm:$0xf] %vm1060, %v1908
        %1973 = vst.msk [vmem:[%s558 + $0x14] sm:$0xf] %vm1060, %v1909
        %1974 = vst.msk [vmem:[%s558 + $0x18] sm:$0xf] %vm1060, %v1910
        %1975 = vst.msk [vmem:[%s558 + $0x1c] sm:$0xf] %vm1060, %v1911
        %1976 = vst.msk [vmem:[%s558 + $0x20] sm:$0xf] %vm1060, %v1912
        %1977 = vst.msk [vmem:[%s558 + $0x24] sm:$0xf] %vm1060, %v1913
        %1978 = vst.msk [vmem:[%s558 + $0x28] sm:$0xf] %vm1060, %v1914
        %1979 = vst.msk [vmem:[%s558 + $0x2c] sm:$0xf] %vm1060, %v1915
        %1980 = vst.msk [vmem:[%s558 + $0x30] sm:$0xf] %vm1060, %v1916
        %1981 = vst.msk [vmem:[%s558 + $0x34] sm:$0xf] %vm1060, %v1917
        %1982 = vst.msk [vmem:[%s558 + $0x38] sm:$0xf] %vm1060, %v1918
        %1983 = vst.msk [vmem:[%s558 + $0x3c] sm:$0xf] %vm1060, %v1919
        %1984 = vst.msk [vmem:[%s558 + $0x40] sm:$0xf] %vm1060, %v1920
        %1985 = vst.msk [vmem:[%s558 + $0x44] sm:$0xf] %vm1060, %v1921
        %1986 = vst.msk [vmem:[%s558 + $0x48] sm:$0xf] %vm1060, %v1922
        %1987 = vst.msk [vmem:[%s558 + $0x4c] sm:$0xf] %vm1060, %v1923
        %1988 = vst.msk [vmem:[%s558 + $0x50] sm:$0xf] %vm1060, %v1924
        %1989 = vst.msk [vmem:[%s558 + $0x54] sm:$0xf] %vm1060, %v1925
        %1990 = vst.msk [vmem:[%s558 + $0x58] sm:$0xf] %vm1060, %v1926
        %1991 = vst.msk [vmem:[%s558 + $0x5c] sm:$0xf] %vm1060, %v1927
        %1992 = vst.msk [vmem:[%s558 + $0x60] sm:$0xf] %vm1060, %v1928
        %1993 = vst.msk [vmem:[%s558 + $0x64] sm:$0xf] %vm1060, %v1929
        %1994 = vst.msk [vmem:[%s558 + $0x68] sm:$0xf] %vm1060, %v1930
        %1995 = vst.msk [vmem:[%s558 + $0x6c] sm:$0xf] %vm1060, %v1931
        %1996 = vst.msk [vmem:[%s558 + $0x70] sm:$0xf] %vm1060, %v1932
        %1997 = vst.msk [vmem:[%s558 + $0x74] sm:$0xf] %vm1060, %v1933
        %1998 = vst.msk [vmem:[%s558 + $0x78] sm:$0xf] %vm1060, %v1934
        %1999 = vst.msk [vmem:[%s558 + $0x7c] sm:$0xf] %vm1060, %v1935
        %2000 = vrot.lane.b32.xlu0 %v1904, 96
        %v2001 = vpop.permute.xlu0 %2000
        %2002 = vrot.lane.b32.xlu0 %v1905, 96
        %v2003 = vpop.permute.xlu0 %2002
        %2004 = vrot.lane.b32.xlu0 %v1906, 96
        %v2005 = vpop.permute.xlu0 %2004
        %2006 = vrot.lane.b32.xlu0 %v1907, 96
        %v2007 = vpop.permute.xlu0 %2006
        %2008 = vrot.lane.b32.xlu0 %v1908, 96
        %v2009 = vpop.permute.xlu0 %2008
        %2010 = vrot.lane.b32.xlu0 %v1909, 96
        %v2011 = vpop.permute.xlu0 %2010
        %2012 = vrot.lane.b32.xlu0 %v1910, 96
        %v2013 = vpop.permute.xlu0 %2012
        %2014 = vrot.lane.b32.xlu0 %v1911, 96
        %v2015 = vpop.permute.xlu0 %2014
        %2016 = vrot.lane.b32.xlu0 %v1912, 96
        %v2017 = vpop.permute.xlu0 %2016
        %2018 = vrot.lane.b32.xlu0 %v1913, 96
        %v2019 = vpop.permute.xlu0 %2018
        %2020 = vrot.lane.b32.xlu0 %v1914, 96
        %v2021 = vpop.permute.xlu0 %2020
        %2022 = vrot.lane.b32.xlu0 %v1915, 96
        %v2023 = vpop.permute.xlu0 %2022
        %2024 = vrot.lane.b32.xlu0 %v1916, 96
        %v2025 = vpop.permute.xlu0 %2024
        %2026 = vrot.lane.b32.xlu0 %v1917, 96
        %v2027 = vpop.permute.xlu0 %2026
        %2028 = vrot.lane.b32.xlu0 %v1918, 96
        %v2029 = vpop.permute.xlu0 %2028
        %2030 = vrot.lane.b32.xlu0 %v1919, 96
        %v2031 = vpop.permute.xlu0 %2030
        %2032 = vrot.lane.b32.xlu0 %v1920, 96
        %v2033 = vpop.permute.xlu0 %2032
        %2034 = vrot.lane.b32.xlu0 %v1921, 96
        %v2035 = vpop.permute.xlu0 %2034
        %2036 = vrot.lane.b32.xlu0 %v1922, 96
        %v2037 = vpop.permute.xlu0 %2036
        %2038 = vrot.lane.b32.xlu0 %v1923, 96
        %v2039 = vpop.permute.xlu0 %2038
        %2040 = vrot.lane.b32.xlu0 %v1924, 96
        %v2041 = vpop.permute.xlu0 %2040
        %2042 = vrot.lane.b32.xlu0 %v1925, 96
        %v2043 = vpop.permute.xlu0 %2042
        %2044 = vrot.lane.b32.xlu0 %v1926, 96
        %v2045 = vpop.permute.xlu0 %2044
        %2046 = vrot.lane.b32.xlu0 %v1927, 96
        %v2047 = vpop.permute.xlu0 %2046
        %2048 = vrot.lane.b32.xlu0 %v1928, 96
        %v2049 = vpop.permute.xlu0 %2048
        %2050 = vrot.lane.b32.xlu0 %v1929, 96
        %v2051 = vpop.permute.xlu0 %2050
        %2052 = vrot.lane.b32.xlu0 %v1930, 96
        %v2053 = vpop.permute.xlu0 %2052
        %2054 = vrot.lane.b32.xlu0 %v1931, 96
        %v2055 = vpop.permute.xlu0 %2054
        %2056 = vrot.lane.b32.xlu0 %v1932, 96
        %v2057 = vpop.permute.xlu0 %2056
        %2058 = vrot.lane.b32.xlu0 %v1933, 96
        %v2059 = vpop.permute.xlu0 %2058
        %2060 = vrot.lane.b32.xlu0 %v1934, 96
        %v2061 = vpop.permute.xlu0 %2060
        %2062 = vrot.lane.b32.xlu0 %v1935, 96
        %v2063 = vpop.permute.xlu0 %2062
        %s2096 = scalar_lea.vmem %s558, 128 [#allocation13]
        %2097 = vst.msk [vmem:[%s2096] sm:$0xf] %vm1060, %v2001
        %2098 = vst.msk [vmem:[%s2096 + $0x4] sm:$0xf] %vm1060, %v2003
        %2099 = vst.msk [vmem:[%s2096 + $0x8] sm:$0xf] %vm1060, %v2005
        %2100 = vst.msk [vmem:[%s2096 + $0xc] sm:$0xf] %vm1060, %v2007
        %2101 = vst.msk [vmem:[%s2096 + $0x10] sm:$0xf] %vm1060, %v2009
        %2102 = vst.msk [vmem:[%s2096 + $0x14] sm:$0xf] %vm1060, %v2011
        %2103 = vst.msk [vmem:[%s2096 + $0x18] sm:$0xf] %vm1060, %v2013
        %2104 = vst.msk [vmem:[%s2096 + $0x1c] sm:$0xf] %vm1060, %v2015
        %2105 = vst.msk [vmem:[%s2096 + $0x20] sm:$0xf] %vm1060, %v2017
        %2106 = vst.msk [vmem:[%s2096 + $0x24] sm:$0xf] %vm1060, %v2019
        %2107 = vst.msk [vmem:[%s2096 + $0x28] sm:$0xf] %vm1060, %v2021
        %2108 = vst.msk [vmem:[%s2096 + $0x2c] sm:$0xf] %vm1060, %v2023
        %2109 = vst.msk [vmem:[%s2096 + $0x30] sm:$0xf] %vm1060, %v2025
        %2110 = vst.msk [vmem:[%s2096 + $0x34] sm:$0xf] %vm1060, %v2027
        %2111 = vst.msk [vmem:[%s2096 + $0x38] sm:$0xf] %vm1060, %v2029
        %2112 = vst.msk [vmem:[%s2096 + $0x3c] sm:$0xf] %vm1060, %v2031
        %2113 = vst.msk [vmem:[%s2096 + $0x40] sm:$0xf] %vm1060, %v2033
        %2114 = vst.msk [vmem:[%s2096 + $0x44] sm:$0xf] %vm1060, %v2035
        %2115 = vst.msk [vmem:[%s2096 + $0x48] sm:$0xf] %vm1060, %v2037
        %2116 = vst.msk [vmem:[%s2096 + $0x4c] sm:$0xf] %vm1060, %v2039
        %2117 = vst.msk [vmem:[%s2096 + $0x50] sm:$0xf] %vm1060, %v2041
        %2118 = vst.msk [vmem:[%s2096 + $0x54] sm:$0xf] %vm1060, %v2043
        %2119 = vst.msk [vmem:[%s2096 + $0x58] sm:$0xf] %vm1060, %v2045
        %2120 = vst.msk [vmem:[%s2096 + $0x5c] sm:$0xf] %vm1060, %v2047
        %2121 = vst.msk [vmem:[%s2096 + $0x60] sm:$0xf] %vm1060, %v2049
        %2122 = vst.msk [vmem:[%s2096 + $0x64] sm:$0xf] %vm1060, %v2051
        %2123 = vst.msk [vmem:[%s2096 + $0x68] sm:$0xf] %vm1060, %v2053
        %2124 = vst.msk [vmem:[%s2096 + $0x6c] sm:$0xf] %vm1060, %v2055
        %2125 = vst.msk [vmem:[%s2096 + $0x70] sm:$0xf] %vm1060, %v2057
        %2126 = vst.msk [vmem:[%s2096 + $0x74] sm:$0xf] %vm1060, %v2059
        %2127 = vst.msk [vmem:[%s2096 + $0x78] sm:$0xf] %vm1060, %v2061
        %2128 = vst.msk [vmem:[%s2096 + $0x7c] sm:$0xf] %vm1060, %v2063
        %2129 = vrot.lane.b32.xlu0 %v1904, 64
        %v2130 = vpop.permute.xlu0 %2129
        %2131 = vrot.lane.b32.xlu0 %v1905, 64
        %v2132 = vpop.permute.xlu0 %2131
        %2133 = vrot.lane.b32.xlu0 %v1906, 64
        %v2134 = vpop.permute.xlu0 %2133
        %2135 = vrot.lane.b32.xlu0 %v1907, 64
        %v2136 = vpop.permute.xlu0 %2135
        %2137 = vrot.lane.b32.xlu0 %v1908, 64
        %v2138 = vpop.permute.xlu0 %2137
        %2139 = vrot.lane.b32.xlu0 %v1909, 64
        %v2140 = vpop.permute.xlu0 %2139
        %2141 = vrot.lane.b32.xlu0 %v1910, 64
        %v2142 = vpop.permute.xlu0 %2141
        %2143 = vrot.lane.b32.xlu0 %v1911, 64
        %v2144 = vpop.permute.xlu0 %2143
        %2145 = vrot.lane.b32.xlu0 %v1912, 64
        %v2146 = vpop.permute.xlu0 %2145
        %2147 = vrot.lane.b32.xlu0 %v1913, 64
        %v2148 = vpop.permute.xlu0 %2147
        %2149 = vrot.lane.b32.xlu0 %v1914, 64
        %v2150 = vpop.permute.xlu0 %2149
        %2151 = vrot.lane.b32.xlu0 %v1915, 64
        %v2152 = vpop.permute.xlu0 %2151
        %2153 = vrot.lane.b32.xlu0 %v1916, 64
        %v2154 = vpop.permute.xlu0 %2153
        %2155 = vrot.lane.b32.xlu0 %v1917, 64
        %v2156 = vpop.permute.xlu0 %2155
        %2157 = vrot.lane.b32.xlu0 %v1918, 64
        %v2158 = vpop.permute.xlu0 %2157
        %2159 = vrot.lane.b32.xlu0 %v1919, 64
        %v2160 = vpop.permute.xlu0 %2159
        %2161 = vrot.lane.b32.xlu0 %v1920, 64
        %v2162 = vpop.permute.xlu0 %2161
        %2163 = vrot.lane.b32.xlu0 %v1921, 64
        %v2164 = vpop.permute.xlu0 %2163
        %2165 = vrot.lane.b32.xlu0 %v1922, 64
        %v2166 = vpop.permute.xlu0 %2165
        %2167 = vrot.lane.b32.xlu0 %v1923, 64
        %v2168 = vpop.permute.xlu0 %2167
        %2169 = vrot.lane.b32.xlu0 %v1924, 64
        %v2170 = vpop.permute.xlu0 %2169
        %2171 = vrot.lane.b32.xlu0 %v1925, 64
        %v2172 = vpop.permute.xlu0 %2171
        %2173 = vrot.lane.b32.xlu0 %v1926, 64
        %v2174 = vpop.permute.xlu0 %2173
        %2175 = vrot.lane.b32.xlu0 %v1927, 64
        %v2176 = vpop.permute.xlu0 %2175
        %2177 = vrot.lane.b32.xlu0 %v1928, 64
        %v2178 = vpop.permute.xlu0 %2177
        %2179 = vrot.lane.b32.xlu0 %v1929, 64
        %v2180 = vpop.permute.xlu0 %2179
        %2181 = vrot.lane.b32.xlu0 %v1930, 64
        %v2182 = vpop.permute.xlu0 %2181
        %2183 = vrot.lane.b32.xlu0 %v1931, 64
        %v2184 = vpop.permute.xlu0 %2183
        %2185 = vrot.lane.b32.xlu0 %v1932, 64
        %v2186 = vpop.permute.xlu0 %2185
        %2187 = vrot.lane.b32.xlu0 %v1933, 64
        %v2188 = vpop.permute.xlu0 %2187
        %2189 = vrot.lane.b32.xlu0 %v1934, 64
        %v2190 = vpop.permute.xlu0 %2189
        %2191 = vrot.lane.b32.xlu0 %v1935, 64
        %v2192 = vpop.permute.xlu0 %2191
        %s2225 = scalar_lea.vmem %s558, 256 [#allocation13]
        %2226 = vst.msk [vmem:[%s2225] sm:$0xf] %vm1060, %v2130
        %2227 = vst.msk [vmem:[%s2225 + $0x4] sm:$0xf] %vm1060, %v2132
        %2228 = vst.msk [vmem:[%s2225 + $0x8] sm:$0xf] %vm1060, %v2134
        %2229 = vst.msk [vmem:[%s2225 + $0xc] sm:$0xf] %vm1060, %v2136
        %2230 = vst.msk [vmem:[%s2225 + $0x10] sm:$0xf] %vm1060, %v2138
        %2231 = vst.msk [vmem:[%s2225 + $0x14] sm:$0xf] %vm1060, %v2140
        %2232 = vst.msk [vmem:[%s2225 + $0x18] sm:$0xf] %vm1060, %v2142
        %2233 = vst.msk [vmem:[%s2225 + $0x1c] sm:$0xf] %vm1060, %v2144
        %2234 = vst.msk [vmem:[%s2225 + $0x20] sm:$0xf] %vm1060, %v2146
        %2235 = vst.msk [vmem:[%s2225 + $0x24] sm:$0xf] %vm1060, %v2148
        %2236 = vst.msk [vmem:[%s2225 + $0x28] sm:$0xf] %vm1060, %v2150
        %2237 = vst.msk [vmem:[%s2225 + $0x2c] sm:$0xf] %vm1060, %v2152
        %2238 = vst.msk [vmem:[%s2225 + $0x30] sm:$0xf] %vm1060, %v2154
        %2239 = vst.msk [vmem:[%s2225 + $0x34] sm:$0xf] %vm1060, %v2156
        %2240 = vst.msk [vmem:[%s2225 + $0x38] sm:$0xf] %vm1060, %v2158
        %2241 = vst.msk [vmem:[%s2225 + $0x3c] sm:$0xf] %vm1060, %v2160
        %2242 = vst.msk [vmem:[%s2225 + $0x40] sm:$0xf] %vm1060, %v2162
        %2243 = vst.msk [vmem:[%s2225 + $0x44] sm:$0xf] %vm1060, %v2164
        %2244 = vst.msk [vmem:[%s2225 + $0x48] sm:$0xf] %vm1060, %v2166
        %2245 = vst.msk [vmem:[%s2225 + $0x4c] sm:$0xf] %vm1060, %v2168
        %2246 = vst.msk [vmem:[%s2225 + $0x50] sm:$0xf] %vm1060, %v2170
        %2247 = vst.msk [vmem:[%s2225 + $0x54] sm:$0xf] %vm1060, %v2172
        %2248 = vst.msk [vmem:[%s2225 + $0x58] sm:$0xf] %vm1060, %v2174
        %2249 = vst.msk [vmem:[%s2225 + $0x5c] sm:$0xf] %vm1060, %v2176
        %2250 = vst.msk [vmem:[%s2225 + $0x60] sm:$0xf] %vm1060, %v2178
        %2251 = vst.msk [vmem:[%s2225 + $0x64] sm:$0xf] %vm1060, %v2180
        %2252 = vst.msk [vmem:[%s2225 + $0x68] sm:$0xf] %vm1060, %v2182
        %2253 = vst.msk [vmem:[%s2225 + $0x6c] sm:$0xf] %vm1060, %v2184
        %2254 = vst.msk [vmem:[%s2225 + $0x70] sm:$0xf] %vm1060, %v2186
        %2255 = vst.msk [vmem:[%s2225 + $0x74] sm:$0xf] %vm1060, %v2188
        %2256 = vst.msk [vmem:[%s2225 + $0x78] sm:$0xf] %vm1060, %v2190
        %2257 = vst.msk [vmem:[%s2225 + $0x7c] sm:$0xf] %vm1060, %v2192
        %2258 = vrot.lane.b32.xlu0 %v1904, 32
        %v2259 = vpop.permute.xlu0 %2258
        %2260 = vrot.lane.b32.xlu0 %v1905, 32
        %v2261 = vpop.permute.xlu0 %2260
        %2262 = vrot.lane.b32.xlu0 %v1906, 32
        %v2263 = vpop.permute.xlu0 %2262
        %2264 = vrot.lane.b32.xlu0 %v1907, 32
        %v2265 = vpop.permute.xlu0 %2264
        %2266 = vrot.lane.b32.xlu0 %v1908, 32
        %v2267 = vpop.permute.xlu0 %2266
        %2268 = vrot.lane.b32.xlu0 %v1909, 32
        %v2269 = vpop.permute.xlu0 %2268
        %2270 = vrot.lane.b32.xlu0 %v1910, 32
        %v2271 = vpop.permute.xlu0 %2270
        %2272 = vrot.lane.b32.xlu0 %v1911, 32
        %v2273 = vpop.permute.xlu0 %2272
        %2274 = vrot.lane.b32.xlu0 %v1912, 32
        %v2275 = vpop.permute.xlu0 %2274
        %2276 = vrot.lane.b32.xlu0 %v1913, 32
        %v2277 = vpop.permute.xlu0 %2276
        %2278 = vrot.lane.b32.xlu0 %v1914, 32
        %v2279 = vpop.permute.xlu0 %2278
        %2280 = vrot.lane.b32.xlu0 %v1915, 32
        %v2281 = vpop.permute.xlu0 %2280
        %2282 = vrot.lane.b32.xlu0 %v1916, 32
        %v2283 = vpop.permute.xlu0 %2282
        %2284 = vrot.lane.b32.xlu0 %v1917, 32
        %v2285 = vpop.permute.xlu0 %2284
        %2286 = vrot.lane.b32.xlu0 %v1918, 32
        %v2287 = vpop.permute.xlu0 %2286
        %2288 = vrot.lane.b32.xlu0 %v1919, 32
        %v2289 = vpop.permute.xlu0 %2288
        %2290 = vrot.lane.b32.xlu0 %v1920, 32
        %v2291 = vpop.permute.xlu0 %2290
        %2292 = vrot.lane.b32.xlu0 %v1921, 32
        %v2293 = vpop.permute.xlu0 %2292
        %2294 = vrot.lane.b32.xlu0 %v1922, 32
        %v2295 = vpop.permute.xlu0 %2294
        %2296 = vrot.lane.b32.xlu0 %v1923, 32
        %v2297 = vpop.permute.xlu0 %2296
        %2298 = vrot.lane.b32.xlu0 %v1924, 32
        %v2299 = vpop.permute.xlu0 %2298
        %2300 = vrot.lane.b32.xlu0 %v1925, 32
        %v2301 = vpop.permute.xlu0 %2300
        %2302 = vrot.lane.b32.xlu0 %v1926, 32
        %v2303 = vpop.permute.xlu0 %2302
        %2304 = vrot.lane.b32.xlu0 %v1927, 32
        %v2305 = vpop.permute.xlu0 %2304
        %2306 = vrot.lane.b32.xlu0 %v1928, 32
        %v2307 = vpop.permute.xlu0 %2306
        %2308 = vrot.lane.b32.xlu0 %v1929, 32
        %v2309 = vpop.permute.xlu0 %2308
        %2310 = vrot.lane.b32.xlu0 %v1930, 32
        %v2311 = vpop.permute.xlu0 %2310
        %2312 = vrot.lane.b32.xlu0 %v1931, 32
        %v2313 = vpop.permute.xlu0 %2312
        %2314 = vrot.lane.b32.xlu0 %v1932, 32
        %v2315 = vpop.permute.xlu0 %2314
        %2316 = vrot.lane.b32.xlu0 %v1933, 32
        %v2317 = vpop.permute.xlu0 %2316
        %2318 = vrot.lane.b32.xlu0 %v1934, 32
        %v2319 = vpop.permute.xlu0 %2318
        %2320 = vrot.lane.b32.xlu0 %v1935, 32
        %v2321 = vpop.permute.xlu0 %2320
        %s2354 = scalar_lea.vmem %s558, 384 [#allocation13]
        %2355 = vst.msk [vmem:[%s2354] sm:$0xf] %vm1060, %v2259
        %2356 = vst.msk [vmem:[%s2354 + $0x4] sm:$0xf] %vm1060, %v2261
        %2357 = vst.msk [vmem:[%s2354 + $0x8] sm:$0xf] %vm1060, %v2263
        %2358 = vst.msk [vmem:[%s2354 + $0xc] sm:$0xf] %vm1060, %v2265
        %2359 = vst.msk [vmem:[%s2354 + $0x10] sm:$0xf] %vm1060, %v2267
        %2360 = vst.msk [vmem:[%s2354 + $0x14] sm:$0xf] %vm1060, %v2269
        %2361 = vst.msk [vmem:[%s2354 + $0x18] sm:$0xf] %vm1060, %v2271
        %2362 = vst.msk [vmem:[%s2354 + $0x1c] sm:$0xf] %vm1060, %v2273
        %2363 = vst.msk [vmem:[%s2354 + $0x20] sm:$0xf] %vm1060, %v2275
        %2364 = vst.msk [vmem:[%s2354 + $0x24] sm:$0xf] %vm1060, %v2277
        %2365 = vst.msk [vmem:[%s2354 + $0x28] sm:$0xf] %vm1060, %v2279
        %2366 = vst.msk [vmem:[%s2354 + $0x2c] sm:$0xf] %vm1060, %v2281
        %2367 = vst.msk [vmem:[%s2354 + $0x30] sm:$0xf] %vm1060, %v2283
        %2368 = vst.msk [vmem:[%s2354 + $0x34] sm:$0xf] %vm1060, %v2285
        %2369 = vst.msk [vmem:[%s2354 + $0x38] sm:$0xf] %vm1060, %v2287
        %2370 = vst.msk [vmem:[%s2354 + $0x3c] sm:$0xf] %vm1060, %v2289
        %2371 = vst.msk [vmem:[%s2354 + $0x40] sm:$0xf] %vm1060, %v2291
        %2372 = vst.msk [vmem:[%s2354 + $0x44] sm:$0xf] %vm1060, %v2293
        %2373 = vst.msk [vmem:[%s2354 + $0x48] sm:$0xf] %vm1060, %v2295
        %2374 = vst.msk [vmem:[%s2354 + $0x4c] sm:$0xf] %vm1060, %v2297
        %2375 = vst.msk [vmem:[%s2354 + $0x50] sm:$0xf] %vm1060, %v2299
        %2376 = vst.msk [vmem:[%s2354 + $0x54] sm:$0xf] %vm1060, %v2301
        %2377 = vst.msk [vmem:[%s2354 + $0x58] sm:$0xf] %vm1060, %v2303
        %2378 = vst.msk [vmem:[%s2354 + $0x5c] sm:$0xf] %vm1060, %v2305
        %2379 = vst.msk [vmem:[%s2354 + $0x60] sm:$0xf] %vm1060, %v2307
        %2380 = vst.msk [vmem:[%s2354 + $0x64] sm:$0xf] %vm1060, %v2309
        %2381 = vst.msk [vmem:[%s2354 + $0x68] sm:$0xf] %vm1060, %v2311
        %2382 = vst.msk [vmem:[%s2354 + $0x6c] sm:$0xf] %vm1060, %v2313
        %2383 = vst.msk [vmem:[%s2354 + $0x70] sm:$0xf] %vm1060, %v2315
        %2384 = vst.msk [vmem:[%s2354 + $0x74] sm:$0xf] %vm1060, %v2317
        %2385 = vst.msk [vmem:[%s2354 + $0x78] sm:$0xf] %vm1060, %v2319
        %2386 = vst.msk [vmem:[%s2354 + $0x7c] sm:$0xf] %vm1060, %v2321
        %v2387 = vld [vmem:[%s497] sm:$0xf]
        %v2388 = vld [vmem:[%s497 + $0x4] sm:$0xf]
        %v2389 = vld [vmem:[%s497 + $0x8] sm:$0xf]
        %v2390 = vld [vmem:[%s497 + $0xc] sm:$0xf]
        %v2391 = vld [vmem:[%s497 + $0x10] sm:$0xf]
        %v2392 = vld [vmem:[%s497 + $0x14] sm:$0xf]
        %v2393 = vld [vmem:[%s497 + $0x18] sm:$0xf]
        %v2394 = vld [vmem:[%s497 + $0x1c] sm:$0xf]
        %v2395 = vld [vmem:[%s497 + $0x20] sm:$0xf]
        %v2396 = vld [vmem:[%s497 + $0x24] sm:$0xf]
        %v2397 = vld [vmem:[%s497 + $0x28] sm:$0xf]
        %v2398 = vld [vmem:[%s497 + $0x2c] sm:$0xf]
        %v2399 = vld [vmem:[%s497 + $0x30] sm:$0xf]
        %v2400 = vld [vmem:[%s497 + $0x34] sm:$0xf]
        %v2401 = vld [vmem:[%s497 + $0x38] sm:$0xf]
        %v2402 = vld [vmem:[%s497 + $0x3c] sm:$0xf]
        %v2403 = vld [vmem:[%s497 + $0x40] sm:$0xf]
        %v2404 = vld [vmem:[%s497 + $0x44] sm:$0xf]
        %v2405 = vld [vmem:[%s497 + $0x48] sm:$0xf]
        %v2406 = vld [vmem:[%s497 + $0x4c] sm:$0xf]
        %v2407 = vld [vmem:[%s497 + $0x50] sm:$0xf]
        %v2408 = vld [vmem:[%s497 + $0x54] sm:$0xf]
        %v2409 = vld [vmem:[%s497 + $0x58] sm:$0xf]
        %v2410 = vld [vmem:[%s497 + $0x5c] sm:$0xf]
        %v2411 = vld [vmem:[%s497 + $0x60] sm:$0xf]
        %v2412 = vld [vmem:[%s497 + $0x64] sm:$0xf]
        %v2413 = vld [vmem:[%s497 + $0x68] sm:$0xf]
        %v2414 = vld [vmem:[%s497 + $0x6c] sm:$0xf]
        %v2415 = vld [vmem:[%s497 + $0x70] sm:$0xf]
        %v2416 = vld [vmem:[%s497 + $0x74] sm:$0xf]
        %v2417 = vld [vmem:[%s497 + $0x78] sm:$0xf]
        %v2418 = vld [vmem:[%s497 + $0x7c] sm:$0xf]
        %v2419 = vld [vmem:[#allocation10] sm:$0xf]
        %v2420 = vld [vmem:[#allocation10 + $0x4] sm:$0xf]
        %v2421 = vld [vmem:[#allocation10 + $0x8] sm:$0xf]
        %v2422 = vld [vmem:[#allocation10 + $0xc] sm:$0xf]
        %v2423 = vld [vmem:[#allocation10 + $0x10] sm:$0xf]
        %v2424 = vld [vmem:[#allocation10 + $0x14] sm:$0xf]
        %v2425 = vld [vmem:[#allocation10 + $0x18] sm:$0xf]
        %v2426 = vld [vmem:[#allocation10 + $0x1c] sm:$0xf]
        %v2427 = vld [vmem:[#allocation10 + $0x20] sm:$0xf]
        %v2428 = vld [vmem:[#allocation10 + $0x24] sm:$0xf]
        %v2429 = vld [vmem:[#allocation10 + $0x28] sm:$0xf]
        %v2430 = vld [vmem:[#allocation10 + $0x2c] sm:$0xf]
        %v2431 = vld [vmem:[#allocation10 + $0x30] sm:$0xf]
        %v2432 = vld [vmem:[#allocation10 + $0x34] sm:$0xf]
        %v2433 = vld [vmem:[#allocation10 + $0x38] sm:$0xf]
        %v2434 = vld [vmem:[#allocation10 + $0x3c] sm:$0xf]
        %v2435 = vld [vmem:[%s8] sm:$0x1]
        %v2437 = vlaneseq
        %v2438 = vshrl.u32 %v2437, 7
        %v2439 = vsub.s32 0, %v2438
        %v2440 = vrot.slane %v2435, %v2439
        %v2474 = vunpack.c.l.b16 %v2387
        %v2475 = vunpack.c.l.b16 %v2388
        %v2476 = vunpack.c.l.b16 %v2389
        %v2477 = vunpack.c.l.b16 %v2390
        %v2478 = vunpack.c.l.b16 %v2391
        %v2479 = vunpack.c.l.b16 %v2392
        %v2480 = vunpack.c.l.b16 %v2393
        %v2481 = vunpack.c.l.b16 %v2394
        %v2482 = vunpack.c.l.b16 %v2395
        %v2483 = vunpack.c.l.b16 %v2396
        %v2484 = vunpack.c.l.b16 %v2397
        %v2485 = vunpack.c.l.b16 %v2398
        %v2486 = vunpack.c.l.b16 %v2399
        %v2487 = vunpack.c.l.b16 %v2400
        %v2488 = vunpack.c.l.b16 %v2401
        %v2489 = vunpack.c.l.b16 %v2402
        %v2490 = vunpack.c.l.b16 %v2403
        %v2491 = vunpack.c.l.b16 %v2404
        %v2492 = vunpack.c.l.b16 %v2405
        %v2493 = vunpack.c.l.b16 %v2406
        %v2494 = vunpack.c.l.b16 %v2407
        %v2495 = vunpack.c.l.b16 %v2408
        %v2496 = vunpack.c.l.b16 %v2409
        %v2497 = vunpack.c.l.b16 %v2410
        %v2498 = vunpack.c.l.b16 %v2411
        %v2499 = vunpack.c.l.b16 %v2412
        %v2500 = vunpack.c.l.b16 %v2413
        %v2501 = vunpack.c.l.b16 %v2414
        %v2502 = vunpack.c.l.b16 %v2415
        %v2503 = vunpack.c.l.b16 %v2416
        %v2504 = vunpack.c.l.b16 %v2417
        %v2505 = vunpack.c.l.b16 %v2418
        %v2506 = vpack.c.b16 %v2475, %v2474
        %v2507 = vpack.c.b16 %v2477, %v2476
        %v2508 = vpack.c.b16 %v2479, %v2478
        %v2509 = vpack.c.b16 %v2481, %v2480
        %v2510 = vpack.c.b16 %v2483, %v2482
        %v2511 = vpack.c.b16 %v2485, %v2484
        %v2512 = vpack.c.b16 %v2487, %v2486
        %v2513 = vpack.c.b16 %v2489, %v2488
        %v2514 = vpack.c.b16 %v2491, %v2490
        %v2515 = vpack.c.b16 %v2493, %v2492
        %v2516 = vpack.c.b16 %v2495, %v2494
        %v2517 = vpack.c.b16 %v2497, %v2496
        %v2518 = vpack.c.b16 %v2499, %v2498
        %v2519 = vpack.c.b16 %v2501, %v2500
        %v2520 = vpack.c.b16 %v2503, %v2502
        %v2521 = vpack.c.b16 %v2505, %v2504
        %v2554 = vunpack.c.l.b16 %v2419
        %v2555 = vunpack.c.l.b16 %v2420
        %v2556 = vunpack.c.l.b16 %v2421
        %v2557 = vunpack.c.l.b16 %v2422
        %v2558 = vunpack.c.l.b16 %v2423
        %v2559 = vunpack.c.l.b16 %v2424
        %v2560 = vunpack.c.l.b16 %v2425
        %v2561 = vunpack.c.l.b16 %v2426
        %v2562 = vunpack.c.l.b16 %v2427
        %v2563 = vunpack.c.l.b16 %v2428
        %v2564 = vunpack.c.l.b16 %v2429
        %v2565 = vunpack.c.l.b16 %v2430
        %v2566 = vunpack.c.l.b16 %v2431
        %v2567 = vunpack.c.l.b16 %v2432
        %v2568 = vunpack.c.l.b16 %v2433
        %v2569 = vunpack.c.l.b16 %v2434
        %v2570 = vpack.c.b16 %v2555, %v2554
        %v2571 = vpack.c.b16 %v2557, %v2556
        %v2572 = vpack.c.b16 %v2559, %v2558
        %v2573 = vpack.c.b16 %v2561, %v2560
        %v2574 = vpack.c.b16 %v2563, %v2562
        %v2575 = vpack.c.b16 %v2565, %v2564
        %v2576 = vpack.c.b16 %v2567, %v2566
        %v2577 = vpack.c.b16 %v2569, %v2568
        %2586 = vmatprep.subr.bf16.mxu0 0
        %2587 = vmatpush1.bf16.msra.mxu0 %v2577
        %2588 = vmatprep.subr.bf16.mxu0 0
        %2589 = vmatpush1.bf16.msra.mxu0 %v2576
        %2590 = vmatprep.subr.bf16.mxu0 0
        %2591 = vmatpush1.bf16.msra.mxu0 %v2575
        %2592 = vmatprep.subr.bf16.mxu0 0
        %2593 = vmatpush1.bf16.msra.mxu0 %v2574
        %2594 = vmatprep.subr.bf16.mxu0 0
        %2595 = vmatpush1.bf16.msra.mxu0 %v2573
        %2596 = vmatprep.subr.bf16.mxu0 0
        %2597 = vmatpush1.bf16.msra.mxu0 %v2572
        %2598 = vmatprep.subr.bf16.mxu0 0
        %2599 = vmatpush1.bf16.msra.mxu0 %v2571
        %2600 = vmatprep.subr.bf16.mxu0 0
        %2601 = vmatpush1.bf16.msra.mxu0 %v2570
        %2602 = vmatprep.subr.bf16.mxu0 0
        %2603 = vmatpush2.bf16.msra.mxu0 0
        %2604 = vmatprep.subr.bf16.mxu0 0
        %2605 = vmatpush2.bf16.msra.mxu0 0
        %2606 = vmatprep.subr.bf16.mxu0 0
        %2607 = vmatpush2.bf16.msra.mxu0 0
        %2608 = vmatprep.subr.bf16.mxu0 0
        %2609 = vmatpush2.bf16.msra.mxu0 0
        %2610 = vmatprep.subr.bf16.mxu0 0
        %2611 = vmatpush2.bf16.msra.mxu0 0
        %2612 = vmatprep.subr.bf16.mxu0 0
        %2613 = vmatpush2.bf16.msra.mxu0 0
        %2614 = vmatprep.subr.bf16.mxu0 0
        %2615 = vmatpush2.bf16.msra.mxu0 0
        %2616 = vmatprep.subr.bf16.mxu0 0
        %2617 = vmatpush2.bf16.msra.mxu0 0
        %2618 = vmatprep.mubr.bf16.mxu0 0
        %2619 = vmatmul.mubr.bf16.gmra.mxu0 %v2506
        %v2620 = vpop.f32.mrf.mxu0
        %v2621 = vadd.f32 %v2440, %v2620
        %v2622 = vpop.f32.mrf.mxu0
        %v2623 = vpop.f32.mrf.mxu0
        %v2624 = vadd.f32 %v2440, %v2623
        %v2625 = vpop.f32.mrf.mxu0
        %2626 = vmatprep.mubr.bf16.mxu0 0
        %2627 = vmatmul.mubr.bf16.gmra.mxu0 %v2507
        %v2628 = vpop.f32.mrf.mxu0
        %v2629 = vadd.f32 %v2440, %v2628
        %v2630 = vpop.f32.mrf.mxu0
        %v2631 = vpop.f32.mrf.mxu0
        %v2632 = vadd.f32 %v2440, %v2631
        %v2633 = vpop.f32.mrf.mxu0
        %2634 = vmatprep.mubr.bf16.mxu0 0
        %2635 = vmatmul.mubr.bf16.gmra.mxu0 %v2508
        %v2636 = vpop.f32.mrf.mxu0
        %v2637 = vadd.f32 %v2440, %v2636
        %v2638 = vpop.f32.mrf.mxu0
        %v2639 = vpop.f32.mrf.mxu0
        %v2640 = vadd.f32 %v2440, %v2639
        %v2641 = vpop.f32.mrf.mxu0
        %2642 = vmatprep.mubr.bf16.mxu0 0
        %2643 = vmatmul.mubr.bf16.gmra.mxu0 %v2509
        %v2644 = vpop.f32.mrf.mxu0
        %v2645 = vadd.f32 %v2440, %v2644
        %v2646 = vpop.f32.mrf.mxu0
        %v2647 = vpop.f32.mrf.mxu0
        %v2648 = vadd.f32 %v2440, %v2647
        %v2649 = vpop.f32.mrf.mxu0
        %2650 = vmatprep.mubr.bf16.mxu0 0
        %2651 = vmatmul.mubr.bf16.gmra.mxu0 %v2510
        %v2652 = vpop.f32.mrf.mxu0
        %v2653 = vadd.f32 %v2440, %v2652
        %v2654 = vpop.f32.mrf.mxu0
        %v2655 = vpop.f32.mrf.mxu0
        %v2656 = vadd.f32 %v2440, %v2655
        %v2657 = vpop.f32.mrf.mxu0
        %2658 = vmatprep.mubr.bf16.mxu0 0
        %2659 = vmatmul.mubr.bf16.gmra.mxu0 %v2511
        %v2660 = vpop.f32.mrf.mxu0
        %v2661 = vadd.f32 %v2440, %v2660
        %v2662 = vpop.f32.mrf.mxu0
        %v2663 = vpop.f32.mrf.mxu0
        %v2664 = vadd.f32 %v2440, %v2663
        %v2665 = vpop.f32.mrf.mxu0
        %2666 = vmatprep.mubr.bf16.mxu0 0
        %2667 = vmatmul.mubr.bf16.gmra.mxu0 %v2512
        %v2668 = vpop.f32.mrf.mxu0
        %v2669 = vadd.f32 %v2440, %v2668
        %v2670 = vpop.f32.mrf.mxu0
        %v2671 = vpop.f32.mrf.mxu0
        %v2672 = vadd.f32 %v2440, %v2671
        %v2673 = vpop.f32.mrf.mxu0
        %2674 = vmatprep.mubr.bf16.mxu0 0
        %2675 = vmatmul.mubr.bf16.gmra.mxu0 %v2513
        %v2676 = vpop.f32.mrf.mxu0
        %v2677 = vadd.f32 %v2440, %v2676
        %v2678 = vpop.f32.mrf.mxu0
        %v2679 = vpop.f32.mrf.mxu0
        %v2680 = vadd.f32 %v2440, %v2679
        %v2681 = vpop.f32.mrf.mxu0
        %2682 = vmatprep.mubr.bf16.mxu0 0
        %2683 = vmatmul.mubr.bf16.gmra.mxu0 %v2514
        %v2684 = vpop.f32.mrf.mxu0
        %v2685 = vadd.f32 %v2440, %v2684
        %v2686 = vpop.f32.mrf.mxu0
        %v2687 = vpop.f32.mrf.mxu0
        %v2688 = vadd.f32 %v2440, %v2687
        %v2689 = vpop.f32.mrf.mxu0
        %2690 = vmatprep.mubr.bf16.mxu0 0
        %2691 = vmatmul.mubr.bf16.gmra.mxu0 %v2515
        %v2692 = vpop.f32.mrf.mxu0
        %v2693 = vadd.f32 %v2440, %v2692
        %v2694 = vpop.f32.mrf.mxu0
        %v2695 = vpop.f32.mrf.mxu0
        %v2696 = vadd.f32 %v2440, %v2695
        %v2697 = vpop.f32.mrf.mxu0
        %2698 = vmatprep.mubr.bf16.mxu0 0
        %2699 = vmatmul.mubr.bf16.gmra.mxu0 %v2516
        %v2700 = vpop.f32.mrf.mxu0
        %v2701 = vadd.f32 %v2440, %v2700
        %v2702 = vpop.f32.mrf.mxu0
        %v2703 = vpop.f32.mrf.mxu0
        %v2704 = vadd.f32 %v2440, %v2703
        %v2705 = vpop.f32.mrf.mxu0
        %2706 = vmatprep.mubr.bf16.mxu0 0
        %2707 = vmatmul.mubr.bf16.gmra.mxu0 %v2517
        %v2708 = vpop.f32.mrf.mxu0
        %v2709 = vadd.f32 %v2440, %v2708
        %v2710 = vpop.f32.mrf.mxu0
        %v2711 = vpop.f32.mrf.mxu0
        %v2712 = vadd.f32 %v2440, %v2711
        %v2713 = vpop.f32.mrf.mxu0
        %2714 = vmatprep.mubr.bf16.mxu0 0
        %2715 = vmatmul.mubr.bf16.gmra.mxu0 %v2518
        %v2716 = vpop.f32.mrf.mxu0
        %v2717 = vadd.f32 %v2440, %v2716
        %v2718 = vpop.f32.mrf.mxu0
        %v2719 = vpop.f32.mrf.mxu0
        %v2720 = vadd.f32 %v2440, %v2719
        %v2721 = vpop.f32.mrf.mxu0
        %2722 = vmatprep.mubr.bf16.mxu0 0
        %2723 = vmatmul.mubr.bf16.gmra.mxu0 %v2519
        %v2724 = vpop.f32.mrf.mxu0
        %v2725 = vadd.f32 %v2440, %v2724
        %v2726 = vpop.f32.mrf.mxu0
        %v2727 = vpop.f32.mrf.mxu0
        %v2728 = vadd.f32 %v2440, %v2727
        %v2729 = vpop.f32.mrf.mxu0
        %2730 = vmatprep.mubr.bf16.mxu0 0
        %2731 = vmatmul.mubr.bf16.gmra.mxu0 %v2520
        %v2732 = vpop.f32.mrf.mxu0
        %v2733 = vadd.f32 %v2440, %v2732
        %v2734 = vpop.f32.mrf.mxu0
        %v2735 = vpop.f32.mrf.mxu0
        %v2736 = vadd.f32 %v2440, %v2735
        %v2737 = vpop.f32.mrf.mxu0
        %2738 = vmatprep.mubr.bf16.mxu0 0
        %2739 = vmatmul.mubr.bf16.gmra.mxu0 %v2521
        %v2740 = vpop.f32.mrf.mxu0
        %v2741 = vadd.f32 %v2440, %v2740
        %v2742 = vpop.f32.mrf.mxu0
        %v2743 = vpop.f32.mrf.mxu0
        %v2744 = vadd.f32 %v2440, %v2743
        %v2745 = vpop.f32.mrf.mxu0
        %2746 = vdwg.mxu0
        %v2747 = vpack.c.bf16 %v2624, %v2621
        %v2748 = vpack.c.bf16 %v2632, %v2629
        %v2749 = vpack.c.bf16 %v2640, %v2637
        %v2750 = vpack.c.bf16 %v2648, %v2645
        %v2751 = vpack.c.bf16 %v2656, %v2653
        %v2752 = vpack.c.bf16 %v2664, %v2661
        %v2753 = vpack.c.bf16 %v2672, %v2669
        %v2754 = vpack.c.bf16 %v2680, %v2677
        %v2755 = vpack.c.bf16 %v2688, %v2685
        %v2756 = vpack.c.bf16 %v2696, %v2693
        %v2757 = vpack.c.bf16 %v2704, %v2701
        %v2758 = vpack.c.bf16 %v2712, %v2709
        %v2759 = vpack.c.bf16 %v2720, %v2717
        %v2760 = vpack.c.bf16 %v2728, %v2725
        %v2761 = vpack.c.bf16 %v2736, %v2733
        %v2762 = vpack.c.bf16 %v2744, %v2741
        %v2779 = vunpack.c.l.b16 %v2747
        %v2780 = vunpack.c.h.b16 %v2747
        %v2781 = vunpack.c.l.b16 %v2748
        %v2782 = vunpack.c.h.b16 %v2748
        %v2783 = vunpack.c.l.b16 %v2749
        %v2784 = vunpack.c.h.b16 %v2749
        %v2785 = vunpack.c.l.b16 %v2750
        %v2786 = vunpack.c.h.b16 %v2750
        %v2787 = vunpack.c.l.b16 %v2751
        %v2788 = vunpack.c.h.b16 %v2751
        %v2789 = vunpack.c.l.b16 %v2752
        %v2790 = vunpack.c.h.b16 %v2752
        %v2791 = vunpack.c.l.b16 %v2753
        %v2792 = vunpack.c.h.b16 %v2753
        %v2793 = vunpack.c.l.b16 %v2754
        %v2794 = vunpack.c.h.b16 %v2754
        %v2795 = vunpack.c.l.b16 %v2755
        %v2796 = vunpack.c.h.b16 %v2755
        %v2797 = vunpack.c.l.b16 %v2756
        %v2798 = vunpack.c.h.b16 %v2756
        %v2799 = vunpack.c.l.b16 %v2757
        %v2800 = vunpack.c.h.b16 %v2757
        %v2801 = vunpack.c.l.b16 %v2758
        %v2802 = vunpack.c.h.b16 %v2758
        %v2803 = vunpack.c.l.b16 %v2759
        %v2804 = vunpack.c.h.b16 %v2759
        %v2805 = vunpack.c.l.b16 %v2760
        %v2806 = vunpack.c.h.b16 %v2760
        %v2807 = vunpack.c.l.b16 %v2761
        %v2808 = vunpack.c.h.b16 %v2761
        %v2809 = vunpack.c.l.b16 %v2762
        %v2810 = vunpack.c.h.b16 %v2762
        %v2811 = vpack.c.b16 %v2779, %v2779
        %v2812 = vpack.c.b16 %v2780, %v2780
        %v2813 = vpack.c.b16 %v2781, %v2781
        %v2814 = vpack.c.b16 %v2782, %v2782
        %v2815 = vpack.c.b16 %v2783, %v2783
        %v2816 = vpack.c.b16 %v2784, %v2784
        %v2817 = vpack.c.b16 %v2785, %v2785
        %v2818 = vpack.c.b16 %v2786, %v2786
        %v2819 = vpack.c.b16 %v2787, %v2787
        %v2820 = vpack.c.b16 %v2788, %v2788
        %v2821 = vpack.c.b16 %v2789, %v2789
        %v2822 = vpack.c.b16 %v2790, %v2790
        %v2823 = vpack.c.b16 %v2791, %v2791
        %v2824 = vpack.c.b16 %v2792, %v2792
        %v2825 = vpack.c.b16 %v2793, %v2793
        %v2826 = vpack.c.b16 %v2794, %v2794
        %v2827 = vpack.c.b16 %v2795, %v2795
        %v2828 = vpack.c.b16 %v2796, %v2796
        %v2829 = vpack.c.b16 %v2797, %v2797
        %v2830 = vpack.c.b16 %v2798, %v2798
        %v2831 = vpack.c.b16 %v2799, %v2799
        %v2832 = vpack.c.b16 %v2800, %v2800
        %v2833 = vpack.c.b16 %v2801, %v2801
        %v2834 = vpack.c.b16 %v2802, %v2802
        %v2835 = vpack.c.b16 %v2803, %v2803
        %v2836 = vpack.c.b16 %v2804, %v2804
        %v2837 = vpack.c.b16 %v2805, %v2805
        %v2838 = vpack.c.b16 %v2806, %v2806
        %v2839 = vpack.c.b16 %v2807, %v2807
        %v2840 = vpack.c.b16 %v2808, %v2808
        %v2841 = vpack.c.b16 %v2809, %v2809
        %v2842 = vpack.c.b16 %v2810, %v2810
        %2875 = vst.msk [vmem:[%s564] sm:$0xf] %vm1060, %v2811
        %2876 = vst.msk [vmem:[%s564 + $0x4] sm:$0xf] %vm1060, %v2812
        %2877 = vst.msk [vmem:[%s564 + $0x8] sm:$0xf] %vm1060, %v2813
        %2878 = vst.msk [vmem:[%s564 + $0xc] sm:$0xf] %vm1060, %v2814
        %2879 = vst.msk [vmem:[%s564 + $0x10] sm:$0xf] %vm1060, %v2815
        %2880 = vst.msk [vmem:[%s564 + $0x14] sm:$0xf] %vm1060, %v2816
        %2881 = vst.msk [vmem:[%s564 + $0x18] sm:$0xf] %vm1060, %v2817
        %2882 = vst.msk [vmem:[%s564 + $0x1c] sm:$0xf] %vm1060, %v2818
        %2883 = vst.msk [vmem:[%s564 + $0x20] sm:$0xf] %vm1060, %v2819
        %2884 = vst.msk [vmem:[%s564 + $0x24] sm:$0xf] %vm1060, %v2820
        %2885 = vst.msk [vmem:[%s564 + $0x28] sm:$0xf] %vm1060, %v2821
        %2886 = vst.msk [vmem:[%s564 + $0x2c] sm:$0xf] %vm1060, %v2822
        %2887 = vst.msk [vmem:[%s564 + $0x30] sm:$0xf] %vm1060, %v2823
        %2888 = vst.msk [vmem:[%s564 + $0x34] sm:$0xf] %vm1060, %v2824
        %2889 = vst.msk [vmem:[%s564 + $0x38] sm:$0xf] %vm1060, %v2825
        %2890 = vst.msk [vmem:[%s564 + $0x3c] sm:$0xf] %vm1060, %v2826
        %2891 = vst.msk [vmem:[%s564 + $0x40] sm:$0xf] %vm1060, %v2827
        %2892 = vst.msk [vmem:[%s564 + $0x44] sm:$0xf] %vm1060, %v2828
        %2893 = vst.msk [vmem:[%s564 + $0x48] sm:$0xf] %vm1060, %v2829
        %2894 = vst.msk [vmem:[%s564 + $0x4c] sm:$0xf] %vm1060, %v2830
        %2895 = vst.msk [vmem:[%s564 + $0x50] sm:$0xf] %vm1060, %v2831
        %2896 = vst.msk [vmem:[%s564 + $0x54] sm:$0xf] %vm1060, %v2832
        %2897 = vst.msk [vmem:[%s564 + $0x58] sm:$0xf] %vm1060, %v2833
        %2898 = vst.msk [vmem:[%s564 + $0x5c] sm:$0xf] %vm1060, %v2834
        %2899 = vst.msk [vmem:[%s564 + $0x60] sm:$0xf] %vm1060, %v2835
        %2900 = vst.msk [vmem:[%s564 + $0x64] sm:$0xf] %vm1060, %v2836
        %2901 = vst.msk [vmem:[%s564 + $0x68] sm:$0xf] %vm1060, %v2837
        %2902 = vst.msk [vmem:[%s564 + $0x6c] sm:$0xf] %vm1060, %v2838
        %2903 = vst.msk [vmem:[%s564 + $0x70] sm:$0xf] %vm1060, %v2839
        %2904 = vst.msk [vmem:[%s564 + $0x74] sm:$0xf] %vm1060, %v2840
        %2905 = vst.msk [vmem:[%s564 + $0x78] sm:$0xf] %vm1060, %v2841
        %2906 = vst.msk [vmem:[%s564 + $0x7c] sm:$0xf] %vm1060, %v2842
        %2907 = vrot.lane.b32.xlu0 %v2811, 96
        %v2908 = vpop.permute.xlu0 %2907
        %2909 = vrot.lane.b32.xlu0 %v2812, 96
        %v2910 = vpop.permute.xlu0 %2909
        %2911 = vrot.lane.b32.xlu0 %v2813, 96
        %v2912 = vpop.permute.xlu0 %2911
        %2913 = vrot.lane.b32.xlu0 %v2814, 96
        %v2914 = vpop.permute.xlu0 %2913
        %2915 = vrot.lane.b32.xlu0 %v2815, 96
        %v2916 = vpop.permute.xlu0 %2915
        %2917 = vrot.lane.b32.xlu0 %v2816, 96
        %v2918 = vpop.permute.xlu0 %2917
        %2919 = vrot.lane.b32.xlu0 %v2817, 96
        %v2920 = vpop.permute.xlu0 %2919
        %2921 = vrot.lane.b32.xlu0 %v2818, 96
        %v2922 = vpop.permute.xlu0 %2921
        %2923 = vrot.lane.b32.xlu0 %v2819, 96
        %v2924 = vpop.permute.xlu0 %2923
        %2925 = vrot.lane.b32.xlu0 %v2820, 96
        %v2926 = vpop.permute.xlu0 %2925
        %2927 = vrot.lane.b32.xlu0 %v2821, 96
        %v2928 = vpop.permute.xlu0 %2927
        %2929 = vrot.lane.b32.xlu0 %v2822, 96
        %v2930 = vpop.permute.xlu0 %2929
        %2931 = vrot.lane.b32.xlu0 %v2823, 96
        %v2932 = vpop.permute.xlu0 %2931
        %2933 = vrot.lane.b32.xlu0 %v2824, 96
        %v2934 = vpop.permute.xlu0 %2933
        %2935 = vrot.lane.b32.xlu0 %v2825, 96
        %v2936 = vpop.permute.xlu0 %2935
        %2937 = vrot.lane.b32.xlu0 %v2826, 96
        %v2938 = vpop.permute.xlu0 %2937
        %2939 = vrot.lane.b32.xlu0 %v2827, 96
        %v2940 = vpop.permute.xlu0 %2939
        %2941 = vrot.lane.b32.xlu0 %v2828, 96
        %v2942 = vpop.permute.xlu0 %2941
        %2943 = vrot.lane.b32.xlu0 %v2829, 96
        %v2944 = vpop.permute.xlu0 %2943
        %2945 = vrot.lane.b32.xlu0 %v2830, 96
        %v2946 = vpop.permute.xlu0 %2945
        %2947 = vrot.lane.b32.xlu0 %v2831, 96
        %v2948 = vpop.permute.xlu0 %2947
        %2949 = vrot.lane.b32.xlu0 %v2832, 96
        %v2950 = vpop.permute.xlu0 %2949
        %2951 = vrot.lane.b32.xlu0 %v2833, 96
        %v2952 = vpop.permute.xlu0 %2951
        %2953 = vrot.lane.b32.xlu0 %v2834, 96
        %v2954 = vpop.permute.xlu0 %2953
        %2955 = vrot.lane.b32.xlu0 %v2835, 96
        %v2956 = vpop.permute.xlu0 %2955
        %2957 = vrot.lane.b32.xlu0 %v2836, 96
        %v2958 = vpop.permute.xlu0 %2957
        %2959 = vrot.lane.b32.xlu0 %v2837, 96
        %v2960 = vpop.permute.xlu0 %2959
        %2961 = vrot.lane.b32.xlu0 %v2838, 96
        %v2962 = vpop.permute.xlu0 %2961
        %2963 = vrot.lane.b32.xlu0 %v2839, 96
        %v2964 = vpop.permute.xlu0 %2963
        %2965 = vrot.lane.b32.xlu0 %v2840, 96
        %v2966 = vpop.permute.xlu0 %2965
        %2967 = vrot.lane.b32.xlu0 %v2841, 96
        %v2968 = vpop.permute.xlu0 %2967
        %2969 = vrot.lane.b32.xlu0 %v2842, 96
        %v2970 = vpop.permute.xlu0 %2969
        %s3003 = scalar_lea.vmem %s564, 128 [#allocation14]
        %3004 = vst.msk [vmem:[%s3003] sm:$0xf] %vm1060, %v2908
        %3005 = vst.msk [vmem:[%s3003 + $0x4] sm:$0xf] %vm1060, %v2910
        %3006 = vst.msk [vmem:[%s3003 + $0x8] sm:$0xf] %vm1060, %v2912
        %3007 = vst.msk [vmem:[%s3003 + $0xc] sm:$0xf] %vm1060, %v2914
        %3008 = vst.msk [vmem:[%s3003 + $0x10] sm:$0xf] %vm1060, %v2916
        %3009 = vst.msk [vmem:[%s3003 + $0x14] sm:$0xf] %vm1060, %v2918
        %3010 = vst.msk [vmem:[%s3003 + $0x18] sm:$0xf] %vm1060, %v2920
        %3011 = vst.msk [vmem:[%s3003 + $0x1c] sm:$0xf] %vm1060, %v2922
        %3012 = vst.msk [vmem:[%s3003 + $0x20] sm:$0xf] %vm1060, %v2924
        %3013 = vst.msk [vmem:[%s3003 + $0x24] sm:$0xf] %vm1060, %v2926
        %3014 = vst.msk [vmem:[%s3003 + $0x28] sm:$0xf] %vm1060, %v2928
        %3015 = vst.msk [vmem:[%s3003 + $0x2c] sm:$0xf] %vm1060, %v2930
        %3016 = vst.msk [vmem:[%s3003 + $0x30] sm:$0xf] %vm1060, %v2932
        %3017 = vst.msk [vmem:[%s3003 + $0x34] sm:$0xf] %vm1060, %v2934
        %3018 = vst.msk [vmem:[%s3003 + $0x38] sm:$0xf] %vm1060, %v2936
        %3019 = vst.msk [vmem:[%s3003 + $0x3c] sm:$0xf] %vm1060, %v2938
        %3020 = vst.msk [vmem:[%s3003 + $0x40] sm:$0xf] %vm1060, %v2940
        %3021 = vst.msk [vmem:[%s3003 + $0x44] sm:$0xf] %vm1060, %v2942
        %3022 = vst.msk [vmem:[%s3003 + $0x48] sm:$0xf] %vm1060, %v2944
        %3023 = vst.msk [vmem:[%s3003 + $0x4c] sm:$0xf] %vm1060, %v2946
        %3024 = vst.msk [vmem:[%s3003 + $0x50] sm:$0xf] %vm1060, %v2948
        %3025 = vst.msk [vmem:[%s3003 + $0x54] sm:$0xf] %vm1060, %v2950
        %3026 = vst.msk [vmem:[%s3003 + $0x58] sm:$0xf] %vm1060, %v2952
        %3027 = vst.msk [vmem:[%s3003 + $0x5c] sm:$0xf] %vm1060, %v2954
        %3028 = vst.msk [vmem:[%s3003 + $0x60] sm:$0xf] %vm1060, %v2956
        %3029 = vst.msk [vmem:[%s3003 + $0x64] sm:$0xf] %vm1060, %v2958
        %3030 = vst.msk [vmem:[%s3003 + $0x68] sm:$0xf] %vm1060, %v2960
        %3031 = vst.msk [vmem:[%s3003 + $0x6c] sm:$0xf] %vm1060, %v2962
        %3032 = vst.msk [vmem:[%s3003 + $0x70] sm:$0xf] %vm1060, %v2964
        %3033 = vst.msk [vmem:[%s3003 + $0x74] sm:$0xf] %vm1060, %v2966
        %3034 = vst.msk [vmem:[%s3003 + $0x78] sm:$0xf] %vm1060, %v2968
        %3035 = vst.msk [vmem:[%s3003 + $0x7c] sm:$0xf] %vm1060, %v2970
        %3036 = vrot.lane.b32.xlu0 %v2811, 64
        %v3037 = vpop.permute.xlu0 %3036
        %3038 = vrot.lane.b32.xlu0 %v2812, 64
        %v3039 = vpop.permute.xlu0 %3038
        %3040 = vrot.lane.b32.xlu0 %v2813, 64
        %v3041 = vpop.permute.xlu0 %3040
        %3042 = vrot.lane.b32.xlu0 %v2814, 64
        %v3043 = vpop.permute.xlu0 %3042
        %3044 = vrot.lane.b32.xlu0 %v2815, 64
        %v3045 = vpop.permute.xlu0 %3044
        %3046 = vrot.lane.b32.xlu0 %v2816, 64
        %v3047 = vpop.permute.xlu0 %3046
        %3048 = vrot.lane.b32.xlu0 %v2817, 64
        %v3049 = vpop.permute.xlu0 %3048
        %3050 = vrot.lane.b32.xlu0 %v2818, 64
        %v3051 = vpop.permute.xlu0 %3050
        %3052 = vrot.lane.b32.xlu0 %v2819, 64
        %v3053 = vpop.permute.xlu0 %3052
        %3054 = vrot.lane.b32.xlu0 %v2820, 64
        %v3055 = vpop.permute.xlu0 %3054
        %3056 = vrot.lane.b32.xlu0 %v2821, 64
        %v3057 = vpop.permute.xlu0 %3056
        %3058 = vrot.lane.b32.xlu0 %v2822, 64
        %v3059 = vpop.permute.xlu0 %3058
        %3060 = vrot.lane.b32.xlu0 %v2823, 64
        %v3061 = vpop.permute.xlu0 %3060
        %3062 = vrot.lane.b32.xlu0 %v2824, 64
        %v3063 = vpop.permute.xlu0 %3062
        %3064 = vrot.lane.b32.xlu0 %v2825, 64
        %v3065 = vpop.permute.xlu0 %3064
        %3066 = vrot.lane.b32.xlu0 %v2826, 64
        %v3067 = vpop.permute.xlu0 %3066
        %3068 = vrot.lane.b32.xlu0 %v2827, 64
        %v3069 = vpop.permute.xlu0 %3068
        %3070 = vrot.lane.b32.xlu0 %v2828, 64
        %v3071 = vpop.permute.xlu0 %3070
        %3072 = vrot.lane.b32.xlu0 %v2829, 64
        %v3073 = vpop.permute.xlu0 %3072
        %3074 = vrot.lane.b32.xlu0 %v2830, 64
        %v3075 = vpop.permute.xlu0 %3074
        %3076 = vrot.lane.b32.xlu0 %v2831, 64
        %v3077 = vpop.permute.xlu0 %3076
        %3078 = vrot.lane.b32.xlu0 %v2832, 64
        %v3079 = vpop.permute.xlu0 %3078
        %3080 = vrot.lane.b32.xlu0 %v2833, 64
        %v3081 = vpop.permute.xlu0 %3080
        %3082 = vrot.lane.b32.xlu0 %v2834, 64
        %v3083 = vpop.permute.xlu0 %3082
        %3084 = vrot.lane.b32.xlu0 %v2835, 64
        %v3085 = vpop.permute.xlu0 %3084
        %3086 = vrot.lane.b32.xlu0 %v2836, 64
        %v3087 = vpop.permute.xlu0 %3086
        %3088 = vrot.lane.b32.xlu0 %v2837, 64
        %v3089 = vpop.permute.xlu0 %3088
        %3090 = vrot.lane.b32.xlu0 %v2838, 64
        %v3091 = vpop.permute.xlu0 %3090
        %3092 = vrot.lane.b32.xlu0 %v2839, 64
        %v3093 = vpop.permute.xlu0 %3092
        %3094 = vrot.lane.b32.xlu0 %v2840, 64
        %v3095 = vpop.permute.xlu0 %3094
        %3096 = vrot.lane.b32.xlu0 %v2841, 64
        %v3097 = vpop.permute.xlu0 %3096
        %3098 = vrot.lane.b32.xlu0 %v2842, 64
        %v3099 = vpop.permute.xlu0 %3098
        %s3132 = scalar_lea.vmem %s564, 256 [#allocation14]
        %3133 = vst.msk [vmem:[%s3132] sm:$0xf] %vm1060, %v3037
        %3134 = vst.msk [vmem:[%s3132 + $0x4] sm:$0xf] %vm1060, %v3039
        %3135 = vst.msk [vmem:[%s3132 + $0x8] sm:$0xf] %vm1060, %v3041
        %3136 = vst.msk [vmem:[%s3132 + $0xc] sm:$0xf] %vm1060, %v3043
        %3137 = vst.msk [vmem:[%s3132 + $0x10] sm:$0xf] %vm1060, %v3045
        %3138 = vst.msk [vmem:[%s3132 + $0x14] sm:$0xf] %vm1060, %v3047
        %3139 = vst.msk [vmem:[%s3132 + $0x18] sm:$0xf] %vm1060, %v3049
        %3140 = vst.msk [vmem:[%s3132 + $0x1c] sm:$0xf] %vm1060, %v3051
        %3141 = vst.msk [vmem:[%s3132 + $0x20] sm:$0xf] %vm1060, %v3053
        %3142 = vst.msk [vmem:[%s3132 + $0x24] sm:$0xf] %vm1060, %v3055
        %3143 = vst.msk [vmem:[%s3132 + $0x28] sm:$0xf] %vm1060, %v3057
        %3144 = vst.msk [vmem:[%s3132 + $0x2c] sm:$0xf] %vm1060, %v3059
        %3145 = vst.msk [vmem:[%s3132 + $0x30] sm:$0xf] %vm1060, %v3061
        %3146 = vst.msk [vmem:[%s3132 + $0x34] sm:$0xf] %vm1060, %v3063
        %3147 = vst.msk [vmem:[%s3132 + $0x38] sm:$0xf] %vm1060, %v3065
        %3148 = vst.msk [vmem:[%s3132 + $0x3c] sm:$0xf] %vm1060, %v3067
        %3149 = vst.msk [vmem:[%s3132 + $0x40] sm:$0xf] %vm1060, %v3069
        %3150 = vst.msk [vmem:[%s3132 + $0x44] sm:$0xf] %vm1060, %v3071
        %3151 = vst.msk [vmem:[%s3132 + $0x48] sm:$0xf] %vm1060, %v3073
        %3152 = vst.msk [vmem:[%s3132 + $0x4c] sm:$0xf] %vm1060, %v3075
        %3153 = vst.msk [vmem:[%s3132 + $0x50] sm:$0xf] %vm1060, %v3077
        %3154 = vst.msk [vmem:[%s3132 + $0x54] sm:$0xf] %vm1060, %v3079
        %3155 = vst.msk [vmem:[%s3132 + $0x58] sm:$0xf] %vm1060, %v3081
        %3156 = vst.msk [vmem:[%s3132 + $0x5c] sm:$0xf] %vm1060, %v3083
        %3157 = vst.msk [vmem:[%s3132 + $0x60] sm:$0xf] %vm1060, %v3085
        %3158 = vst.msk [vmem:[%s3132 + $0x64] sm:$0xf] %vm1060, %v3087
        %3159 = vst.msk [vmem:[%s3132 + $0x68] sm:$0xf] %vm1060, %v3089
        %3160 = vst.msk [vmem:[%s3132 + $0x6c] sm:$0xf] %vm1060, %v3091
        %3161 = vst.msk [vmem:[%s3132 + $0x70] sm:$0xf] %vm1060, %v3093
        %3162 = vst.msk [vmem:[%s3132 + $0x74] sm:$0xf] %vm1060, %v3095
        %3163 = vst.msk [vmem:[%s3132 + $0x78] sm:$0xf] %vm1060, %v3097
        %3164 = vst.msk [vmem:[%s3132 + $0x7c] sm:$0xf] %vm1060, %v3099
        %3165 = vrot.lane.b32.xlu0 %v2811, 32
        %v3166 = vpop.permute.xlu0 %3165
        %3167 = vrot.lane.b32.xlu0 %v2812, 32
        %v3168 = vpop.permute.xlu0 %3167
        %3169 = vrot.lane.b32.xlu0 %v2813, 32
        %v3170 = vpop.permute.xlu0 %3169
        %3171 = vrot.lane.b32.xlu0 %v2814, 32
        %v3172 = vpop.permute.xlu0 %3171
        %3173 = vrot.lane.b32.xlu0 %v2815, 32
        %v3174 = vpop.permute.xlu0 %3173
        %3175 = vrot.lane.b32.xlu0 %v2816, 32
        %v3176 = vpop.permute.xlu0 %3175
        %3177 = vrot.lane.b32.xlu0 %v2817, 32
        %v3178 = vpop.permute.xlu0 %3177
        %3179 = vrot.lane.b32.xlu0 %v2818, 32
        %v3180 = vpop.permute.xlu0 %3179
        %3181 = vrot.lane.b32.xlu0 %v2819, 32
        %v3182 = vpop.permute.xlu0 %3181
        %3183 = vrot.lane.b32.xlu0 %v2820, 32
        %v3184 = vpop.permute.xlu0 %3183
        %3185 = vrot.lane.b32.xlu0 %v2821, 32
        %v3186 = vpop.permute.xlu0 %3185
        %3187 = vrot.lane.b32.xlu0 %v2822, 32
        %v3188 = vpop.permute.xlu0 %3187
        %3189 = vrot.lane.b32.xlu0 %v2823, 32
        %v3190 = vpop.permute.xlu0 %3189
        %3191 = vrot.lane.b32.xlu0 %v2824, 32
        %v3192 = vpop.permute.xlu0 %3191
        %3193 = vrot.lane.b32.xlu0 %v2825, 32
        %v3194 = vpop.permute.xlu0 %3193
        %3195 = vrot.lane.b32.xlu0 %v2826, 32
        %v3196 = vpop.permute.xlu0 %3195
        %3197 = vrot.lane.b32.xlu0 %v2827, 32
        %v3198 = vpop.permute.xlu0 %3197
        %3199 = vrot.lane.b32.xlu0 %v2828, 32
        %v3200 = vpop.permute.xlu0 %3199
        %3201 = vrot.lane.b32.xlu0 %v2829, 32
        %v3202 = vpop.permute.xlu0 %3201
        %3203 = vrot.lane.b32.xlu0 %v2830, 32
        %v3204 = vpop.permute.xlu0 %3203
        %3205 = vrot.lane.b32.xlu0 %v2831, 32
        %v3206 = vpop.permute.xlu0 %3205
        %3207 = vrot.lane.b32.xlu0 %v2832, 32
        %v3208 = vpop.permute.xlu0 %3207
        %3209 = vrot.lane.b32.xlu0 %v2833, 32
        %v3210 = vpop.permute.xlu0 %3209
        %3211 = vrot.lane.b32.xlu0 %v2834, 32
        %v3212 = vpop.permute.xlu0 %3211
        %3213 = vrot.lane.b32.xlu0 %v2835, 32
        %v3214 = vpop.permute.xlu0 %3213
        %3215 = vrot.lane.b32.xlu0 %v2836, 32
        %v3216 = vpop.permute.xlu0 %3215
        %3217 = vrot.lane.b32.xlu0 %v2837, 32
        %v3218 = vpop.permute.xlu0 %3217
        %3219 = vrot.lane.b32.xlu0 %v2838, 32
        %v3220 = vpop.permute.xlu0 %3219
        %3221 = vrot.lane.b32.xlu0 %v2839, 32
        %v3222 = vpop.permute.xlu0 %3221
        %3223 = vrot.lane.b32.xlu0 %v2840, 32
        %v3224 = vpop.permute.xlu0 %3223
        %3225 = vrot.lane.b32.xlu0 %v2841, 32
        %v3226 = vpop.permute.xlu0 %3225
        %3227 = vrot.lane.b32.xlu0 %v2842, 32
        %v3228 = vpop.permute.xlu0 %3227
        %s3261 = scalar_lea.vmem %s564, 384 [#allocation14]
        %3262 = vst.msk [vmem:[%s3261] sm:$0xf] %vm1060, %v3166
        %3263 = vst.msk [vmem:[%s3261 + $0x4] sm:$0xf] %vm1060, %v3168
        %3264 = vst.msk [vmem:[%s3261 + $0x8] sm:$0xf] %vm1060, %v3170
        %3265 = vst.msk [vmem:[%s3261 + $0xc] sm:$0xf] %vm1060, %v3172
        %3266 = vst.msk [vmem:[%s3261 + $0x10] sm:$0xf] %vm1060, %v3174
        %3267 = vst.msk [vmem:[%s3261 + $0x14] sm:$0xf] %vm1060, %v3176
        %3268 = vst.msk [vmem:[%s3261 + $0x18] sm:$0xf] %vm1060, %v3178
        %3269 = vst.msk [vmem:[%s3261 + $0x1c] sm:$0xf] %vm1060, %v3180
        %3270 = vst.msk [vmem:[%s3261 + $0x20] sm:$0xf] %vm1060, %v3182
        %3271 = vst.msk [vmem:[%s3261 + $0x24] sm:$0xf] %vm1060, %v3184
        %3272 = vst.msk [vmem:[%s3261 + $0x28] sm:$0xf] %vm1060, %v3186
        %3273 = vst.msk [vmem:[%s3261 + $0x2c] sm:$0xf] %vm1060, %v3188
        %3274 = vst.msk [vmem:[%s3261 + $0x30] sm:$0xf] %vm1060, %v3190
        %3275 = vst.msk [vmem:[%s3261 + $0x34] sm:$0xf] %vm1060, %v3192
        %3276 = vst.msk [vmem:[%s3261 + $0x38] sm:$0xf] %vm1060, %v3194
        %3277 = vst.msk [vmem:[%s3261 + $0x3c] sm:$0xf] %vm1060, %v3196
        %3278 = vst.msk [vmem:[%s3261 + $0x40] sm:$0xf] %vm1060, %v3198
        %3279 = vst.msk [vmem:[%s3261 + $0x44] sm:$0xf] %vm1060, %v3200
        %3280 = vst.msk [vmem:[%s3261 + $0x48] sm:$0xf] %vm1060, %v3202
        %3281 = vst.msk [vmem:[%s3261 + $0x4c] sm:$0xf] %vm1060, %v3204
        %3282 = vst.msk [vmem:[%s3261 + $0x50] sm:$0xf] %vm1060, %v3206
        %3283 = vst.msk [vmem:[%s3261 + $0x54] sm:$0xf] %vm1060, %v3208
        %3284 = vst.msk [vmem:[%s3261 + $0x58] sm:$0xf] %vm1060, %v3210
        %3285 = vst.msk [vmem:[%s3261 + $0x5c] sm:$0xf] %vm1060, %v3212
        %3286 = vst.msk [vmem:[%s3261 + $0x60] sm:$0xf] %vm1060, %v3214
        %3287 = vst.msk [vmem:[%s3261 + $0x64] sm:$0xf] %vm1060, %v3216
        %3288 = vst.msk [vmem:[%s3261 + $0x68] sm:$0xf] %vm1060, %v3218
        %3289 = vst.msk [vmem:[%s3261 + $0x6c] sm:$0xf] %vm1060, %v3220
        %3290 = vst.msk [vmem:[%s3261 + $0x70] sm:$0xf] %vm1060, %v3222
        %3291 = vst.msk [vmem:[%s3261 + $0x74] sm:$0xf] %vm1060, %v3224
        %3292 = vst.msk [vmem:[%s3261 + $0x78] sm:$0xf] %vm1060, %v3226
        %3293 = vst.msk [vmem:[%s3261 + $0x7c] sm:$0xf] %vm1060, %v3228
        %s3294 = sand.u32 %s263, 1
        %s3295 = sand.u32 %s263, 1
        %s3296 = smul.addr %s3295, 512
        %s3297 = scalar_lea.vmem [#allocation12], %s3296
        %s3298 = sand.u32 %s291, 1
        %s3299 = sand.u32 %s291, 1
        %s3300 = smul.addr %s3299, 512
        %s3301 = scalar_lea.vmem [#allocation13], %s3300
        %s3302 = sand.u32 %s319, 1
        %s3303 = sand.u32 %s319, 1
        %s3304 = smul.addr %s3303, 512
        %s3305 = scalar_lea.vmem [#allocation14], %s3304
        // Predicated region
        $region81: #{tpu_custom_call.1} parent=55 // pred_check
          %p3306 = pneg %p273
        $region82: #{tpu_custom_call.1} parent=55 // pred_check_branch
          %3308 = sbr.rel (%p3306) target = $region84
        $region83: #{tpu_custom_call.1} parent=55 // pred_region
          %s3309 = smul.u32 32, %s36
          %s3310 = smul.addr %s35, 256
          %s3311 = sadd.s32 %s3309, %s3310
          %s3312 = smul.addr %s3311, 4
          %s3313 = scalar_lea.vmem %s9, %s3312
          // Predicated region
          $region85: #{tpu_custom_call.1} parent=83 // pred_check
            _
          $region86: #{tpu_custom_call.1} parent=83 // pred_check_branch
            %3315 = sbr.rel (0) target = $region88
          $region87: #{tpu_custom_call.1} parent=83 // pred_region
            // Predicated region
            $region89: #{tpu_custom_call.1} parent=87 // pred_check
              _
            $region90: #{tpu_custom_call.1} parent=87 // pred_check_branch
              %3317 = sbr.rel target = $region92
            $region91: #{tpu_custom_call.1} parent=87 // pred_region
              // Predicated region
              $region104: #{tpu_custom_call.1} parent=91 // pred_check
                _
              $region105: #{tpu_custom_call.1} parent=91 // pred_check_branch
                %3587 = sbr.rel (0) target = $region107
              $region106: #{tpu_custom_call.1} parent=91 // pred_region
                loop: start=0, step=1, limit=1
                $region108: #{tpu_custom_call.1} parent=106 // loop_pre_header
                  _
                $region109: #{tpu_custom_call.1} parent=106 // loop_header
                  %s3589 = sphi 0, %s3593
                  %p3590 = scmp.ge.s32.totalorder %s3589, 1
                  %s3594 = sphi %s3297, %s3297
                  %s3595 = sphi %s3313, %s3313
                $region110: #{tpu_custom_call.1} parent=106 // loop_header_branch
                  %3592 = sbr.rel (%p3590) target = $region114
                $region111: #{tpu_custom_call.1} parent=106 // loop_body
                  _
                $region112: #{tpu_custom_call.1} parent=106 // loop_footer
                  %s3593 = sadd.s32 1, %s3589
                $region113: #{tpu_custom_call.1} parent=106 // loop_footer_branch
                  %3588 = sbr.rel target = $region109
                $region114: #{tpu_custom_call.1} parent=106 // loop_exit
                  _
                %s3597 = ssub.s32 16, 1
                loop: start=0, step=1, limit=1
                $region115: #{tpu_custom_call.1} parent=106 // loop_pre_header
                  _
                $region116: #{tpu_custom_call.1} parent=106 // loop_header
                  %s3599 = sphi 0, %s3603
                  %p3600 = scmp.ge.s32.totalorder %s3599, 1
                  %s3604 = sphi %s3297, %s3297
                  %s3605 = sphi %s3313, %s3313
                $region117: #{tpu_custom_call.1} parent=106 // loop_header_branch
                  %3602 = sbr.rel (%p3600) target = $region121
                $region118: #{tpu_custom_call.1} parent=106 // loop_body
                  %v3606 = vld [vmem:[%s3604] sm:%s3597]
                  %3607 = vst [vmem:[%s3605] sm:%s3597] %v3606
                  %v3608 = vld [vmem:[%s3604 + $0x4] sm:%s3597]
                  %3609 = vst [vmem:[%s3605 + $0x4] sm:%s3597] %v3608
                  %v3610 = vld [vmem:[%s3604 + $0x8] sm:%s3597]
                  %3611 = vst [vmem:[%s3605 + $0x8] sm:%s3597] %v3610
                  %v3612 = vld [vmem:[%s3604 + $0xc] sm:%s3597]
                  %3613 = vst [vmem:[%s3605 + $0xc] sm:%s3597] %v3612
                  %v3614 = vld [vmem:[%s3604 + $0x10] sm:%s3597]
                  %3615 = vst [vmem:[%s3605 + $0x10] sm:%s3597] %v3614
                  %v3616 = vld [vmem:[%s3604 + $0x14] sm:%s3597]
                  %3617 = vst [vmem:[%s3605 + $0x14] sm:%s3597] %v3616
                  %v3618 = vld [vmem:[%s3604 + $0x18] sm:%s3597]
                  %3619 = vst [vmem:[%s3605 + $0x18] sm:%s3597] %v3618
                  %v3620 = vld [vmem:[%s3604 + $0x1c] sm:%s3597]
                  %3621 = vst [vmem:[%s3605 + $0x1c] sm:%s3597] %v3620
                  %v3622 = vld [vmem:[%s3604 + $0x20] sm:%s3597]
                  %3623 = vst [vmem:[%s3605 + $0x20] sm:%s3597] %v3622
                  %v3624 = vld [vmem:[%s3604 + $0x24] sm:%s3597]
                  %3625 = vst [vmem:[%s3605 + $0x24] sm:%s3597] %v3624
                  %v3626 = vld [vmem:[%s3604 + $0x28] sm:%s3597]
                  %3627 = vst [vmem:[%s3605 + $0x28] sm:%s3597] %v3626
                  %v3628 = vld [vmem:[%s3604 + $0x2c] sm:%s3597]
                  %3629 = vst [vmem:[%s3605 + $0x2c] sm:%s3597] %v3628
                  %v3630 = vld [vmem:[%s3604 + $0x30] sm:%s3597]
                  %3631 = vst [vmem:[%s3605 + $0x30] sm:%s3597] %v3630
                  %v3632 = vld [vmem:[%s3604 + $0x34] sm:%s3597]
                  %3633 = vst [vmem:[%s3605 + $0x34] sm:%s3597] %v3632
                  %v3634 = vld [vmem:[%s3604 + $0x38] sm:%s3597]
                  %3635 = vst [vmem:[%s3605 + $0x38] sm:%s3597] %v3634
                  %v3636 = vld [vmem:[%s3604 + $0x3c] sm:%s3597]
                  %3637 = vst [vmem:[%s3605 + $0x3c] sm:%s3597] %v3636
                  %v3638 = vld [vmem:[%s3604 + $0x40] sm:%s3597]
                  %3639 = vst [vmem:[%s3605 + $0x40] sm:%s3597] %v3638
                  %v3640 = vld [vmem:[%s3604 + $0x44] sm:%s3597]
                  %3641 = vst [vmem:[%s3605 + $0x44] sm:%s3597] %v3640
                  %v3642 = vld [vmem:[%s3604 + $0x48] sm:%s3597]
                  %3643 = vst [vmem:[%s3605 + $0x48] sm:%s3597] %v3642
                  %v3644 = vld [vmem:[%s3604 + $0x4c] sm:%s3597]
                  %3645 = vst [vmem:[%s3605 + $0x4c] sm:%s3597] %v3644
                  %v3646 = vld [vmem:[%s3604 + $0x50] sm:%s3597]
                  %3647 = vst [vmem:[%s3605 + $0x50] sm:%s3597] %v3646
                  %v3648 = vld [vmem:[%s3604 + $0x54] sm:%s3597]
                  %3649 = vst [vmem:[%s3605 + $0x54] sm:%s3597] %v3648
                  %v3650 = vld [vmem:[%s3604 + $0x58] sm:%s3597]
                  %3651 = vst [vmem:[%s3605 + $0x58] sm:%s3597] %v3650
                  %v3652 = vld [vmem:[%s3604 + $0x5c] sm:%s3597]
                  %3653 = vst [vmem:[%s3605 + $0x5c] sm:%s3597] %v3652
                  %v3654 = vld [vmem:[%s3604 + $0x60] sm:%s3597]
                  %3655 = vst [vmem:[%s3605 + $0x60] sm:%s3597] %v3654
                  %v3656 = vld [vmem:[%s3604 + $0x64] sm:%s3597]
                  %3657 = vst [vmem:[%s3605 + $0x64] sm:%s3597] %v3656
                  %v3658 = vld [vmem:[%s3604 + $0x68] sm:%s3597]
                  %3659 = vst [vmem:[%s3605 + $0x68] sm:%s3597] %v3658
                  %v3660 = vld [vmem:[%s3604 + $0x6c] sm:%s3597]
                  %3661 = vst [vmem:[%s3605 + $0x6c] sm:%s3597] %v3660
                  %v3662 = vld [vmem:[%s3604 + $0x70] sm:%s3597]
                  %3663 = vst [vmem:[%s3605 + $0x70] sm:%s3597] %v3662
                  %v3664 = vld [vmem:[%s3604 + $0x74] sm:%s3597]
                  %3665 = vst [vmem:[%s3605 + $0x74] sm:%s3597] %v3664
                  %v3666 = vld [vmem:[%s3604 + $0x78] sm:%s3597]
                  %3667 = vst [vmem:[%s3605 + $0x78] sm:%s3597] %v3666
                  %v3668 = vld [vmem:[%s3604 + $0x7c] sm:%s3597]
                  %3669 = vst [vmem:[%s3605 + $0x7c] sm:%s3597] %v3668
                  %v3670 = vld [vmem:[%s3604 + $0x80] sm:%s3597]
                  %3671 = vst [vmem:[%s3605 + $0x100] sm:%s3597] %v3670
                  %v3672 = vld [vmem:[%s3604 + $0x84] sm:%s3597]
                  %3673 = vst [vmem:[%s3605 + $0x104] sm:%s3597] %v3672
                  %v3674 = vld [vmem:[%s3604 + $0x88] sm:%s3597]
                  %3675 = vst [vmem:[%s3605 + $0x108] sm:%s3597] %v3674
                  %v3676 = vld [vmem:[%s3604 + $0x8c] sm:%s3597]
                  %3677 = vst [vmem:[%s3605 + $0x10c] sm:%s3597] %v3676
                  %v3678 = vld [vmem:[%s3604 + $0x90] sm:%s3597]
                  %3679 = vst [vmem:[%s3605 + $0x110] sm:%s3597] %v3678
                  %v3680 = vld [vmem:[%s3604 + $0x94] sm:%s3597]
                  %3681 = vst [vmem:[%s3605 + $0x114] sm:%s3597] %v3680
                  %v3682 = vld [vmem:[%s3604 + $0x98] sm:%s3597]
                  %3683 = vst [vmem:[%s3605 + $0x118] sm:%s3597] %v3682
                  %v3684 = vld [vmem:[%s3604 + $0x9c] sm:%s3597]
                  %3685 = vst [vmem:[%s3605 + $0x11c] sm:%s3597] %v3684
                  %v3686 = vld [vmem:[%s3604 + $0xa0] sm:%s3597]
                  %3687 = vst [vmem:[%s3605 + $0x120] sm:%s3597] %v3686
                  %v3688 = vld [vmem:[%s3604 + $0xa4] sm:%s3597]
                  %3689 = vst [vmem:[%s3605 + $0x124] sm:%s3597] %v3688
                  %v3690 = vld [vmem:[%s3604 + $0xa8] sm:%s3597]
                  %3691 = vst [vmem:[%s3605 + $0x128] sm:%s3597] %v3690
                  %v3692 = vld [vmem:[%s3604 + $0xac] sm:%s3597]
                  %3693 = vst [vmem:[%s3605 + $0x12c] sm:%s3597] %v3692
                  %v3694 = vld [vmem:[%s3604 + $0xb0] sm:%s3597]
                  %3695 = vst [vmem:[%s3605 + $0x130] sm:%s3597] %v3694
                  %v3696 = vld [vmem:[%s3604 + $0xb4] sm:%s3597]
                  %3697 = vst [vmem:[%s3605 + $0x134] sm:%s3597] %v3696
                  %v3698 = vld [vmem:[%s3604 + $0xb8] sm:%s3597]
                  %3699 = vst [vmem:[%s3605 + $0x138] sm:%s3597] %v3698
                  %v3700 = vld [vmem:[%s3604 + $0xbc] sm:%s3597]
                  %3701 = vst [vmem:[%s3605 + $0x13c] sm:%s3597] %v3700
                  %v3702 = vld [vmem:[%s3604 + $0xc0] sm:%s3597]
                  %3703 = vst [vmem:[%s3605 + $0x140] sm:%s3597] %v3702
                  %v3704 = vld [vmem:[%s3604 + $0xc4] sm:%s3597]
                  %3705 = vst [vmem:[%s3605 + $0x144] sm:%s3597] %v3704
                  %v3706 = vld [vmem:[%s3604 + $0xc8] sm:%s3597]
                  %3707 = vst [vmem:[%s3605 + $0x148] sm:%s3597] %v3706
                  %v3708 = vld [vmem:[%s3604 + $0xcc] sm:%s3597]
                  %3709 = vst [vmem:[%s3605 + $0x14c] sm:%s3597] %v3708
                  %v3710 = vld [vmem:[%s3604 + $0xd0] sm:%s3597]
                  %3711 = vst [vmem:[%s3605 + $0x150] sm:%s3597] %v3710
                  %v3712 = vld [vmem:[%s3604 + $0xd4] sm:%s3597]
                  %3713 = vst [vmem:[%s3605 + $0x154] sm:%s3597] %v3712
                  %v3714 = vld [vmem:[%s3604 + $0xd8] sm:%s3597]
                  %3715 = vst [vmem:[%s3605 + $0x158] sm:%s3597] %v3714
                  %v3716 = vld [vmem:[%s3604 + $0xdc] sm:%s3597]
                  %3717 = vst [vmem:[%s3605 + $0x15c] sm:%s3597] %v3716
                  %v3718 = vld [vmem:[%s3604 + $0xe0] sm:%s3597]
                  %3719 = vst [vmem:[%s3605 + $0x160] sm:%s3597] %v3718
                  %v3720 = vld [vmem:[%s3604 + $0xe4] sm:%s3597]
                  %3721 = vst [vmem:[%s3605 + $0x164] sm:%s3597] %v3720
                  %v3722 = vld [vmem:[%s3604 + $0xe8] sm:%s3597]
                  %3723 = vst [vmem:[%s3605 + $0x168] sm:%s3597] %v3722
                  %v3724 = vld [vmem:[%s3604 + $0xec] sm:%s3597]
                  %3725 = vst [vmem:[%s3605 + $0x16c] sm:%s3597] %v3724
                  %v3726 = vld [vmem:[%s3604 + $0xf0] sm:%s3597]
                  %3727 = vst [vmem:[%s3605 + $0x170] sm:%s3597] %v3726
                  %v3728 = vld [vmem:[%s3604 + $0xf4] sm:%s3597]
                  %3729 = vst [vmem:[%s3605 + $0x174] sm:%s3597] %v3728
                  %v3730 = vld [vmem:[%s3604 + $0xf8] sm:%s3597]
                  %3731 = vst [vmem:[%s3605 + $0x178] sm:%s3597] %v3730
                  %v3732 = vld [vmem:[%s3604 + $0xfc] sm:%s3597]
                  %3733 = vst [vmem:[%s3605 + $0x17c] sm:%s3597] %v3732
                  %v3734 = vld [vmem:[%s3604 + $0x100] sm:%s3597]
                  %3735 = vst [vmem:[%s3605 + $0x200] sm:%s3597] %v3734
                  %v3736 = vld [vmem:[%s3604 + $0x104] sm:%s3597]
                  %3737 = vst [vmem:[%s3605 + $0x204] sm:%s3597] %v3736
                  %v3738 = vld [vmem:[%s3604 + $0x108] sm:%s3597]
                  %3739 = vst [vmem:[%s3605 + $0x208] sm:%s3597] %v3738
                  %v3740 = vld [vmem:[%s3604 + $0x10c] sm:%s3597]
                  %3741 = vst [vmem:[%s3605 + $0x20c] sm:%s3597] %v3740
                  %v3742 = vld [vmem:[%s3604 + $0x110] sm:%s3597]
                  %3743 = vst [vmem:[%s3605 + $0x210] sm:%s3597] %v3742
                  %v3744 = vld [vmem:[%s3604 + $0x114] sm:%s3597]
                  %3745 = vst [vmem:[%s3605 + $0x214] sm:%s3597] %v3744
                  %v3746 = vld [vmem:[%s3604 + $0x118] sm:%s3597]
                  %3747 = vst [vmem:[%s3605 + $0x218] sm:%s3597] %v3746
                  %v3748 = vld [vmem:[%s3604 + $0x11c] sm:%s3597]
                  %3749 = vst [vmem:[%s3605 + $0x21c] sm:%s3597] %v3748
                  %v3750 = vld [vmem:[%s3604 + $0x120] sm:%s3597]
                  %3751 = vst [vmem:[%s3605 + $0x220] sm:%s3597] %v3750
                  %v3752 = vld [vmem:[%s3604 + $0x124] sm:%s3597]
                  %3753 = vst [vmem:[%s3605 + $0x224] sm:%s3597] %v3752
                  %v3754 = vld [vmem:[%s3604 + $0x128] sm:%s3597]
                  %3755 = vst [vmem:[%s3605 + $0x228] sm:%s3597] %v3754
                  %v3756 = vld [vmem:[%s3604 + $0x12c] sm:%s3597]
                  %3757 = vst [vmem:[%s3605 + $0x22c] sm:%s3597] %v3756
                  %v3758 = vld [vmem:[%s3604 + $0x130] sm:%s3597]
                  %3759 = vst [vmem:[%s3605 + $0x230] sm:%s3597] %v3758
                  %v3760 = vld [vmem:[%s3604 + $0x134] sm:%s3597]
                  %3761 = vst [vmem:[%s3605 + $0x234] sm:%s3597] %v3760
                  %v3762 = vld [vmem:[%s3604 + $0x138] sm:%s3597]
                  %3763 = vst [vmem:[%s3605 + $0x238] sm:%s3597] %v3762
                  %v3764 = vld [vmem:[%s3604 + $0x13c] sm:%s3597]
                  %3765 = vst [vmem:[%s3605 + $0x23c] sm:%s3597] %v3764
                  %v3766 = vld [vmem:[%s3604 + $0x140] sm:%s3597]
                  %3767 = vst [vmem:[%s3605 + $0x240] sm:%s3597] %v3766
                  %v3768 = vld [vmem:[%s3604 + $0x144] sm:%s3597]
                  %3769 = vst [vmem:[%s3605 + $0x244] sm:%s3597] %v3768
                  %v3770 = vld [vmem:[%s3604 + $0x148] sm:%s3597]
                  %3771 = vst [vmem:[%s3605 + $0x248] sm:%s3597] %v3770
                  %v3772 = vld [vmem:[%s3604 + $0x14c] sm:%s3597]
                  %3773 = vst [vmem:[%s3605 + $0x24c] sm:%s3597] %v3772
                  %v3774 = vld [vmem:[%s3604 + $0x150] sm:%s3597]
                  %3775 = vst [vmem:[%s3605 + $0x250] sm:%s3597] %v3774
                  %v3776 = vld [vmem:[%s3604 + $0x154] sm:%s3597]
                  %3777 = vst [vmem:[%s3605 + $0x254] sm:%s3597] %v3776
                  %v3778 = vld [vmem:[%s3604 + $0x158] sm:%s3597]
                  %3779 = vst [vmem:[%s3605 + $0x258] sm:%s3597] %v3778
                  %v3780 = vld [vmem:[%s3604 + $0x15c] sm:%s3597]
                  %3781 = vst [vmem:[%s3605 + $0x25c] sm:%s3597] %v3780
                  %v3782 = vld [vmem:[%s3604 + $0x160] sm:%s3597]
                  %3783 = vst [vmem:[%s3605 + $0x260] sm:%s3597] %v3782
                  %v3784 = vld [vmem:[%s3604 + $0x164] sm:%s3597]
                  %3785 = vst [vmem:[%s3605 + $0x264] sm:%s3597] %v3784
                  %v3786 = vld [vmem:[%s3604 + $0x168] sm:%s3597]
                  %3787 = vst [vmem:[%s3605 + $0x268] sm:%s3597] %v3786
                  %v3788 = vld [vmem:[%s3604 + $0x16c] sm:%s3597]
                  %3789 = vst [vmem:[%s3605 + $0x26c] sm:%s3597] %v3788
                  %v3790 = vld [vmem:[%s3604 + $0x170] sm:%s3597]
                  %3791 = vst [vmem:[%s3605 + $0x270] sm:%s3597] %v3790
                  %v3792 = vld [vmem:[%s3604 + $0x174] sm:%s3597]
                  %3793 = vst [vmem:[%s3605 + $0x274] sm:%s3597] %v3792
                  %v3794 = vld [vmem:[%s3604 + $0x178] sm:%s3597]
                  %3795 = vst [vmem:[%s3605 + $0x278] sm:%s3597] %v3794
                  %v3796 = vld [vmem:[%s3604 + $0x17c] sm:%s3597]
                  %3797 = vst [vmem:[%s3605 + $0x27c] sm:%s3597] %v3796
                  %v3798 = vld [vmem:[%s3604 + $0x180] sm:%s3597]
                  %3799 = vst [vmem:[%s3605 + $0x300] sm:%s3597] %v3798
                  %v3800 = vld [vmem:[%s3604 + $0x184] sm:%s3597]
                  %3801 = vst [vmem:[%s3605 + $0x304] sm:%s3597] %v3800
                  %v3802 = vld [vmem:[%s3604 + $0x188] sm:%s3597]
                  %3803 = vst [vmem:[%s3605 + $0x308] sm:%s3597] %v3802
                  %v3804 = vld [vmem:[%s3604 + $0x18c] sm:%s3597]
                  %3805 = vst [vmem:[%s3605 + $0x30c] sm:%s3597] %v3804
                  %v3806 = vld [vmem:[%s3604 + $0x190] sm:%s3597]
                  %3807 = vst [vmem:[%s3605 + $0x310] sm:%s3597] %v3806
                  %v3808 = vld [vmem:[%s3604 + $0x194] sm:%s3597]
                  %3809 = vst [vmem:[%s3605 + $0x314] sm:%s3597] %v3808
                  %v3810 = vld [vmem:[%s3604 + $0x198] sm:%s3597]
                  %3811 = vst [vmem:[%s3605 + $0x318] sm:%s3597] %v3810
                  %v3812 = vld [vmem:[%s3604 + $0x19c] sm:%s3597]
                  %3813 = vst [vmem:[%s3605 + $0x31c] sm:%s3597] %v3812
                  %v3814 = vld [vmem:[%s3604 + $0x1a0] sm:%s3597]
                  %3815 = vst [vmem:[%s3605 + $0x320] sm:%s3597] %v3814
                  %v3816 = vld [vmem:[%s3604 + $0x1a4] sm:%s3597]
                  %3817 = vst [vmem:[%s3605 + $0x324] sm:%s3597] %v3816
                  %v3818 = vld [vmem:[%s3604 + $0x1a8] sm:%s3597]
                  %3819 = vst [vmem:[%s3605 + $0x328] sm:%s3597] %v3818
                  %v3820 = vld [vmem:[%s3604 + $0x1ac] sm:%s3597]
                  %3821 = vst [vmem:[%s3605 + $0x32c] sm:%s3597] %v3820
                  %v3822 = vld [vmem:[%s3604 + $0x1b0] sm:%s3597]
                  %3823 = vst [vmem:[%s3605 + $0x330] sm:%s3597] %v3822
                  %v3824 = vld [vmem:[%s3604 + $0x1b4] sm:%s3597]
                  %3825 = vst [vmem:[%s3605 + $0x334] sm:%s3597] %v3824
                  %v3826 = vld [vmem:[%s3604 + $0x1b8] sm:%s3597]
                  %3827 = vst [vmem:[%s3605 + $0x338] sm:%s3597] %v3826
                  %v3828 = vld [vmem:[%s3604 + $0x1bc] sm:%s3597]
                  %3829 = vst [vmem:[%s3605 + $0x33c] sm:%s3597] %v3828
                  %v3830 = vld [vmem:[%s3604 + $0x1c0] sm:%s3597]
                  %3831 = vst [vmem:[%s3605 + $0x340] sm:%s3597] %v3830
                  %v3832 = vld [vmem:[%s3604 + $0x1c4] sm:%s3597]
                  %3833 = vst [vmem:[%s3605 + $0x344] sm:%s3597] %v3832
                  %v3834 = vld [vmem:[%s3604 + $0x1c8] sm:%s3597]
                  %3835 = vst [vmem:[%s3605 + $0x348] sm:%s3597] %v3834
                  %v3836 = vld [vmem:[%s3604 + $0x1cc] sm:%s3597]
                  %3837 = vst [vmem:[%s3605 + $0x34c] sm:%s3597] %v3836
                  %v3838 = vld [vmem:[%s3604 + $0x1d0] sm:%s3597]
                  %3839 = vst [vmem:[%s3605 + $0x350] sm:%s3597] %v3838
                  %v3840 = vld [vmem:[%s3604 + $0x1d4] sm:%s3597]
                  %3841 = vst [vmem:[%s3605 + $0x354] sm:%s3597] %v3840
                  %v3842 = vld [vmem:[%s3604 + $0x1d8] sm:%s3597]
                  %3843 = vst [vmem:[%s3605 + $0x358] sm:%s3597] %v3842
                  %v3844 = vld [vmem:[%s3604 + $0x1dc] sm:%s3597]
                  %3845 = vst [vmem:[%s3605 + $0x35c] sm:%s3597] %v3844
                  %v3846 = vld [vmem:[%s3604 + $0x1e0] sm:%s3597]
                  %3847 = vst [vmem:[%s3605 + $0x360] sm:%s3597] %v3846
                  %v3848 = vld [vmem:[%s3604 + $0x1e4] sm:%s3597]
                  %3849 = vst [vmem:[%s3605 + $0x364] sm:%s3597] %v3848
                  %v3850 = vld [vmem:[%s3604 + $0x1e8] sm:%s3597]
                  %3851 = vst [vmem:[%s3605 + $0x368] sm:%s3597] %v3850
                  %v3852 = vld [vmem:[%s3604 + $0x1ec] sm:%s3597]
                  %3853 = vst [vmem:[%s3605 + $0x36c] sm:%s3597] %v3852
                  %v3854 = vld [vmem:[%s3604 + $0x1f0] sm:%s3597]
                  %3855 = vst [vmem:[%s3605 + $0x370] sm:%s3597] %v3854
                  %v3856 = vld [vmem:[%s3604 + $0x1f4] sm:%s3597]
                  %3857 = vst [vmem:[%s3605 + $0x374] sm:%s3597] %v3856
                  %v3858 = vld [vmem:[%s3604 + $0x1f8] sm:%s3597]
                  %3859 = vst [vmem:[%s3605 + $0x378] sm:%s3597] %v3858
                  %v3860 = vld [vmem:[%s3604 + $0x1fc] sm:%s3597]
                  %3861 = vst [vmem:[%s3605 + $0x37c] sm:%s3597] %v3860
                $region119: #{tpu_custom_call.1} parent=106 // loop_footer
                  %s3603 = sadd.s32 1, %s3599
                $region120: #{tpu_custom_call.1} parent=106 // loop_footer_branch
                  %3598 = sbr.rel target = $region116
                $region121: #{tpu_custom_call.1} parent=106 // loop_exit
                  _
              $region107: #{tpu_custom_call.1} parent=91 // pred_fallthru
                _
            $region92: #{tpu_custom_call.1} parent=87 // pred_fallthru
              _
            // Predicated region
            $region93: #{tpu_custom_call.1} parent=87 // pred_check
              _
            $region94: #{tpu_custom_call.1} parent=87 // pred_check_branch
              %3319 = sbr.rel (0) target = $region96
            $region95: #{tpu_custom_call.1} parent=87 // pred_region
              %s3321 = ssub.s32 16, 1
              loop: start=0, step=1, limit=1
              $region97: #{tpu_custom_call.1} parent=95 // loop_pre_header
                _
              $region98: #{tpu_custom_call.1} parent=95 // loop_header
                %s3323 = sphi 0, %s3327
                %p3324 = scmp.ge.s32.totalorder %s3323, 1
                %s3328 = sphi %s3297, %s3297
                %s3329 = sphi %s3313, %s3313
              $region99: #{tpu_custom_call.1} parent=95 // loop_header_branch
                %3326 = sbr.rel (%p3324) target = $region103
              $region100: #{tpu_custom_call.1} parent=95 // loop_body
                %v3330 = vld [vmem:[%s3328] sm:%s3321]
                %3331 = vst [vmem:[%s3329] sm:%s3321] %v3330
                %v3332 = vld [vmem:[%s3328 + $0x4] sm:%s3321]
                %3333 = vst [vmem:[%s3329 + $0x4] sm:%s3321] %v3332
                %v3334 = vld [vmem:[%s3328 + $0x8] sm:%s3321]
                %3335 = vst [vmem:[%s3329 + $0x8] sm:%s3321] %v3334
                %v3336 = vld [vmem:[%s3328 + $0xc] sm:%s3321]
                %3337 = vst [vmem:[%s3329 + $0xc] sm:%s3321] %v3336
                %v3338 = vld [vmem:[%s3328 + $0x10] sm:%s3321]
                %3339 = vst [vmem:[%s3329 + $0x10] sm:%s3321] %v3338
                %v3340 = vld [vmem:[%s3328 + $0x14] sm:%s3321]
                %3341 = vst [vmem:[%s3329 + $0x14] sm:%s3321] %v3340
                %v3342 = vld [vmem:[%s3328 + $0x18] sm:%s3321]
                %3343 = vst [vmem:[%s3329 + $0x18] sm:%s3321] %v3342
                %v3344 = vld [vmem:[%s3328 + $0x1c] sm:%s3321]
                %3345 = vst [vmem:[%s3329 + $0x1c] sm:%s3321] %v3344
                %v3346 = vld [vmem:[%s3328 + $0x20] sm:%s3321]
                %3347 = vst [vmem:[%s3329 + $0x20] sm:%s3321] %v3346
                %v3348 = vld [vmem:[%s3328 + $0x24] sm:%s3321]
                %3349 = vst [vmem:[%s3329 + $0x24] sm:%s3321] %v3348
                %v3350 = vld [vmem:[%s3328 + $0x28] sm:%s3321]
                %3351 = vst [vmem:[%s3329 + $0x28] sm:%s3321] %v3350
                %v3352 = vld [vmem:[%s3328 + $0x2c] sm:%s3321]
                %3353 = vst [vmem:[%s3329 + $0x2c] sm:%s3321] %v3352
                %v3354 = vld [vmem:[%s3328 + $0x30] sm:%s3321]
                %3355 = vst [vmem:[%s3329 + $0x30] sm:%s3321] %v3354
                %v3356 = vld [vmem:[%s3328 + $0x34] sm:%s3321]
                %3357 = vst [vmem:[%s3329 + $0x34] sm:%s3321] %v3356
                %v3358 = vld [vmem:[%s3328 + $0x38] sm:%s3321]
                %3359 = vst [vmem:[%s3329 + $0x38] sm:%s3321] %v3358
                %v3360 = vld [vmem:[%s3328 + $0x3c] sm:%s3321]
                %3361 = vst [vmem:[%s3329 + $0x3c] sm:%s3321] %v3360
                %v3362 = vld [vmem:[%s3328 + $0x40] sm:%s3321]
                %3363 = vst [vmem:[%s3329 + $0x40] sm:%s3321] %v3362
                %v3364 = vld [vmem:[%s3328 + $0x44] sm:%s3321]
                %3365 = vst [vmem:[%s3329 + $0x44] sm:%s3321] %v3364
                %v3366 = vld [vmem:[%s3328 + $0x48] sm:%s3321]
                %3367 = vst [vmem:[%s3329 + $0x48] sm:%s3321] %v3366
                %v3368 = vld [vmem:[%s3328 + $0x4c] sm:%s3321]
                %3369 = vst [vmem:[%s3329 + $0x4c] sm:%s3321] %v3368
                %v3370 = vld [vmem:[%s3328 + $0x50] sm:%s3321]
                %3371 = vst [vmem:[%s3329 + $0x50] sm:%s3321] %v3370
                %v3372 = vld [vmem:[%s3328 + $0x54] sm:%s3321]
                %3373 = vst [vmem:[%s3329 + $0x54] sm:%s3321] %v3372
                %v3374 = vld [vmem:[%s3328 + $0x58] sm:%s3321]
                %3375 = vst [vmem:[%s3329 + $0x58] sm:%s3321] %v3374
                %v3376 = vld [vmem:[%s3328 + $0x5c] sm:%s3321]
                %3377 = vst [vmem:[%s3329 + $0x5c] sm:%s3321] %v3376
                %v3378 = vld [vmem:[%s3328 + $0x60] sm:%s3321]
                %3379 = vst [vmem:[%s3329 + $0x60] sm:%s3321] %v3378
                %v3380 = vld [vmem:[%s3328 + $0x64] sm:%s3321]
                %3381 = vst [vmem:[%s3329 + $0x64] sm:%s3321] %v3380
                %v3382 = vld [vmem:[%s3328 + $0x68] sm:%s3321]
                %3383 = vst [vmem:[%s3329 + $0x68] sm:%s3321] %v3382
                %v3384 = vld [vmem:[%s3328 + $0x6c] sm:%s3321]
                %3385 = vst [vmem:[%s3329 + $0x6c] sm:%s3321] %v3384
                %v3386 = vld [vmem:[%s3328 + $0x70] sm:%s3321]
                %3387 = vst [vmem:[%s3329 + $0x70] sm:%s3321] %v3386
                %v3388 = vld [vmem:[%s3328 + $0x74] sm:%s3321]
                %3389 = vst [vmem:[%s3329 + $0x74] sm:%s3321] %v3388
                %v3390 = vld [vmem:[%s3328 + $0x78] sm:%s3321]
                %3391 = vst [vmem:[%s3329 + $0x78] sm:%s3321] %v3390
                %v3392 = vld [vmem:[%s3328 + $0x7c] sm:%s3321]
                %3393 = vst [vmem:[%s3329 + $0x7c] sm:%s3321] %v3392
                %v3394 = vld [vmem:[%s3328 + $0x80] sm:%s3321]
                %3395 = vst [vmem:[%s3329 + $0x100] sm:%s3321] %v3394
                %v3396 = vld [vmem:[%s3328 + $0x84] sm:%s3321]
                %3397 = vst [vmem:[%s3329 + $0x104] sm:%s3321] %v3396
                %v3398 = vld [vmem:[%s3328 + $0x88] sm:%s3321]
                %3399 = vst [vmem:[%s3329 + $0x108] sm:%s3321] %v3398
                %v3400 = vld [vmem:[%s3328 + $0x8c] sm:%s3321]
                %3401 = vst [vmem:[%s3329 + $0x10c] sm:%s3321] %v3400
                %v3402 = vld [vmem:[%s3328 + $0x90] sm:%s3321]
                %3403 = vst [vmem:[%s3329 + $0x110] sm:%s3321] %v3402
                %v3404 = vld [vmem:[%s3328 + $0x94] sm:%s3321]
                %3405 = vst [vmem:[%s3329 + $0x114] sm:%s3321] %v3404
                %v3406 = vld [vmem:[%s3328 + $0x98] sm:%s3321]
                %3407 = vst [vmem:[%s3329 + $0x118] sm:%s3321] %v3406
                %v3408 = vld [vmem:[%s3328 + $0x9c] sm:%s3321]
                %3409 = vst [vmem:[%s3329 + $0x11c] sm:%s3321] %v3408
                %v3410 = vld [vmem:[%s3328 + $0xa0] sm:%s3321]
                %3411 = vst [vmem:[%s3329 + $0x120] sm:%s3321] %v3410
                %v3412 = vld [vmem:[%s3328 + $0xa4] sm:%s3321]
                %3413 = vst [vmem:[%s3329 + $0x124] sm:%s3321] %v3412
                %v3414 = vld [vmem:[%s3328 + $0xa8] sm:%s3321]
                %3415 = vst [vmem:[%s3329 + $0x128] sm:%s3321] %v3414
                %v3416 = vld [vmem:[%s3328 + $0xac] sm:%s3321]
                %3417 = vst [vmem:[%s3329 + $0x12c] sm:%s3321] %v3416
                %v3418 = vld [vmem:[%s3328 + $0xb0] sm:%s3321]
                %3419 = vst [vmem:[%s3329 + $0x130] sm:%s3321] %v3418
                %v3420 = vld [vmem:[%s3328 + $0xb4] sm:%s3321]
                %3421 = vst [vmem:[%s3329 + $0x134] sm:%s3321] %v3420
                %v3422 = vld [vmem:[%s3328 + $0xb8] sm:%s3321]
                %3423 = vst [vmem:[%s3329 + $0x138] sm:%s3321] %v3422
                %v3424 = vld [vmem:[%s3328 + $0xbc] sm:%s3321]
                %3425 = vst [vmem:[%s3329 + $0x13c] sm:%s3321] %v3424
                %v3426 = vld [vmem:[%s3328 + $0xc0] sm:%s3321]
                %3427 = vst [vmem:[%s3329 + $0x140] sm:%s3321] %v3426
                %v3428 = vld [vmem:[%s3328 + $0xc4] sm:%s3321]
                %3429 = vst [vmem:[%s3329 + $0x144] sm:%s3321] %v3428
                %v3430 = vld [vmem:[%s3328 + $0xc8] sm:%s3321]
                %3431 = vst [vmem:[%s3329 + $0x148] sm:%s3321] %v3430
                %v3432 = vld [vmem:[%s3328 + $0xcc] sm:%s3321]
                %3433 = vst [vmem:[%s3329 + $0x14c] sm:%s3321] %v3432
                %v3434 = vld [vmem:[%s3328 + $0xd0] sm:%s3321]
                %3435 = vst [vmem:[%s3329 + $0x150] sm:%s3321] %v3434
                %v3436 = vld [vmem:[%s3328 + $0xd4] sm:%s3321]
                %3437 = vst [vmem:[%s3329 + $0x154] sm:%s3321] %v3436
                %v3438 = vld [vmem:[%s3328 + $0xd8] sm:%s3321]
                %3439 = vst [vmem:[%s3329 + $0x158] sm:%s3321] %v3438
                %v3440 = vld [vmem:[%s3328 + $0xdc] sm:%s3321]
                %3441 = vst [vmem:[%s3329 + $0x15c] sm:%s3321] %v3440
                %v3442 = vld [vmem:[%s3328 + $0xe0] sm:%s3321]
                %3443 = vst [vmem:[%s3329 + $0x160] sm:%s3321] %v3442
                %v3444 = vld [vmem:[%s3328 + $0xe4] sm:%s3321]
                %3445 = vst [vmem:[%s3329 + $0x164] sm:%s3321] %v3444
                %v3446 = vld [vmem:[%s3328 + $0xe8] sm:%s3321]
                %3447 = vst [vmem:[%s3329 + $0x168] sm:%s3321] %v3446
                %v3448 = vld [vmem:[%s3328 + $0xec] sm:%s3321]
                %3449 = vst [vmem:[%s3329 + $0x16c] sm:%s3321] %v3448
                %v3450 = vld [vmem:[%s3328 + $0xf0] sm:%s3321]
                %3451 = vst [vmem:[%s3329 + $0x170] sm:%s3321] %v3450
                %v3452 = vld [vmem:[%s3328 + $0xf4] sm:%s3321]
                %3453 = vst [vmem:[%s3329 + $0x174] sm:%s3321] %v3452
                %v3454 = vld [vmem:[%s3328 + $0xf8] sm:%s3321]
                %3455 = vst [vmem:[%s3329 + $0x178] sm:%s3321] %v3454
                %v3456 = vld [vmem:[%s3328 + $0xfc] sm:%s3321]
                %3457 = vst [vmem:[%s3329 + $0x17c] sm:%s3321] %v3456
                %v3458 = vld [vmem:[%s3328 + $0x100] sm:%s3321]
                %3459 = vst [vmem:[%s3329 + $0x200] sm:%s3321] %v3458
                %v3460 = vld [vmem:[%s3328 + $0x104] sm:%s3321]
                %3461 = vst [vmem:[%s3329 + $0x204] sm:%s3321] %v3460
                %v3462 = vld [vmem:[%s3328 + $0x108] sm:%s3321]
                %3463 = vst [vmem:[%s3329 + $0x208] sm:%s3321] %v3462
                %v3464 = vld [vmem:[%s3328 + $0x10c] sm:%s3321]
                %3465 = vst [vmem:[%s3329 + $0x20c] sm:%s3321] %v3464
                %v3466 = vld [vmem:[%s3328 + $0x110] sm:%s3321]
                %3467 = vst [vmem:[%s3329 + $0x210] sm:%s3321] %v3466
                %v3468 = vld [vmem:[%s3328 + $0x114] sm:%s3321]
                %3469 = vst [vmem:[%s3329 + $0x214] sm:%s3321] %v3468
                %v3470 = vld [vmem:[%s3328 + $0x118] sm:%s3321]
                %3471 = vst [vmem:[%s3329 + $0x218] sm:%s3321] %v3470
                %v3472 = vld [vmem:[%s3328 + $0x11c] sm:%s3321]
                %3473 = vst [vmem:[%s3329 + $0x21c] sm:%s3321] %v3472
                %v3474 = vld [vmem:[%s3328 + $0x120] sm:%s3321]
                %3475 = vst [vmem:[%s3329 + $0x220] sm:%s3321] %v3474
                %v3476 = vld [vmem:[%s3328 + $0x124] sm:%s3321]
                %3477 = vst [vmem:[%s3329 + $0x224] sm:%s3321] %v3476
                %v3478 = vld [vmem:[%s3328 + $0x128] sm:%s3321]
                %3479 = vst [vmem:[%s3329 + $0x228] sm:%s3321] %v3478
                %v3480 = vld [vmem:[%s3328 + $0x12c] sm:%s3321]
                %3481 = vst [vmem:[%s3329 + $0x22c] sm:%s3321] %v3480
                %v3482 = vld [vmem:[%s3328 + $0x130] sm:%s3321]
                %3483 = vst [vmem:[%s3329 + $0x230] sm:%s3321] %v3482
                %v3484 = vld [vmem:[%s3328 + $0x134] sm:%s3321]
                %3485 = vst [vmem:[%s3329 + $0x234] sm:%s3321] %v3484
                %v3486 = vld [vmem:[%s3328 + $0x138] sm:%s3321]
                %3487 = vst [vmem:[%s3329 + $0x238] sm:%s3321] %v3486
                %v3488 = vld [vmem:[%s3328 + $0x13c] sm:%s3321]
                %3489 = vst [vmem:[%s3329 + $0x23c] sm:%s3321] %v3488
                %v3490 = vld [vmem:[%s3328 + $0x140] sm:%s3321]
                %3491 = vst [vmem:[%s3329 + $0x240] sm:%s3321] %v3490
                %v3492 = vld [vmem:[%s3328 + $0x144] sm:%s3321]
                %3493 = vst [vmem:[%s3329 + $0x244] sm:%s3321] %v3492
                %v3494 = vld [vmem:[%s3328 + $0x148] sm:%s3321]
                %3495 = vst [vmem:[%s3329 + $0x248] sm:%s3321] %v3494
                %v3496 = vld [vmem:[%s3328 + $0x14c] sm:%s3321]
                %3497 = vst [vmem:[%s3329 + $0x24c] sm:%s3321] %v3496
                %v3498 = vld [vmem:[%s3328 + $0x150] sm:%s3321]
                %3499 = vst [vmem:[%s3329 + $0x250] sm:%s3321] %v3498
                %v3500 = vld [vmem:[%s3328 + $0x154] sm:%s3321]
                %3501 = vst [vmem:[%s3329 + $0x254] sm:%s3321] %v3500
                %v3502 = vld [vmem:[%s3328 + $0x158] sm:%s3321]
                %3503 = vst [vmem:[%s3329 + $0x258] sm:%s3321] %v3502
                %v3504 = vld [vmem:[%s3328 + $0x15c] sm:%s3321]
                %3505 = vst [vmem:[%s3329 + $0x25c] sm:%s3321] %v3504
                %v3506 = vld [vmem:[%s3328 + $0x160] sm:%s3321]
                %3507 = vst [vmem:[%s3329 + $0x260] sm:%s3321] %v3506
                %v3508 = vld [vmem:[%s3328 + $0x164] sm:%s3321]
                %3509 = vst [vmem:[%s3329 + $0x264] sm:%s3321] %v3508
                %v3510 = vld [vmem:[%s3328 + $0x168] sm:%s3321]
                %3511 = vst [vmem:[%s3329 + $0x268] sm:%s3321] %v3510
                %v3512 = vld [vmem:[%s3328 + $0x16c] sm:%s3321]
                %3513 = vst [vmem:[%s3329 + $0x26c] sm:%s3321] %v3512
                %v3514 = vld [vmem:[%s3328 + $0x170] sm:%s3321]
                %3515 = vst [vmem:[%s3329 + $0x270] sm:%s3321] %v3514
                %v3516 = vld [vmem:[%s3328 + $0x174] sm:%s3321]
                %3517 = vst [vmem:[%s3329 + $0x274] sm:%s3321] %v3516
                %v3518 = vld [vmem:[%s3328 + $0x178] sm:%s3321]
                %3519 = vst [vmem:[%s3329 + $0x278] sm:%s3321] %v3518
                %v3520 = vld [vmem:[%s3328 + $0x17c] sm:%s3321]
                %3521 = vst [vmem:[%s3329 + $0x27c] sm:%s3321] %v3520
                %v3522 = vld [vmem:[%s3328 + $0x180] sm:%s3321]
                %3523 = vst [vmem:[%s3329 + $0x300] sm:%s3321] %v3522
                %v3524 = vld [vmem:[%s3328 + $0x184] sm:%s3321]
                %3525 = vst [vmem:[%s3329 + $0x304] sm:%s3321] %v3524
                %v3526 = vld [vmem:[%s3328 + $0x188] sm:%s3321]
                %3527 = vst [vmem:[%s3329 + $0x308] sm:%s3321] %v3526
                %v3528 = vld [vmem:[%s3328 + $0x18c] sm:%s3321]
                %3529 = vst [vmem:[%s3329 + $0x30c] sm:%s3321] %v3528
                %v3530 = vld [vmem:[%s3328 + $0x190] sm:%s3321]
                %3531 = vst [vmem:[%s3329 + $0x310] sm:%s3321] %v3530
                %v3532 = vld [vmem:[%s3328 + $0x194] sm:%s3321]
                %3533 = vst [vmem:[%s3329 + $0x314] sm:%s3321] %v3532
                %v3534 = vld [vmem:[%s3328 + $0x198] sm:%s3321]
                %3535 = vst [vmem:[%s3329 + $0x318] sm:%s3321] %v3534
                %v3536 = vld [vmem:[%s3328 + $0x19c] sm:%s3321]
                %3537 = vst [vmem:[%s3329 + $0x31c] sm:%s3321] %v3536
                %v3538 = vld [vmem:[%s3328 + $0x1a0] sm:%s3321]
                %3539 = vst [vmem:[%s3329 + $0x320] sm:%s3321] %v3538
                %v3540 = vld [vmem:[%s3328 + $0x1a4] sm:%s3321]
                %3541 = vst [vmem:[%s3329 + $0x324] sm:%s3321] %v3540
                %v3542 = vld [vmem:[%s3328 + $0x1a8] sm:%s3321]
                %3543 = vst [vmem:[%s3329 + $0x328] sm:%s3321] %v3542
                %v3544 = vld [vmem:[%s3328 + $0x1ac] sm:%s3321]
                %3545 = vst [vmem:[%s3329 + $0x32c] sm:%s3321] %v3544
                %v3546 = vld [vmem:[%s3328 + $0x1b0] sm:%s3321]
                %3547 = vst [vmem:[%s3329 + $0x330] sm:%s3321] %v3546
                %v3548 = vld [vmem:[%s3328 + $0x1b4] sm:%s3321]
                %3549 = vst [vmem:[%s3329 + $0x334] sm:%s3321] %v3548
                %v3550 = vld [vmem:[%s3328 + $0x1b8] sm:%s3321]
                %3551 = vst [vmem:[%s3329 + $0x338] sm:%s3321] %v3550
                %v3552 = vld [vmem:[%s3328 + $0x1bc] sm:%s3321]
                %3553 = vst [vmem:[%s3329 + $0x33c] sm:%s3321] %v3552
                %v3554 = vld [vmem:[%s3328 + $0x1c0] sm:%s3321]
                %3555 = vst [vmem:[%s3329 + $0x340] sm:%s3321] %v3554
                %v3556 = vld [vmem:[%s3328 + $0x1c4] sm:%s3321]
                %3557 = vst [vmem:[%s3329 + $0x344] sm:%s3321] %v3556
                %v3558 = vld [vmem:[%s3328 + $0x1c8] sm:%s3321]
                %3559 = vst [vmem:[%s3329 + $0x348] sm:%s3321] %v3558
                %v3560 = vld [vmem:[%s3328 + $0x1cc] sm:%s3321]
                %3561 = vst [vmem:[%s3329 + $0x34c] sm:%s3321] %v3560
                %v3562 = vld [vmem:[%s3328 + $0x1d0] sm:%s3321]
                %3563 = vst [vmem:[%s3329 + $0x350] sm:%s3321] %v3562
                %v3564 = vld [vmem:[%s3328 + $0x1d4] sm:%s3321]
                %3565 = vst [vmem:[%s3329 + $0x354] sm:%s3321] %v3564
                %v3566 = vld [vmem:[%s3328 + $0x1d8] sm:%s3321]
                %3567 = vst [vmem:[%s3329 + $0x358] sm:%s3321] %v3566
                %v3568 = vld [vmem:[%s3328 + $0x1dc] sm:%s3321]
                %3569 = vst [vmem:[%s3329 + $0x35c] sm:%s3321] %v3568
                %v3570 = vld [vmem:[%s3328 + $0x1e0] sm:%s3321]
                %3571 = vst [vmem:[%s3329 + $0x360] sm:%s3321] %v3570
                %v3572 = vld [vmem:[%s3328 + $0x1e4] sm:%s3321]
                %3573 = vst [vmem:[%s3329 + $0x364] sm:%s3321] %v3572
                %v3574 = vld [vmem:[%s3328 + $0x1e8] sm:%s3321]
                %3575 = vst [vmem:[%s3329 + $0x368] sm:%s3321] %v3574
                %v3576 = vld [vmem:[%s3328 + $0x1ec] sm:%s3321]
                %3577 = vst [vmem:[%s3329 + $0x36c] sm:%s3321] %v3576
                %v3578 = vld [vmem:[%s3328 + $0x1f0] sm:%s3321]
                %3579 = vst [vmem:[%s3329 + $0x370] sm:%s3321] %v3578
                %v3580 = vld [vmem:[%s3328 + $0x1f4] sm:%s3321]
                %3581 = vst [vmem:[%s3329 + $0x374] sm:%s3321] %v3580
                %v3582 = vld [vmem:[%s3328 + $0x1f8] sm:%s3321]
                %3583 = vst [vmem:[%s3329 + $0x378] sm:%s3321] %v3582
                %v3584 = vld [vmem:[%s3328 + $0x1fc] sm:%s3321]
                %3585 = vst [vmem:[%s3329 + $0x37c] sm:%s3321] %v3584
              $region101: #{tpu_custom_call.1} parent=95 // loop_footer
                %s3327 = sadd.s32 1, %s3323
              $region102: #{tpu_custom_call.1} parent=95 // loop_footer_branch
                %3322 = sbr.rel target = $region98
              $region103: #{tpu_custom_call.1} parent=95 // loop_exit
                _
            $region96: #{tpu_custom_call.1} parent=87 // pred_fallthru
              _
          $region88: #{tpu_custom_call.1} parent=83 // pred_fallthru
            _
          %3862 = vnop
        $region84: #{tpu_custom_call.1} parent=55 // pred_fallthru
          _
        // Predicated region
        $region122: #{tpu_custom_call.1} parent=55 // pred_check
          %p3863 = pneg %p301
        $region123: #{tpu_custom_call.1} parent=55 // pred_check_branch
          %3865 = sbr.rel (%p3863) target = $region125
        $region124: #{tpu_custom_call.1} parent=55 // pred_region
          %s3866 = smul.u32 32, %s36
          %s3867 = smul.addr %s35, 256
          %s3868 = sadd.s32 %s3866, %s3867
          %s3869 = smul.addr %s3868, 4
          %s3870 = scalar_lea.vmem %s10, %s3869
          // Predicated region
          $region126: #{tpu_custom_call.1} parent=124 // pred_check
            _
          $region127: #{tpu_custom_call.1} parent=124 // pred_check_branch
            %3872 = sbr.rel (0) target = $region129
          $region128: #{tpu_custom_call.1} parent=124 // pred_region
            // Predicated region
            $region130: #{tpu_custom_call.1} parent=128 // pred_check
              _
            $region131: #{tpu_custom_call.1} parent=128 // pred_check_branch
              %3874 = sbr.rel target = $region133
            $region132: #{tpu_custom_call.1} parent=128 // pred_region
              // Predicated region
              $region145: #{tpu_custom_call.1} parent=132 // pred_check
                _
              $region146: #{tpu_custom_call.1} parent=132 // pred_check_branch
                %4144 = sbr.rel (0) target = $region148
              $region147: #{tpu_custom_call.1} parent=132 // pred_region
                loop: start=0, step=1, limit=1
                $region149: #{tpu_custom_call.1} parent=147 // loop_pre_header
                  _
                $region150: #{tpu_custom_call.1} parent=147 // loop_header
                  %s4146 = sphi 0, %s4150
                  %p4147 = scmp.ge.s32.totalorder %s4146, 1
                  %s4151 = sphi %s3301, %s3301
                  %s4152 = sphi %s3870, %s3870
                $region151: #{tpu_custom_call.1} parent=147 // loop_header_branch
                  %4149 = sbr.rel (%p4147) target = $region155
                $region152: #{tpu_custom_call.1} parent=147 // loop_body
                  _
                $region153: #{tpu_custom_call.1} parent=147 // loop_footer
                  %s4150 = sadd.s32 1, %s4146
                $region154: #{tpu_custom_call.1} parent=147 // loop_footer_branch
                  %4145 = sbr.rel target = $region150
                $region155: #{tpu_custom_call.1} parent=147 // loop_exit
                  _
                %s4154 = ssub.s32 16, 1
                loop: start=0, step=1, limit=1
                $region156: #{tpu_custom_call.1} parent=147 // loop_pre_header
                  _
                $region157: #{tpu_custom_call.1} parent=147 // loop_header
                  %s4156 = sphi 0, %s4160
                  %p4157 = scmp.ge.s32.totalorder %s4156, 1
                  %s4161 = sphi %s3301, %s3301
                  %s4162 = sphi %s3870, %s3870
                $region158: #{tpu_custom_call.1} parent=147 // loop_header_branch
                  %4159 = sbr.rel (%p4157) target = $region162
                $region159: #{tpu_custom_call.1} parent=147 // loop_body
                  %v4163 = vld [vmem:[%s4161] sm:%s4154]
                  %4164 = vst [vmem:[%s4162] sm:%s4154] %v4163
                  %v4165 = vld [vmem:[%s4161 + $0x4] sm:%s4154]
                  %4166 = vst [vmem:[%s4162 + $0x4] sm:%s4154] %v4165
                  %v4167 = vld [vmem:[%s4161 + $0x8] sm:%s4154]
                  %4168 = vst [vmem:[%s4162 + $0x8] sm:%s4154] %v4167
                  %v4169 = vld [vmem:[%s4161 + $0xc] sm:%s4154]
                  %4170 = vst [vmem:[%s4162 + $0xc] sm:%s4154] %v4169
                  %v4171 = vld [vmem:[%s4161 + $0x10] sm:%s4154]
                  %4172 = vst [vmem:[%s4162 + $0x10] sm:%s4154] %v4171
                  %v4173 = vld [vmem:[%s4161 + $0x14] sm:%s4154]
                  %4174 = vst [vmem:[%s4162 + $0x14] sm:%s4154] %v4173
                  %v4175 = vld [vmem:[%s4161 + $0x18] sm:%s4154]
                  %4176 = vst [vmem:[%s4162 + $0x18] sm:%s4154] %v4175
                  %v4177 = vld [vmem:[%s4161 + $0x1c] sm:%s4154]
                  %4178 = vst [vmem:[%s4162 + $0x1c] sm:%s4154] %v4177
                  %v4179 = vld [vmem:[%s4161 + $0x20] sm:%s4154]
                  %4180 = vst [vmem:[%s4162 + $0x20] sm:%s4154] %v4179
                  %v4181 = vld [vmem:[%s4161 + $0x24] sm:%s4154]
                  %4182 = vst [vmem:[%s4162 + $0x24] sm:%s4154] %v4181
                  %v4183 = vld [vmem:[%s4161 + $0x28] sm:%s4154]
                  %4184 = vst [vmem:[%s4162 + $0x28] sm:%s4154] %v4183
                  %v4185 = vld [vmem:[%s4161 + $0x2c] sm:%s4154]
                  %4186 = vst [vmem:[%s4162 + $0x2c] sm:%s4154] %v4185
                  %v4187 = vld [vmem:[%s4161 + $0x30] sm:%s4154]
                  %4188 = vst [vmem:[%s4162 + $0x30] sm:%s4154] %v4187
                  %v4189 = vld [vmem:[%s4161 + $0x34] sm:%s4154]
                  %4190 = vst [vmem:[%s4162 + $0x34] sm:%s4154] %v4189
                  %v4191 = vld [vmem:[%s4161 + $0x38] sm:%s4154]
                  %4192 = vst [vmem:[%s4162 + $0x38] sm:%s4154] %v4191
                  %v4193 = vld [vmem:[%s4161 + $0x3c] sm:%s4154]
                  %4194 = vst [vmem:[%s4162 + $0x3c] sm:%s4154] %v4193
                  %v4195 = vld [vmem:[%s4161 + $0x40] sm:%s4154]
                  %4196 = vst [vmem:[%s4162 + $0x40] sm:%s4154] %v4195
                  %v4197 = vld [vmem:[%s4161 + $0x44] sm:%s4154]
                  %4198 = vst [vmem:[%s4162 + $0x44] sm:%s4154] %v4197
                  %v4199 = vld [vmem:[%s4161 + $0x48] sm:%s4154]
                  %4200 = vst [vmem:[%s4162 + $0x48] sm:%s4154] %v4199
                  %v4201 = vld [vmem:[%s4161 + $0x4c] sm:%s4154]
                  %4202 = vst [vmem:[%s4162 + $0x4c] sm:%s4154] %v4201
                  %v4203 = vld [vmem:[%s4161 + $0x50] sm:%s4154]
                  %4204 = vst [vmem:[%s4162 + $0x50] sm:%s4154] %v4203
                  %v4205 = vld [vmem:[%s4161 + $0x54] sm:%s4154]
                  %4206 = vst [vmem:[%s4162 + $0x54] sm:%s4154] %v4205
                  %v4207 = vld [vmem:[%s4161 + $0x58] sm:%s4154]
                  %4208 = vst [vmem:[%s4162 + $0x58] sm:%s4154] %v4207
                  %v4209 = vld [vmem:[%s4161 + $0x5c] sm:%s4154]
                  %4210 = vst [vmem:[%s4162 + $0x5c] sm:%s4154] %v4209
                  %v4211 = vld [vmem:[%s4161 + $0x60] sm:%s4154]
                  %4212 = vst [vmem:[%s4162 + $0x60] sm:%s4154] %v4211
                  %v4213 = vld [vmem:[%s4161 + $0x64] sm:%s4154]
                  %4214 = vst [vmem:[%s4162 + $0x64] sm:%s4154] %v4213
                  %v4215 = vld [vmem:[%s4161 + $0x68] sm:%s4154]
                  %4216 = vst [vmem:[%s4162 + $0x68] sm:%s4154] %v4215
                  %v4217 = vld [vmem:[%s4161 + $0x6c] sm:%s4154]
                  %4218 = vst [vmem:[%s4162 + $0x6c] sm:%s4154] %v4217
                  %v4219 = vld [vmem:[%s4161 + $0x70] sm:%s4154]
                  %4220 = vst [vmem:[%s4162 + $0x70] sm:%s4154] %v4219
                  %v4221 = vld [vmem:[%s4161 + $0x74] sm:%s4154]
                  %4222 = vst [vmem:[%s4162 + $0x74] sm:%s4154] %v4221
                  %v4223 = vld [vmem:[%s4161 + $0x78] sm:%s4154]
                  %4224 = vst [vmem:[%s4162 + $0x78] sm:%s4154] %v4223
                  %v4225 = vld [vmem:[%s4161 + $0x7c] sm:%s4154]
                  %4226 = vst [vmem:[%s4162 + $0x7c] sm:%s4154] %v4225
                  %v4227 = vld [vmem:[%s4161 + $0x80] sm:%s4154]
                  %4228 = vst [vmem:[%s4162 + $0x100] sm:%s4154] %v4227
                  %v4229 = vld [vmem:[%s4161 + $0x84] sm:%s4154]
                  %4230 = vst [vmem:[%s4162 + $0x104] sm:%s4154] %v4229
                  %v4231 = vld [vmem:[%s4161 + $0x88] sm:%s4154]
                  %4232 = vst [vmem:[%s4162 + $0x108] sm:%s4154] %v4231
                  %v4233 = vld [vmem:[%s4161 + $0x8c] sm:%s4154]
                  %4234 = vst [vmem:[%s4162 + $0x10c] sm:%s4154] %v4233
                  %v4235 = vld [vmem:[%s4161 + $0x90] sm:%s4154]
                  %4236 = vst [vmem:[%s4162 + $0x110] sm:%s4154] %v4235
                  %v4237 = vld [vmem:[%s4161 + $0x94] sm:%s4154]
                  %4238 = vst [vmem:[%s4162 + $0x114] sm:%s4154] %v4237
                  %v4239 = vld [vmem:[%s4161 + $0x98] sm:%s4154]
                  %4240 = vst [vmem:[%s4162 + $0x118] sm:%s4154] %v4239
                  %v4241 = vld [vmem:[%s4161 + $0x9c] sm:%s4154]
                  %4242 = vst [vmem:[%s4162 + $0x11c] sm:%s4154] %v4241
                  %v4243 = vld [vmem:[%s4161 + $0xa0] sm:%s4154]
                  %4244 = vst [vmem:[%s4162 + $0x120] sm:%s4154] %v4243
                  %v4245 = vld [vmem:[%s4161 + $0xa4] sm:%s4154]
                  %4246 = vst [vmem:[%s4162 + $0x124] sm:%s4154] %v4245
                  %v4247 = vld [vmem:[%s4161 + $0xa8] sm:%s4154]
                  %4248 = vst [vmem:[%s4162 + $0x128] sm:%s4154] %v4247
                  %v4249 = vld [vmem:[%s4161 + $0xac] sm:%s4154]
                  %4250 = vst [vmem:[%s4162 + $0x12c] sm:%s4154] %v4249
                  %v4251 = vld [vmem:[%s4161 + $0xb0] sm:%s4154]
                  %4252 = vst [vmem:[%s4162 + $0x130] sm:%s4154] %v4251
                  %v4253 = vld [vmem:[%s4161 + $0xb4] sm:%s4154]
                  %4254 = vst [vmem:[%s4162 + $0x134] sm:%s4154] %v4253
                  %v4255 = vld [vmem:[%s4161 + $0xb8] sm:%s4154]
                  %4256 = vst [vmem:[%s4162 + $0x138] sm:%s4154] %v4255
                  %v4257 = vld [vmem:[%s4161 + $0xbc] sm:%s4154]
                  %4258 = vst [vmem:[%s4162 + $0x13c] sm:%s4154] %v4257
                  %v4259 = vld [vmem:[%s4161 + $0xc0] sm:%s4154]
                  %4260 = vst [vmem:[%s4162 + $0x140] sm:%s4154] %v4259
                  %v4261 = vld [vmem:[%s4161 + $0xc4] sm:%s4154]
                  %4262 = vst [vmem:[%s4162 + $0x144] sm:%s4154] %v4261
                  %v4263 = vld [vmem:[%s4161 + $0xc8] sm:%s4154]
                  %4264 = vst [vmem:[%s4162 + $0x148] sm:%s4154] %v4263
                  %v4265 = vld [vmem:[%s4161 + $0xcc] sm:%s4154]
                  %4266 = vst [vmem:[%s4162 + $0x14c] sm:%s4154] %v4265
                  %v4267 = vld [vmem:[%s4161 + $0xd0] sm:%s4154]
                  %4268 = vst [vmem:[%s4162 + $0x150] sm:%s4154] %v4267
                  %v4269 = vld [vmem:[%s4161 + $0xd4] sm:%s4154]
                  %4270 = vst [vmem:[%s4162 + $0x154] sm:%s4154] %v4269
                  %v4271 = vld [vmem:[%s4161 + $0xd8] sm:%s4154]
                  %4272 = vst [vmem:[%s4162 + $0x158] sm:%s4154] %v4271
                  %v4273 = vld [vmem:[%s4161 + $0xdc] sm:%s4154]
                  %4274 = vst [vmem:[%s4162 + $0x15c] sm:%s4154] %v4273
                  %v4275 = vld [vmem:[%s4161 + $0xe0] sm:%s4154]
                  %4276 = vst [vmem:[%s4162 + $0x160] sm:%s4154] %v4275
                  %v4277 = vld [vmem:[%s4161 + $0xe4] sm:%s4154]
                  %4278 = vst [vmem:[%s4162 + $0x164] sm:%s4154] %v4277
                  %v4279 = vld [vmem:[%s4161 + $0xe8] sm:%s4154]
                  %4280 = vst [vmem:[%s4162 + $0x168] sm:%s4154] %v4279
                  %v4281 = vld [vmem:[%s4161 + $0xec] sm:%s4154]
                  %4282 = vst [vmem:[%s4162 + $0x16c] sm:%s4154] %v4281
                  %v4283 = vld [vmem:[%s4161 + $0xf0] sm:%s4154]
                  %4284 = vst [vmem:[%s4162 + $0x170] sm:%s4154] %v4283
                  %v4285 = vld [vmem:[%s4161 + $0xf4] sm:%s4154]
                  %4286 = vst [vmem:[%s4162 + $0x174] sm:%s4154] %v4285
                  %v4287 = vld [vmem:[%s4161 + $0xf8] sm:%s4154]
                  %4288 = vst [vmem:[%s4162 + $0x178] sm:%s4154] %v4287
                  %v4289 = vld [vmem:[%s4161 + $0xfc] sm:%s4154]
                  %4290 = vst [vmem:[%s4162 + $0x17c] sm:%s4154] %v4289
                  %v4291 = vld [vmem:[%s4161 + $0x100] sm:%s4154]
                  %4292 = vst [vmem:[%s4162 + $0x200] sm:%s4154] %v4291
                  %v4293 = vld [vmem:[%s4161 + $0x104] sm:%s4154]
                  %4294 = vst [vmem:[%s4162 + $0x204] sm:%s4154] %v4293
                  %v4295 = vld [vmem:[%s4161 + $0x108] sm:%s4154]
                  %4296 = vst [vmem:[%s4162 + $0x208] sm:%s4154] %v4295
                  %v4297 = vld [vmem:[%s4161 + $0x10c] sm:%s4154]
                  %4298 = vst [vmem:[%s4162 + $0x20c] sm:%s4154] %v4297
                  %v4299 = vld [vmem:[%s4161 + $0x110] sm:%s4154]
                  %4300 = vst [vmem:[%s4162 + $0x210] sm:%s4154] %v4299
                  %v4301 = vld [vmem:[%s4161 + $0x114] sm:%s4154]
                  %4302 = vst [vmem:[%s4162 + $0x214] sm:%s4154] %v4301
                  %v4303 = vld [vmem:[%s4161 + $0x118] sm:%s4154]
                  %4304 = vst [vmem:[%s4162 + $0x218] sm:%s4154] %v4303
                  %v4305 = vld [vmem:[%s4161 + $0x11c] sm:%s4154]
                  %4306 = vst [vmem:[%s4162 + $0x21c] sm:%s4154] %v4305
                  %v4307 = vld [vmem:[%s4161 + $0x120] sm:%s4154]
                  %4308 = vst [vmem:[%s4162 + $0x220] sm:%s4154] %v4307
                  %v4309 = vld [vmem:[%s4161 + $0x124] sm:%s4154]
                  %4310 = vst [vmem:[%s4162 + $0x224] sm:%s4154] %v4309
                  %v4311 = vld [vmem:[%s4161 + $0x128] sm:%s4154]
                  %4312 = vst [vmem:[%s4162 + $0x228] sm:%s4154] %v4311
                  %v4313 = vld [vmem:[%s4161 + $0x12c] sm:%s4154]
                  %4314 = vst [vmem:[%s4162 + $0x22c] sm:%s4154] %v4313
                  %v4315 = vld [vmem:[%s4161 + $0x130] sm:%s4154]
                  %4316 = vst [vmem:[%s4162 + $0x230] sm:%s4154] %v4315
                  %v4317 = vld [vmem:[%s4161 + $0x134] sm:%s4154]
                  %4318 = vst [vmem:[%s4162 + $0x234] sm:%s4154] %v4317
                  %v4319 = vld [vmem:[%s4161 + $0x138] sm:%s4154]
                  %4320 = vst [vmem:[%s4162 + $0x238] sm:%s4154] %v4319
                  %v4321 = vld [vmem:[%s4161 + $0x13c] sm:%s4154]
                  %4322 = vst [vmem:[%s4162 + $0x23c] sm:%s4154] %v4321
                  %v4323 = vld [vmem:[%s4161 + $0x140] sm:%s4154]
                  %4324 = vst [vmem:[%s4162 + $0x240] sm:%s4154] %v4323
                  %v4325 = vld [vmem:[%s4161 + $0x144] sm:%s4154]
                  %4326 = vst [vmem:[%s4162 + $0x244] sm:%s4154] %v4325
                  %v4327 = vld [vmem:[%s4161 + $0x148] sm:%s4154]
                  %4328 = vst [vmem:[%s4162 + $0x248] sm:%s4154] %v4327
                  %v4329 = vld [vmem:[%s4161 + $0x14c] sm:%s4154]
                  %4330 = vst [vmem:[%s4162 + $0x24c] sm:%s4154] %v4329
                  %v4331 = vld [vmem:[%s4161 + $0x150] sm:%s4154]
                  %4332 = vst [vmem:[%s4162 + $0x250] sm:%s4154] %v4331
                  %v4333 = vld [vmem:[%s4161 + $0x154] sm:%s4154]
                  %4334 = vst [vmem:[%s4162 + $0x254] sm:%s4154] %v4333
                  %v4335 = vld [vmem:[%s4161 + $0x158] sm:%s4154]
                  %4336 = vst [vmem:[%s4162 + $0x258] sm:%s4154] %v4335
                  %v4337 = vld [vmem:[%s4161 + $0x15c] sm:%s4154]
                  %4338 = vst [vmem:[%s4162 + $0x25c] sm:%s4154] %v4337
                  %v4339 = vld [vmem:[%s4161 + $0x160] sm:%s4154]
                  %4340 = vst [vmem:[%s4162 + $0x260] sm:%s4154] %v4339
                  %v4341 = vld [vmem:[%s4161 + $0x164] sm:%s4154]
                  %4342 = vst [vmem:[%s4162 + $0x264] sm:%s4154] %v4341
                  %v4343 = vld [vmem:[%s4161 + $0x168] sm:%s4154]
                  %4344 = vst [vmem:[%s4162 + $0x268] sm:%s4154] %v4343
                  %v4345 = vld [vmem:[%s4161 + $0x16c] sm:%s4154]
                  %4346 = vst [vmem:[%s4162 + $0x26c] sm:%s4154] %v4345
                  %v4347 = vld [vmem:[%s4161 + $0x170] sm:%s4154]
                  %4348 = vst [vmem:[%s4162 + $0x270] sm:%s4154] %v4347
                  %v4349 = vld [vmem:[%s4161 + $0x174] sm:%s4154]
                  %4350 = vst [vmem:[%s4162 + $0x274] sm:%s4154] %v4349
                  %v4351 = vld [vmem:[%s4161 + $0x178] sm:%s4154]
                  %4352 = vst [vmem:[%s4162 + $0x278] sm:%s4154] %v4351
                  %v4353 = vld [vmem:[%s4161 + $0x17c] sm:%s4154]
                  %4354 = vst [vmem:[%s4162 + $0x27c] sm:%s4154] %v4353
                  %v4355 = vld [vmem:[%s4161 + $0x180] sm:%s4154]
                  %4356 = vst [vmem:[%s4162 + $0x300] sm:%s4154] %v4355
                  %v4357 = vld [vmem:[%s4161 + $0x184] sm:%s4154]
                  %4358 = vst [vmem:[%s4162 + $0x304] sm:%s4154] %v4357
                  %v4359 = vld [vmem:[%s4161 + $0x188] sm:%s4154]
                  %4360 = vst [vmem:[%s4162 + $0x308] sm:%s4154] %v4359
                  %v4361 = vld [vmem:[%s4161 + $0x18c] sm:%s4154]
                  %4362 = vst [vmem:[%s4162 + $0x30c] sm:%s4154] %v4361
                  %v4363 = vld [vmem:[%s4161 + $0x190] sm:%s4154]
                  %4364 = vst [vmem:[%s4162 + $0x310] sm:%s4154] %v4363
                  %v4365 = vld [vmem:[%s4161 + $0x194] sm:%s4154]
                  %4366 = vst [vmem:[%s4162 + $0x314] sm:%s4154] %v4365
                  %v4367 = vld [vmem:[%s4161 + $0x198] sm:%s4154]
                  %4368 = vst [vmem:[%s4162 + $0x318] sm:%s4154] %v4367
                  %v4369 = vld [vmem:[%s4161 + $0x19c] sm:%s4154]
                  %4370 = vst [vmem:[%s4162 + $0x31c] sm:%s4154] %v4369
                  %v4371 = vld [vmem:[%s4161 + $0x1a0] sm:%s4154]
                  %4372 = vst [vmem:[%s4162 + $0x320] sm:%s4154] %v4371
                  %v4373 = vld [vmem:[%s4161 + $0x1a4] sm:%s4154]
                  %4374 = vst [vmem:[%s4162 + $0x324] sm:%s4154] %v4373
                  %v4375 = vld [vmem:[%s4161 + $0x1a8] sm:%s4154]
                  %4376 = vst [vmem:[%s4162 + $0x328] sm:%s4154] %v4375
                  %v4377 = vld [vmem:[%s4161 + $0x1ac] sm:%s4154]
                  %4378 = vst [vmem:[%s4162 + $0x32c] sm:%s4154] %v4377
                  %v4379 = vld [vmem:[%s4161 + $0x1b0] sm:%s4154]
                  %4380 = vst [vmem:[%s4162 + $0x330] sm:%s4154] %v4379
                  %v4381 = vld [vmem:[%s4161 + $0x1b4] sm:%s4154]
                  %4382 = vst [vmem:[%s4162 + $0x334] sm:%s4154] %v4381
                  %v4383 = vld [vmem:[%s4161 + $0x1b8] sm:%s4154]
                  %4384 = vst [vmem:[%s4162 + $0x338] sm:%s4154] %v4383
                  %v4385 = vld [vmem:[%s4161 + $0x1bc] sm:%s4154]
                  %4386 = vst [vmem:[%s4162 + $0x33c] sm:%s4154] %v4385
                  %v4387 = vld [vmem:[%s4161 + $0x1c0] sm:%s4154]
                  %4388 = vst [vmem:[%s4162 + $0x340] sm:%s4154] %v4387
                  %v4389 = vld [vmem:[%s4161 + $0x1c4] sm:%s4154]
                  %4390 = vst [vmem:[%s4162 + $0x344] sm:%s4154] %v4389
                  %v4391 = vld [vmem:[%s4161 + $0x1c8] sm:%s4154]
                  %4392 = vst [vmem:[%s4162 + $0x348] sm:%s4154] %v4391
                  %v4393 = vld [vmem:[%s4161 + $0x1cc] sm:%s4154]
                  %4394 = vst [vmem:[%s4162 + $0x34c] sm:%s4154] %v4393
                  %v4395 = vld [vmem:[%s4161 + $0x1d0] sm:%s4154]
                  %4396 = vst [vmem:[%s4162 + $0x350] sm:%s4154] %v4395
                  %v4397 = vld [vmem:[%s4161 + $0x1d4] sm:%s4154]
                  %4398 = vst [vmem:[%s4162 + $0x354] sm:%s4154] %v4397
                  %v4399 = vld [vmem:[%s4161 + $0x1d8] sm:%s4154]
                  %4400 = vst [vmem:[%s4162 + $0x358] sm:%s4154] %v4399
                  %v4401 = vld [vmem:[%s4161 + $0x1dc] sm:%s4154]
                  %4402 = vst [vmem:[%s4162 + $0x35c] sm:%s4154] %v4401
                  %v4403 = vld [vmem:[%s4161 + $0x1e0] sm:%s4154]
                  %4404 = vst [vmem:[%s4162 + $0x360] sm:%s4154] %v4403
                  %v4405 = vld [vmem:[%s4161 + $0x1e4] sm:%s4154]
                  %4406 = vst [vmem:[%s4162 + $0x364] sm:%s4154] %v4405
                  %v4407 = vld [vmem:[%s4161 + $0x1e8] sm:%s4154]
                  %4408 = vst [vmem:[%s4162 + $0x368] sm:%s4154] %v4407
                  %v4409 = vld [vmem:[%s4161 + $0x1ec] sm:%s4154]
                  %4410 = vst [vmem:[%s4162 + $0x36c] sm:%s4154] %v4409
                  %v4411 = vld [vmem:[%s4161 + $0x1f0] sm:%s4154]
                  %4412 = vst [vmem:[%s4162 + $0x370] sm:%s4154] %v4411
                  %v4413 = vld [vmem:[%s4161 + $0x1f4] sm:%s4154]
                  %4414 = vst [vmem:[%s4162 + $0x374] sm:%s4154] %v4413
                  %v4415 = vld [vmem:[%s4161 + $0x1f8] sm:%s4154]
                  %4416 = vst [vmem:[%s4162 + $0x378] sm:%s4154] %v4415
                  %v4417 = vld [vmem:[%s4161 + $0x1fc] sm:%s4154]
                  %4418 = vst [vmem:[%s4162 + $0x37c] sm:%s4154] %v4417
                $region160: #{tpu_custom_call.1} parent=147 // loop_footer
                  %s4160 = sadd.s32 1, %s4156
                $region161: #{tpu_custom_call.1} parent=147 // loop_footer_branch
                  %4155 = sbr.rel target = $region157
                $region162: #{tpu_custom_call.1} parent=147 // loop_exit
                  _
              $region148: #{tpu_custom_call.1} parent=132 // pred_fallthru
                _
            $region133: #{tpu_custom_call.1} parent=128 // pred_fallthru
              _
            // Predicated region
            $region134: #{tpu_custom_call.1} parent=128 // pred_check
              _
            $region135: #{tpu_custom_call.1} parent=128 // pred_check_branch
              %3876 = sbr.rel (0) target = $region137
            $region136: #{tpu_custom_call.1} parent=128 // pred_region
              %s3878 = ssub.s32 16, 1
              loop: start=0, step=1, limit=1
              $region138: #{tpu_custom_call.1} parent=136 // loop_pre_header
                _
              $region139: #{tpu_custom_call.1} parent=136 // loop_header
                %s3880 = sphi 0, %s3884
                %p3881 = scmp.ge.s32.totalorder %s3880, 1
                %s3885 = sphi %s3301, %s3301
                %s3886 = sphi %s3870, %s3870
              $region140: #{tpu_custom_call.1} parent=136 // loop_header_branch
                %3883 = sbr.rel (%p3881) target = $region144
              $region141: #{tpu_custom_call.1} parent=136 // loop_body
                %v3887 = vld [vmem:[%s3885] sm:%s3878]
                %3888 = vst [vmem:[%s3886] sm:%s3878] %v3887
                %v3889 = vld [vmem:[%s3885 + $0x4] sm:%s3878]
                %3890 = vst [vmem:[%s3886 + $0x4] sm:%s3878] %v3889
                %v3891 = vld [vmem:[%s3885 + $0x8] sm:%s3878]
                %3892 = vst [vmem:[%s3886 + $0x8] sm:%s3878] %v3891
                %v3893 = vld [vmem:[%s3885 + $0xc] sm:%s3878]
                %3894 = vst [vmem:[%s3886 + $0xc] sm:%s3878] %v3893
                %v3895 = vld [vmem:[%s3885 + $0x10] sm:%s3878]
                %3896 = vst [vmem:[%s3886 + $0x10] sm:%s3878] %v3895
                %v3897 = vld [vmem:[%s3885 + $0x14] sm:%s3878]
                %3898 = vst [vmem:[%s3886 + $0x14] sm:%s3878] %v3897
                %v3899 = vld [vmem:[%s3885 + $0x18] sm:%s3878]
                %3900 = vst [vmem:[%s3886 + $0x18] sm:%s3878] %v3899
                %v3901 = vld [vmem:[%s3885 + $0x1c] sm:%s3878]
                %3902 = vst [vmem:[%s3886 + $0x1c] sm:%s3878] %v3901
                %v3903 = vld [vmem:[%s3885 + $0x20] sm:%s3878]
                %3904 = vst [vmem:[%s3886 + $0x20] sm:%s3878] %v3903
                %v3905 = vld [vmem:[%s3885 + $0x24] sm:%s3878]
                %3906 = vst [vmem:[%s3886 + $0x24] sm:%s3878] %v3905
                %v3907 = vld [vmem:[%s3885 + $0x28] sm:%s3878]
                %3908 = vst [vmem:[%s3886 + $0x28] sm:%s3878] %v3907
                %v3909 = vld [vmem:[%s3885 + $0x2c] sm:%s3878]
                %3910 = vst [vmem:[%s3886 + $0x2c] sm:%s3878] %v3909
                %v3911 = vld [vmem:[%s3885 + $0x30] sm:%s3878]
                %3912 = vst [vmem:[%s3886 + $0x30] sm:%s3878] %v3911
                %v3913 = vld [vmem:[%s3885 + $0x34] sm:%s3878]
                %3914 = vst [vmem:[%s3886 + $0x34] sm:%s3878] %v3913
                %v3915 = vld [vmem:[%s3885 + $0x38] sm:%s3878]
                %3916 = vst [vmem:[%s3886 + $0x38] sm:%s3878] %v3915
                %v3917 = vld [vmem:[%s3885 + $0x3c] sm:%s3878]
                %3918 = vst [vmem:[%s3886 + $0x3c] sm:%s3878] %v3917
                %v3919 = vld [vmem:[%s3885 + $0x40] sm:%s3878]
                %3920 = vst [vmem:[%s3886 + $0x40] sm:%s3878] %v3919
                %v3921 = vld [vmem:[%s3885 + $0x44] sm:%s3878]
                %3922 = vst [vmem:[%s3886 + $0x44] sm:%s3878] %v3921
                %v3923 = vld [vmem:[%s3885 + $0x48] sm:%s3878]
                %3924 = vst [vmem:[%s3886 + $0x48] sm:%s3878] %v3923
                %v3925 = vld [vmem:[%s3885 + $0x4c] sm:%s3878]
                %3926 = vst [vmem:[%s3886 + $0x4c] sm:%s3878] %v3925
                %v3927 = vld [vmem:[%s3885 + $0x50] sm:%s3878]
                %3928 = vst [vmem:[%s3886 + $0x50] sm:%s3878] %v3927
                %v3929 = vld [vmem:[%s3885 + $0x54] sm:%s3878]
                %3930 = vst [vmem:[%s3886 + $0x54] sm:%s3878] %v3929
                %v3931 = vld [vmem:[%s3885 + $0x58] sm:%s3878]
                %3932 = vst [vmem:[%s3886 + $0x58] sm:%s3878] %v3931
                %v3933 = vld [vmem:[%s3885 + $0x5c] sm:%s3878]
                %3934 = vst [vmem:[%s3886 + $0x5c] sm:%s3878] %v3933
                %v3935 = vld [vmem:[%s3885 + $0x60] sm:%s3878]
                %3936 = vst [vmem:[%s3886 + $0x60] sm:%s3878] %v3935
                %v3937 = vld [vmem:[%s3885 + $0x64] sm:%s3878]
                %3938 = vst [vmem:[%s3886 + $0x64] sm:%s3878] %v3937
                %v3939 = vld [vmem:[%s3885 + $0x68] sm:%s3878]
                %3940 = vst [vmem:[%s3886 + $0x68] sm:%s3878] %v3939
                %v3941 = vld [vmem:[%s3885 + $0x6c] sm:%s3878]
                %3942 = vst [vmem:[%s3886 + $0x6c] sm:%s3878] %v3941
                %v3943 = vld [vmem:[%s3885 + $0x70] sm:%s3878]
                %3944 = vst [vmem:[%s3886 + $0x70] sm:%s3878] %v3943
                %v3945 = vld [vmem:[%s3885 + $0x74] sm:%s3878]
                %3946 = vst [vmem:[%s3886 + $0x74] sm:%s3878] %v3945
                %v3947 = vld [vmem:[%s3885 + $0x78] sm:%s3878]
                %3948 = vst [vmem:[%s3886 + $0x78] sm:%s3878] %v3947
                %v3949 = vld [vmem:[%s3885 + $0x7c] sm:%s3878]
                %3950 = vst [vmem:[%s3886 + $0x7c] sm:%s3878] %v3949
                %v3951 = vld [vmem:[%s3885 + $0x80] sm:%s3878]
                %3952 = vst [vmem:[%s3886 + $0x100] sm:%s3878] %v3951
                %v3953 = vld [vmem:[%s3885 + $0x84] sm:%s3878]
                %3954 = vst [vmem:[%s3886 + $0x104] sm:%s3878] %v3953
                %v3955 = vld [vmem:[%s3885 + $0x88] sm:%s3878]
                %3956 = vst [vmem:[%s3886 + $0x108] sm:%s3878] %v3955
                %v3957 = vld [vmem:[%s3885 + $0x8c] sm:%s3878]
                %3958 = vst [vmem:[%s3886 + $0x10c] sm:%s3878] %v3957
                %v3959 = vld [vmem:[%s3885 + $0x90] sm:%s3878]
                %3960 = vst [vmem:[%s3886 + $0x110] sm:%s3878] %v3959
                %v3961 = vld [vmem:[%s3885 + $0x94] sm:%s3878]
                %3962 = vst [vmem:[%s3886 + $0x114] sm:%s3878] %v3961
                %v3963 = vld [vmem:[%s3885 + $0x98] sm:%s3878]
                %3964 = vst [vmem:[%s3886 + $0x118] sm:%s3878] %v3963
                %v3965 = vld [vmem:[%s3885 + $0x9c] sm:%s3878]
                %3966 = vst [vmem:[%s3886 + $0x11c] sm:%s3878] %v3965
                %v3967 = vld [vmem:[%s3885 + $0xa0] sm:%s3878]
                %3968 = vst [vmem:[%s3886 + $0x120] sm:%s3878] %v3967
                %v3969 = vld [vmem:[%s3885 + $0xa4] sm:%s3878]
                %3970 = vst [vmem:[%s3886 + $0x124] sm:%s3878] %v3969
                %v3971 = vld [vmem:[%s3885 + $0xa8] sm:%s3878]
                %3972 = vst [vmem:[%s3886 + $0x128] sm:%s3878] %v3971
                %v3973 = vld [vmem:[%s3885 + $0xac] sm:%s3878]
                %3974 = vst [vmem:[%s3886 + $0x12c] sm:%s3878] %v3973
                %v3975 = vld [vmem:[%s3885 + $0xb0] sm:%s3878]
                %3976 = vst [vmem:[%s3886 + $0x130] sm:%s3878] %v3975
                %v3977 = vld [vmem:[%s3885 + $0xb4] sm:%s3878]
                %3978 = vst [vmem:[%s3886 + $0x134] sm:%s3878] %v3977
                %v3979 = vld [vmem:[%s3885 + $0xb8] sm:%s3878]
                %3980 = vst [vmem:[%s3886 + $0x138] sm:%s3878] %v3979
                %v3981 = vld [vmem:[%s3885 + $0xbc] sm:%s3878]
                %3982 = vst [vmem:[%s3886 + $0x13c] sm:%s3878] %v3981
                %v3983 = vld [vmem:[%s3885 + $0xc0] sm:%s3878]
                %3984 = vst [vmem:[%s3886 + $0x140] sm:%s3878] %v3983
                %v3985 = vld [vmem:[%s3885 + $0xc4] sm:%s3878]
                %3986 = vst [vmem:[%s3886 + $0x144] sm:%s3878] %v3985
                %v3987 = vld [vmem:[%s3885 + $0xc8] sm:%s3878]
                %3988 = vst [vmem:[%s3886 + $0x148] sm:%s3878] %v3987
                %v3989 = vld [vmem:[%s3885 + $0xcc] sm:%s3878]
                %3990 = vst [vmem:[%s3886 + $0x14c] sm:%s3878] %v3989
                %v3991 = vld [vmem:[%s3885 + $0xd0] sm:%s3878]
                %3992 = vst [vmem:[%s3886 + $0x150] sm:%s3878] %v3991
                %v3993 = vld [vmem:[%s3885 + $0xd4] sm:%s3878]
                %3994 = vst [vmem:[%s3886 + $0x154] sm:%s3878] %v3993
                %v3995 = vld [vmem:[%s3885 + $0xd8] sm:%s3878]
                %3996 = vst [vmem:[%s3886 + $0x158] sm:%s3878] %v3995
                %v3997 = vld [vmem:[%s3885 + $0xdc] sm:%s3878]
                %3998 = vst [vmem:[%s3886 + $0x15c] sm:%s3878] %v3997
                %v3999 = vld [vmem:[%s3885 + $0xe0] sm:%s3878]
                %4000 = vst [vmem:[%s3886 + $0x160] sm:%s3878] %v3999
                %v4001 = vld [vmem:[%s3885 + $0xe4] sm:%s3878]
                %4002 = vst [vmem:[%s3886 + $0x164] sm:%s3878] %v4001
                %v4003 = vld [vmem:[%s3885 + $0xe8] sm:%s3878]
                %4004 = vst [vmem:[%s3886 + $0x168] sm:%s3878] %v4003
                %v4005 = vld [vmem:[%s3885 + $0xec] sm:%s3878]
                %4006 = vst [vmem:[%s3886 + $0x16c] sm:%s3878] %v4005
                %v4007 = vld [vmem:[%s3885 + $0xf0] sm:%s3878]
                %4008 = vst [vmem:[%s3886 + $0x170] sm:%s3878] %v4007
                %v4009 = vld [vmem:[%s3885 + $0xf4] sm:%s3878]
                %4010 = vst [vmem:[%s3886 + $0x174] sm:%s3878] %v4009
                %v4011 = vld [vmem:[%s3885 + $0xf8] sm:%s3878]
                %4012 = vst [vmem:[%s3886 + $0x178] sm:%s3878] %v4011
                %v4013 = vld [vmem:[%s3885 + $0xfc] sm:%s3878]
                %4014 = vst [vmem:[%s3886 + $0x17c] sm:%s3878] %v4013
                %v4015 = vld [vmem:[%s3885 + $0x100] sm:%s3878]
                %4016 = vst [vmem:[%s3886 + $0x200] sm:%s3878] %v4015
                %v4017 = vld [vmem:[%s3885 + $0x104] sm:%s3878]
                %4018 = vst [vmem:[%s3886 + $0x204] sm:%s3878] %v4017
                %v4019 = vld [vmem:[%s3885 + $0x108] sm:%s3878]
                %4020 = vst [vmem:[%s3886 + $0x208] sm:%s3878] %v4019
                %v4021 = vld [vmem:[%s3885 + $0x10c] sm:%s3878]
                %4022 = vst [vmem:[%s3886 + $0x20c] sm:%s3878] %v4021
                %v4023 = vld [vmem:[%s3885 + $0x110] sm:%s3878]
                %4024 = vst [vmem:[%s3886 + $0x210] sm:%s3878] %v4023
                %v4025 = vld [vmem:[%s3885 + $0x114] sm:%s3878]
                %4026 = vst [vmem:[%s3886 + $0x214] sm:%s3878] %v4025
                %v4027 = vld [vmem:[%s3885 + $0x118] sm:%s3878]
                %4028 = vst [vmem:[%s3886 + $0x218] sm:%s3878] %v4027
                %v4029 = vld [vmem:[%s3885 + $0x11c] sm:%s3878]
                %4030 = vst [vmem:[%s3886 + $0x21c] sm:%s3878] %v4029
                %v4031 = vld [vmem:[%s3885 + $0x120] sm:%s3878]
                %4032 = vst [vmem:[%s3886 + $0x220] sm:%s3878] %v4031
                %v4033 = vld [vmem:[%s3885 + $0x124] sm:%s3878]
                %4034 = vst [vmem:[%s3886 + $0x224] sm:%s3878] %v4033
                %v4035 = vld [vmem:[%s3885 + $0x128] sm:%s3878]
                %4036 = vst [vmem:[%s3886 + $0x228] sm:%s3878] %v4035
                %v4037 = vld [vmem:[%s3885 + $0x12c] sm:%s3878]
                %4038 = vst [vmem:[%s3886 + $0x22c] sm:%s3878] %v4037
                %v4039 = vld [vmem:[%s3885 + $0x130] sm:%s3878]
                %4040 = vst [vmem:[%s3886 + $0x230] sm:%s3878] %v4039
                %v4041 = vld [vmem:[%s3885 + $0x134] sm:%s3878]
                %4042 = vst [vmem:[%s3886 + $0x234] sm:%s3878] %v4041
                %v4043 = vld [vmem:[%s3885 + $0x138] sm:%s3878]
                %4044 = vst [vmem:[%s3886 + $0x238] sm:%s3878] %v4043
                %v4045 = vld [vmem:[%s3885 + $0x13c] sm:%s3878]
                %4046 = vst [vmem:[%s3886 + $0x23c] sm:%s3878] %v4045
                %v4047 = vld [vmem:[%s3885 + $0x140] sm:%s3878]
                %4048 = vst [vmem:[%s3886 + $0x240] sm:%s3878] %v4047
                %v4049 = vld [vmem:[%s3885 + $0x144] sm:%s3878]
                %4050 = vst [vmem:[%s3886 + $0x244] sm:%s3878] %v4049
                %v4051 = vld [vmem:[%s3885 + $0x148] sm:%s3878]
                %4052 = vst [vmem:[%s3886 + $0x248] sm:%s3878] %v4051
                %v4053 = vld [vmem:[%s3885 + $0x14c] sm:%s3878]
                %4054 = vst [vmem:[%s3886 + $0x24c] sm:%s3878] %v4053
                %v4055 = vld [vmem:[%s3885 + $0x150] sm:%s3878]
                %4056 = vst [vmem:[%s3886 + $0x250] sm:%s3878] %v4055
                %v4057 = vld [vmem:[%s3885 + $0x154] sm:%s3878]
                %4058 = vst [vmem:[%s3886 + $0x254] sm:%s3878] %v4057
                %v4059 = vld [vmem:[%s3885 + $0x158] sm:%s3878]
                %4060 = vst [vmem:[%s3886 + $0x258] sm:%s3878] %v4059
                %v4061 = vld [vmem:[%s3885 + $0x15c] sm:%s3878]
                %4062 = vst [vmem:[%s3886 + $0x25c] sm:%s3878] %v4061
                %v4063 = vld [vmem:[%s3885 + $0x160] sm:%s3878]
                %4064 = vst [vmem:[%s3886 + $0x260] sm:%s3878] %v4063
                %v4065 = vld [vmem:[%s3885 + $0x164] sm:%s3878]
                %4066 = vst [vmem:[%s3886 + $0x264] sm:%s3878] %v4065
                %v4067 = vld [vmem:[%s3885 + $0x168] sm:%s3878]
                %4068 = vst [vmem:[%s3886 + $0x268] sm:%s3878] %v4067
                %v4069 = vld [vmem:[%s3885 + $0x16c] sm:%s3878]
                %4070 = vst [vmem:[%s3886 + $0x26c] sm:%s3878] %v4069
                %v4071 = vld [vmem:[%s3885 + $0x170] sm:%s3878]
                %4072 = vst [vmem:[%s3886 + $0x270] sm:%s3878] %v4071
                %v4073 = vld [vmem:[%s3885 + $0x174] sm:%s3878]
                %4074 = vst [vmem:[%s3886 + $0x274] sm:%s3878] %v4073
                %v4075 = vld [vmem:[%s3885 + $0x178] sm:%s3878]
                %4076 = vst [vmem:[%s3886 + $0x278] sm:%s3878] %v4075
                %v4077 = vld [vmem:[%s3885 + $0x17c] sm:%s3878]
                %4078 = vst [vmem:[%s3886 + $0x27c] sm:%s3878] %v4077
                %v4079 = vld [vmem:[%s3885 + $0x180] sm:%s3878]
                %4080 = vst [vmem:[%s3886 + $0x300] sm:%s3878] %v4079
                %v4081 = vld [vmem:[%s3885 + $0x184] sm:%s3878]
                %4082 = vst [vmem:[%s3886 + $0x304] sm:%s3878] %v4081
                %v4083 = vld [vmem:[%s3885 + $0x188] sm:%s3878]
                %4084 = vst [vmem:[%s3886 + $0x308] sm:%s3878] %v4083
                %v4085 = vld [vmem:[%s3885 + $0x18c] sm:%s3878]
                %4086 = vst [vmem:[%s3886 + $0x30c] sm:%s3878] %v4085
                %v4087 = vld [vmem:[%s3885 + $0x190] sm:%s3878]
                %4088 = vst [vmem:[%s3886 + $0x310] sm:%s3878] %v4087
                %v4089 = vld [vmem:[%s3885 + $0x194] sm:%s3878]
                %4090 = vst [vmem:[%s3886 + $0x314] sm:%s3878] %v4089
                %v4091 = vld [vmem:[%s3885 + $0x198] sm:%s3878]
                %4092 = vst [vmem:[%s3886 + $0x318] sm:%s3878] %v4091
                %v4093 = vld [vmem:[%s3885 + $0x19c] sm:%s3878]
                %4094 = vst [vmem:[%s3886 + $0x31c] sm:%s3878] %v4093
                %v4095 = vld [vmem:[%s3885 + $0x1a0] sm:%s3878]
                %4096 = vst [vmem:[%s3886 + $0x320] sm:%s3878] %v4095
                %v4097 = vld [vmem:[%s3885 + $0x1a4] sm:%s3878]
                %4098 = vst [vmem:[%s3886 + $0x324] sm:%s3878] %v4097
                %v4099 = vld [vmem:[%s3885 + $0x1a8] sm:%s3878]
                %4100 = vst [vmem:[%s3886 + $0x328] sm:%s3878] %v4099
                %v4101 = vld [vmem:[%s3885 + $0x1ac] sm:%s3878]
                %4102 = vst [vmem:[%s3886 + $0x32c] sm:%s3878] %v4101
                %v4103 = vld [vmem:[%s3885 + $0x1b0] sm:%s3878]
                %4104 = vst [vmem:[%s3886 + $0x330] sm:%s3878] %v4103
                %v4105 = vld [vmem:[%s3885 + $0x1b4] sm:%s3878]
                %4106 = vst [vmem:[%s3886 + $0x334] sm:%s3878] %v4105
                %v4107 = vld [vmem:[%s3885 + $0x1b8] sm:%s3878]
                %4108 = vst [vmem:[%s3886 + $0x338] sm:%s3878] %v4107
                %v4109 = vld [vmem:[%s3885 + $0x1bc] sm:%s3878]
                %4110 = vst [vmem:[%s3886 + $0x33c] sm:%s3878] %v4109
                %v4111 = vld [vmem:[%s3885 + $0x1c0] sm:%s3878]
                %4112 = vst [vmem:[%s3886 + $0x340] sm:%s3878] %v4111
                %v4113 = vld [vmem:[%s3885 + $0x1c4] sm:%s3878]
                %4114 = vst [vmem:[%s3886 + $0x344] sm:%s3878] %v4113
                %v4115 = vld [vmem:[%s3885 + $0x1c8] sm:%s3878]
                %4116 = vst [vmem:[%s3886 + $0x348] sm:%s3878] %v4115
                %v4117 = vld [vmem:[%s3885 + $0x1cc] sm:%s3878]
                %4118 = vst [vmem:[%s3886 + $0x34c] sm:%s3878] %v4117
                %v4119 = vld [vmem:[%s3885 + $0x1d0] sm:%s3878]
                %4120 = vst [vmem:[%s3886 + $0x350] sm:%s3878] %v4119
                %v4121 = vld [vmem:[%s3885 + $0x1d4] sm:%s3878]
                %4122 = vst [vmem:[%s3886 + $0x354] sm:%s3878] %v4121
                %v4123 = vld [vmem:[%s3885 + $0x1d8] sm:%s3878]
                %4124 = vst [vmem:[%s3886 + $0x358] sm:%s3878] %v4123
                %v4125 = vld [vmem:[%s3885 + $0x1dc] sm:%s3878]
                %4126 = vst [vmem:[%s3886 + $0x35c] sm:%s3878] %v4125
                %v4127 = vld [vmem:[%s3885 + $0x1e0] sm:%s3878]
                %4128 = vst [vmem:[%s3886 + $0x360] sm:%s3878] %v4127
                %v4129 = vld [vmem:[%s3885 + $0x1e4] sm:%s3878]
                %4130 = vst [vmem:[%s3886 + $0x364] sm:%s3878] %v4129
                %v4131 = vld [vmem:[%s3885 + $0x1e8] sm:%s3878]
                %4132 = vst [vmem:[%s3886 + $0x368] sm:%s3878] %v4131
                %v4133 = vld [vmem:[%s3885 + $0x1ec] sm:%s3878]
                %4134 = vst [vmem:[%s3886 + $0x36c] sm:%s3878] %v4133
                %v4135 = vld [vmem:[%s3885 + $0x1f0] sm:%s3878]
                %4136 = vst [vmem:[%s3886 + $0x370] sm:%s3878] %v4135
                %v4137 = vld [vmem:[%s3885 + $0x1f4] sm:%s3878]
                %4138 = vst [vmem:[%s3886 + $0x374] sm:%s3878] %v4137
                %v4139 = vld [vmem:[%s3885 + $0x1f8] sm:%s3878]
                %4140 = vst [vmem:[%s3886 + $0x378] sm:%s3878] %v4139
                %v4141 = vld [vmem:[%s3885 + $0x1fc] sm:%s3878]
                %4142 = vst [vmem:[%s3886 + $0x37c] sm:%s3878] %v4141
              $region142: #{tpu_custom_call.1} parent=136 // loop_footer
                %s3884 = sadd.s32 1, %s3880
              $region143: #{tpu_custom_call.1} parent=136 // loop_footer_branch
                %3879 = sbr.rel target = $region139
              $region144: #{tpu_custom_call.1} parent=136 // loop_exit
                _
            $region137: #{tpu_custom_call.1} parent=128 // pred_fallthru
              _
          $region129: #{tpu_custom_call.1} parent=124 // pred_fallthru
            _
          %4419 = vnop
        $region125: #{tpu_custom_call.1} parent=55 // pred_fallthru
          _
        // Predicated region
        $region163: #{tpu_custom_call.1} parent=55 // pred_check
          %p4420 = pneg %p329
        $region164: #{tpu_custom_call.1} parent=55 // pred_check_branch
          %4422 = sbr.rel (%p4420) target = $region166
        $region165: #{tpu_custom_call.1} parent=55 // pred_region
          %s4423 = smul.u32 32, %s36
          %s4424 = smul.addr %s35, 256
          %s4425 = sadd.s32 %s4423, %s4424
          %s4426 = smul.addr %s4425, 4
          %s4427 = scalar_lea.vmem %s11, %s4426
          // Predicated region
          $region167: #{tpu_custom_call.1} parent=165 // pred_check
            _
          $region168: #{tpu_custom_call.1} parent=165 // pred_check_branch
            %4429 = sbr.rel (0) target = $region170
          $region169: #{tpu_custom_call.1} parent=165 // pred_region
            // Predicated region
            $region171: #{tpu_custom_call.1} parent=169 // pred_check
              _
            $region172: #{tpu_custom_call.1} parent=169 // pred_check_branch
              %4431 = sbr.rel target = $region174
            $region173: #{tpu_custom_call.1} parent=169 // pred_region
              // Predicated region
              $region186: #{tpu_custom_call.1} parent=173 // pred_check
                _
              $region187: #{tpu_custom_call.1} parent=173 // pred_check_branch
                %4701 = sbr.rel (0) target = $region189
              $region188: #{tpu_custom_call.1} parent=173 // pred_region
                loop: start=0, step=1, limit=1
                $region190: #{tpu_custom_call.1} parent=188 // loop_pre_header
                  _
                $region191: #{tpu_custom_call.1} parent=188 // loop_header
                  %s4703 = sphi 0, %s4707
                  %p4704 = scmp.ge.s32.totalorder %s4703, 1
                  %s4708 = sphi %s3305, %s3305
                  %s4709 = sphi %s4427, %s4427
                $region192: #{tpu_custom_call.1} parent=188 // loop_header_branch
                  %4706 = sbr.rel (%p4704) target = $region196
                $region193: #{tpu_custom_call.1} parent=188 // loop_body
                  _
                $region194: #{tpu_custom_call.1} parent=188 // loop_footer
                  %s4707 = sadd.s32 1, %s4703
                $region195: #{tpu_custom_call.1} parent=188 // loop_footer_branch
                  %4702 = sbr.rel target = $region191
                $region196: #{tpu_custom_call.1} parent=188 // loop_exit
                  _
                %s4711 = ssub.s32 16, 1
                loop: start=0, step=1, limit=1
                $region197: #{tpu_custom_call.1} parent=188 // loop_pre_header
                  _
                $region198: #{tpu_custom_call.1} parent=188 // loop_header
                  %s4713 = sphi 0, %s4717
                  %p4714 = scmp.ge.s32.totalorder %s4713, 1
                  %s4718 = sphi %s3305, %s3305
                  %s4719 = sphi %s4427, %s4427
                $region199: #{tpu_custom_call.1} parent=188 // loop_header_branch
                  %4716 = sbr.rel (%p4714) target = $region203
                $region200: #{tpu_custom_call.1} parent=188 // loop_body
                  %v4720 = vld [vmem:[%s4718] sm:%s4711]
                  %4721 = vst [vmem:[%s4719] sm:%s4711] %v4720
                  %v4722 = vld [vmem:[%s4718 + $0x4] sm:%s4711]
                  %4723 = vst [vmem:[%s4719 + $0x4] sm:%s4711] %v4722
                  %v4724 = vld [vmem:[%s4718 + $0x8] sm:%s4711]
                  %4725 = vst [vmem:[%s4719 + $0x8] sm:%s4711] %v4724
                  %v4726 = vld [vmem:[%s4718 + $0xc] sm:%s4711]
                  %4727 = vst [vmem:[%s4719 + $0xc] sm:%s4711] %v4726
                  %v4728 = vld [vmem:[%s4718 + $0x10] sm:%s4711]
                  %4729 = vst [vmem:[%s4719 + $0x10] sm:%s4711] %v4728
                  %v4730 = vld [vmem:[%s4718 + $0x14] sm:%s4711]
                  %4731 = vst [vmem:[%s4719 + $0x14] sm:%s4711] %v4730
                  %v4732 = vld [vmem:[%s4718 + $0x18] sm:%s4711]
                  %4733 = vst [vmem:[%s4719 + $0x18] sm:%s4711] %v4732
                  %v4734 = vld [vmem:[%s4718 + $0x1c] sm:%s4711]
                  %4735 = vst [vmem:[%s4719 + $0x1c] sm:%s4711] %v4734
                  %v4736 = vld [vmem:[%s4718 + $0x20] sm:%s4711]
                  %4737 = vst [vmem:[%s4719 + $0x20] sm:%s4711] %v4736
                  %v4738 = vld [vmem:[%s4718 + $0x24] sm:%s4711]
                  %4739 = vst [vmem:[%s4719 + $0x24] sm:%s4711] %v4738
                  %v4740 = vld [vmem:[%s4718 + $0x28] sm:%s4711]
                  %4741 = vst [vmem:[%s4719 + $0x28] sm:%s4711] %v4740
                  %v4742 = vld [vmem:[%s4718 + $0x2c] sm:%s4711]
                  %4743 = vst [vmem:[%s4719 + $0x2c] sm:%s4711] %v4742
                  %v4744 = vld [vmem:[%s4718 + $0x30] sm:%s4711]
                  %4745 = vst [vmem:[%s4719 + $0x30] sm:%s4711] %v4744
                  %v4746 = vld [vmem:[%s4718 + $0x34] sm:%s4711]
                  %4747 = vst [vmem:[%s4719 + $0x34] sm:%s4711] %v4746
                  %v4748 = vld [vmem:[%s4718 + $0x38] sm:%s4711]
                  %4749 = vst [vmem:[%s4719 + $0x38] sm:%s4711] %v4748
                  %v4750 = vld [vmem:[%s4718 + $0x3c] sm:%s4711]
                  %4751 = vst [vmem:[%s4719 + $0x3c] sm:%s4711] %v4750
                  %v4752 = vld [vmem:[%s4718 + $0x40] sm:%s4711]
                  %4753 = vst [vmem:[%s4719 + $0x40] sm:%s4711] %v4752
                  %v4754 = vld [vmem:[%s4718 + $0x44] sm:%s4711]
                  %4755 = vst [vmem:[%s4719 + $0x44] sm:%s4711] %v4754
                  %v4756 = vld [vmem:[%s4718 + $0x48] sm:%s4711]
                  %4757 = vst [vmem:[%s4719 + $0x48] sm:%s4711] %v4756
                  %v4758 = vld [vmem:[%s4718 + $0x4c] sm:%s4711]
                  %4759 = vst [vmem:[%s4719 + $0x4c] sm:%s4711] %v4758
                  %v4760 = vld [vmem:[%s4718 + $0x50] sm:%s4711]
                  %4761 = vst [vmem:[%s4719 + $0x50] sm:%s4711] %v4760
                  %v4762 = vld [vmem:[%s4718 + $0x54] sm:%s4711]
                  %4763 = vst [vmem:[%s4719 + $0x54] sm:%s4711] %v4762
                  %v4764 = vld [vmem:[%s4718 + $0x58] sm:%s4711]
                  %4765 = vst [vmem:[%s4719 + $0x58] sm:%s4711] %v4764
                  %v4766 = vld [vmem:[%s4718 + $0x5c] sm:%s4711]
                  %4767 = vst [vmem:[%s4719 + $0x5c] sm:%s4711] %v4766
                  %v4768 = vld [vmem:[%s4718 + $0x60] sm:%s4711]
                  %4769 = vst [vmem:[%s4719 + $0x60] sm:%s4711] %v4768
                  %v4770 = vld [vmem:[%s4718 + $0x64] sm:%s4711]
                  %4771 = vst [vmem:[%s4719 + $0x64] sm:%s4711] %v4770
                  %v4772 = vld [vmem:[%s4718 + $0x68] sm:%s4711]
                  %4773 = vst [vmem:[%s4719 + $0x68] sm:%s4711] %v4772
                  %v4774 = vld [vmem:[%s4718 + $0x6c] sm:%s4711]
                  %4775 = vst [vmem:[%s4719 + $0x6c] sm:%s4711] %v4774
                  %v4776 = vld [vmem:[%s4718 + $0x70] sm:%s4711]
                  %4777 = vst [vmem:[%s4719 + $0x70] sm:%s4711] %v4776
                  %v4778 = vld [vmem:[%s4718 + $0x74] sm:%s4711]
                  %4779 = vst [vmem:[%s4719 + $0x74] sm:%s4711] %v4778
                  %v4780 = vld [vmem:[%s4718 + $0x78] sm:%s4711]
                  %4781 = vst [vmem:[%s4719 + $0x78] sm:%s4711] %v4780
                  %v4782 = vld [vmem:[%s4718 + $0x7c] sm:%s4711]
                  %4783 = vst [vmem:[%s4719 + $0x7c] sm:%s4711] %v4782
                  %v4784 = vld [vmem:[%s4718 + $0x80] sm:%s4711]
                  %4785 = vst [vmem:[%s4719 + $0x100] sm:%s4711] %v4784
                  %v4786 = vld [vmem:[%s4718 + $0x84] sm:%s4711]
                  %4787 = vst [vmem:[%s4719 + $0x104] sm:%s4711] %v4786
                  %v4788 = vld [vmem:[%s4718 + $0x88] sm:%s4711]
                  %4789 = vst [vmem:[%s4719 + $0x108] sm:%s4711] %v4788
                  %v4790 = vld [vmem:[%s4718 + $0x8c] sm:%s4711]
                  %4791 = vst [vmem:[%s4719 + $0x10c] sm:%s4711] %v4790
                  %v4792 = vld [vmem:[%s4718 + $0x90] sm:%s4711]
                  %4793 = vst [vmem:[%s4719 + $0x110] sm:%s4711] %v4792
                  %v4794 = vld [vmem:[%s4718 + $0x94] sm:%s4711]
                  %4795 = vst [vmem:[%s4719 + $0x114] sm:%s4711] %v4794
                  %v4796 = vld [vmem:[%s4718 + $0x98] sm:%s4711]
                  %4797 = vst [vmem:[%s4719 + $0x118] sm:%s4711] %v4796
                  %v4798 = vld [vmem:[%s4718 + $0x9c] sm:%s4711]
                  %4799 = vst [vmem:[%s4719 + $0x11c] sm:%s4711] %v4798
                  %v4800 = vld [vmem:[%s4718 + $0xa0] sm:%s4711]
                  %4801 = vst [vmem:[%s4719 + $0x120] sm:%s4711] %v4800
                  %v4802 = vld [vmem:[%s4718 + $0xa4] sm:%s4711]
                  %4803 = vst [vmem:[%s4719 + $0x124] sm:%s4711] %v4802
                  %v4804 = vld [vmem:[%s4718 + $0xa8] sm:%s4711]
                  %4805 = vst [vmem:[%s4719 + $0x128] sm:%s4711] %v4804
                  %v4806 = vld [vmem:[%s4718 + $0xac] sm:%s4711]
                  %4807 = vst [vmem:[%s4719 + $0x12c] sm:%s4711] %v4806
                  %v4808 = vld [vmem:[%s4718 + $0xb0] sm:%s4711]
                  %4809 = vst [vmem:[%s4719 + $0x130] sm:%s4711] %v4808
                  %v4810 = vld [vmem:[%s4718 + $0xb4] sm:%s4711]
                  %4811 = vst [vmem:[%s4719 + $0x134] sm:%s4711] %v4810
                  %v4812 = vld [vmem:[%s4718 + $0xb8] sm:%s4711]
                  %4813 = vst [vmem:[%s4719 + $0x138] sm:%s4711] %v4812
                  %v4814 = vld [vmem:[%s4718 + $0xbc] sm:%s4711]
                  %4815 = vst [vmem:[%s4719 + $0x13c] sm:%s4711] %v4814
                  %v4816 = vld [vmem:[%s4718 + $0xc0] sm:%s4711]
                  %4817 = vst [vmem:[%s4719 + $0x140] sm:%s4711] %v4816
                  %v4818 = vld [vmem:[%s4718 + $0xc4] sm:%s4711]
                  %4819 = vst [vmem:[%s4719 + $0x144] sm:%s4711] %v4818
                  %v4820 = vld [vmem:[%s4718 + $0xc8] sm:%s4711]
                  %4821 = vst [vmem:[%s4719 + $0x148] sm:%s4711] %v4820
                  %v4822 = vld [vmem:[%s4718 + $0xcc] sm:%s4711]
                  %4823 = vst [vmem:[%s4719 + $0x14c] sm:%s4711] %v4822
                  %v4824 = vld [vmem:[%s4718 + $0xd0] sm:%s4711]
                  %4825 = vst [vmem:[%s4719 + $0x150] sm:%s4711] %v4824
                  %v4826 = vld [vmem:[%s4718 + $0xd4] sm:%s4711]
                  %4827 = vst [vmem:[%s4719 + $0x154] sm:%s4711] %v4826
                  %v4828 = vld [vmem:[%s4718 + $0xd8] sm:%s4711]
                  %4829 = vst [vmem:[%s4719 + $0x158] sm:%s4711] %v4828
                  %v4830 = vld [vmem:[%s4718 + $0xdc] sm:%s4711]
                  %4831 = vst [vmem:[%s4719 + $0x15c] sm:%s4711] %v4830
                  %v4832 = vld [vmem:[%s4718 + $0xe0] sm:%s4711]
                  %4833 = vst [vmem:[%s4719 + $0x160] sm:%s4711] %v4832
                  %v4834 = vld [vmem:[%s4718 + $0xe4] sm:%s4711]
                  %4835 = vst [vmem:[%s4719 + $0x164] sm:%s4711] %v4834
                  %v4836 = vld [vmem:[%s4718 + $0xe8] sm:%s4711]
                  %4837 = vst [vmem:[%s4719 + $0x168] sm:%s4711] %v4836
                  %v4838 = vld [vmem:[%s4718 + $0xec] sm:%s4711]
                  %4839 = vst [vmem:[%s4719 + $0x16c] sm:%s4711] %v4838
                  %v4840 = vld [vmem:[%s4718 + $0xf0] sm:%s4711]
                  %4841 = vst [vmem:[%s4719 + $0x170] sm:%s4711] %v4840
                  %v4842 = vld [vmem:[%s4718 + $0xf4] sm:%s4711]
                  %4843 = vst [vmem:[%s4719 + $0x174] sm:%s4711] %v4842
                  %v4844 = vld [vmem:[%s4718 + $0xf8] sm:%s4711]
                  %4845 = vst [vmem:[%s4719 + $0x178] sm:%s4711] %v4844
                  %v4846 = vld [vmem:[%s4718 + $0xfc] sm:%s4711]
                  %4847 = vst [vmem:[%s4719 + $0x17c] sm:%s4711] %v4846
                  %v4848 = vld [vmem:[%s4718 + $0x100] sm:%s4711]
                  %4849 = vst [vmem:[%s4719 + $0x200] sm:%s4711] %v4848
                  %v4850 = vld [vmem:[%s4718 + $0x104] sm:%s4711]
                  %4851 = vst [vmem:[%s4719 + $0x204] sm:%s4711] %v4850
                  %v4852 = vld [vmem:[%s4718 + $0x108] sm:%s4711]
                  %4853 = vst [vmem:[%s4719 + $0x208] sm:%s4711] %v4852
                  %v4854 = vld [vmem:[%s4718 + $0x10c] sm:%s4711]
                  %4855 = vst [vmem:[%s4719 + $0x20c] sm:%s4711] %v4854
                  %v4856 = vld [vmem:[%s4718 + $0x110] sm:%s4711]
                  %4857 = vst [vmem:[%s4719 + $0x210] sm:%s4711] %v4856
                  %v4858 = vld [vmem:[%s4718 + $0x114] sm:%s4711]
                  %4859 = vst [vmem:[%s4719 + $0x214] sm:%s4711] %v4858
                  %v4860 = vld [vmem:[%s4718 + $0x118] sm:%s4711]
                  %4861 = vst [vmem:[%s4719 + $0x218] sm:%s4711] %v4860
                  %v4862 = vld [vmem:[%s4718 + $0x11c] sm:%s4711]
                  %4863 = vst [vmem:[%s4719 + $0x21c] sm:%s4711] %v4862
                  %v4864 = vld [vmem:[%s4718 + $0x120] sm:%s4711]
                  %4865 = vst [vmem:[%s4719 + $0x220] sm:%s4711] %v4864
                  %v4866 = vld [vmem:[%s4718 + $0x124] sm:%s4711]
                  %4867 = vst [vmem:[%s4719 + $0x224] sm:%s4711] %v4866
                  %v4868 = vld [vmem:[%s4718 + $0x128] sm:%s4711]
                  %4869 = vst [vmem:[%s4719 + $0x228] sm:%s4711] %v4868
                  %v4870 = vld [vmem:[%s4718 + $0x12c] sm:%s4711]
                  %4871 = vst [vmem:[%s4719 + $0x22c] sm:%s4711] %v4870
                  %v4872 = vld [vmem:[%s4718 + $0x130] sm:%s4711]
                  %4873 = vst [vmem:[%s4719 + $0x230] sm:%s4711] %v4872
                  %v4874 = vld [vmem:[%s4718 + $0x134] sm:%s4711]
                  %4875 = vst [vmem:[%s4719 + $0x234] sm:%s4711] %v4874
                  %v4876 = vld [vmem:[%s4718 + $0x138] sm:%s4711]
                  %4877 = vst [vmem:[%s4719 + $0x238] sm:%s4711] %v4876
                  %v4878 = vld [vmem:[%s4718 + $0x13c] sm:%s4711]
                  %4879 = vst [vmem:[%s4719 + $0x23c] sm:%s4711] %v4878
                  %v4880 = vld [vmem:[%s4718 + $0x140] sm:%s4711]
                  %4881 = vst [vmem:[%s4719 + $0x240] sm:%s4711] %v4880
                  %v4882 = vld [vmem:[%s4718 + $0x144] sm:%s4711]
                  %4883 = vst [vmem:[%s4719 + $0x244] sm:%s4711] %v4882
                  %v4884 = vld [vmem:[%s4718 + $0x148] sm:%s4711]
                  %4885 = vst [vmem:[%s4719 + $0x248] sm:%s4711] %v4884
                  %v4886 = vld [vmem:[%s4718 + $0x14c] sm:%s4711]
                  %4887 = vst [vmem:[%s4719 + $0x24c] sm:%s4711] %v4886
                  %v4888 = vld [vmem:[%s4718 + $0x150] sm:%s4711]
                  %4889 = vst [vmem:[%s4719 + $0x250] sm:%s4711] %v4888
                  %v4890 = vld [vmem:[%s4718 + $0x154] sm:%s4711]
                  %4891 = vst [vmem:[%s4719 + $0x254] sm:%s4711] %v4890
                  %v4892 = vld [vmem:[%s4718 + $0x158] sm:%s4711]
                  %4893 = vst [vmem:[%s4719 + $0x258] sm:%s4711] %v4892
                  %v4894 = vld [vmem:[%s4718 + $0x15c] sm:%s4711]
                  %4895 = vst [vmem:[%s4719 + $0x25c] sm:%s4711] %v4894
                  %v4896 = vld [vmem:[%s4718 + $0x160] sm:%s4711]
                  %4897 = vst [vmem:[%s4719 + $0x260] sm:%s4711] %v4896
                  %v4898 = vld [vmem:[%s4718 + $0x164] sm:%s4711]
                  %4899 = vst [vmem:[%s4719 + $0x264] sm:%s4711] %v4898
                  %v4900 = vld [vmem:[%s4718 + $0x168] sm:%s4711]
                  %4901 = vst [vmem:[%s4719 + $0x268] sm:%s4711] %v4900
                  %v4902 = vld [vmem:[%s4718 + $0x16c] sm:%s4711]
                  %4903 = vst [vmem:[%s4719 + $0x26c] sm:%s4711] %v4902
                  %v4904 = vld [vmem:[%s4718 + $0x170] sm:%s4711]
                  %4905 = vst [vmem:[%s4719 + $0x270] sm:%s4711] %v4904
                  %v4906 = vld [vmem:[%s4718 + $0x174] sm:%s4711]
                  %4907 = vst [vmem:[%s4719 + $0x274] sm:%s4711] %v4906
                  %v4908 = vld [vmem:[%s4718 + $0x178] sm:%s4711]
                  %4909 = vst [vmem:[%s4719 + $0x278] sm:%s4711] %v4908
                  %v4910 = vld [vmem:[%s4718 + $0x17c] sm:%s4711]
                  %4911 = vst [vmem:[%s4719 + $0x27c] sm:%s4711] %v4910
                  %v4912 = vld [vmem:[%s4718 + $0x180] sm:%s4711]
                  %4913 = vst [vmem:[%s4719 + $0x300] sm:%s4711] %v4912
                  %v4914 = vld [vmem:[%s4718 + $0x184] sm:%s4711]
                  %4915 = vst [vmem:[%s4719 + $0x304] sm:%s4711] %v4914
                  %v4916 = vld [vmem:[%s4718 + $0x188] sm:%s4711]
                  %4917 = vst [vmem:[%s4719 + $0x308] sm:%s4711] %v4916
                  %v4918 = vld [vmem:[%s4718 + $0x18c] sm:%s4711]
                  %4919 = vst [vmem:[%s4719 + $0x30c] sm:%s4711] %v4918
                  %v4920 = vld [vmem:[%s4718 + $0x190] sm:%s4711]
                  %4921 = vst [vmem:[%s4719 + $0x310] sm:%s4711] %v4920
                  %v4922 = vld [vmem:[%s4718 + $0x194] sm:%s4711]
                  %4923 = vst [vmem:[%s4719 + $0x314] sm:%s4711] %v4922
                  %v4924 = vld [vmem:[%s4718 + $0x198] sm:%s4711]
                  %4925 = vst [vmem:[%s4719 + $0x318] sm:%s4711] %v4924
                  %v4926 = vld [vmem:[%s4718 + $0x19c] sm:%s4711]
                  %4927 = vst [vmem:[%s4719 + $0x31c] sm:%s4711] %v4926
                  %v4928 = vld [vmem:[%s4718 + $0x1a0] sm:%s4711]
                  %4929 = vst [vmem:[%s4719 + $0x320] sm:%s4711] %v4928
                  %v4930 = vld [vmem:[%s4718 + $0x1a4] sm:%s4711]
                  %4931 = vst [vmem:[%s4719 + $0x324] sm:%s4711] %v4930
                  %v4932 = vld [vmem:[%s4718 + $0x1a8] sm:%s4711]
                  %4933 = vst [vmem:[%s4719 + $0x328] sm:%s4711] %v4932
                  %v4934 = vld [vmem:[%s4718 + $0x1ac] sm:%s4711]
                  %4935 = vst [vmem:[%s4719 + $0x32c] sm:%s4711] %v4934
                  %v4936 = vld [vmem:[%s4718 + $0x1b0] sm:%s4711]
                  %4937 = vst [vmem:[%s4719 + $0x330] sm:%s4711] %v4936
                  %v4938 = vld [vmem:[%s4718 + $0x1b4] sm:%s4711]
                  %4939 = vst [vmem:[%s4719 + $0x334] sm:%s4711] %v4938
                  %v4940 = vld [vmem:[%s4718 + $0x1b8] sm:%s4711]
                  %4941 = vst [vmem:[%s4719 + $0x338] sm:%s4711] %v4940
                  %v4942 = vld [vmem:[%s4718 + $0x1bc] sm:%s4711]
                  %4943 = vst [vmem:[%s4719 + $0x33c] sm:%s4711] %v4942
                  %v4944 = vld [vmem:[%s4718 + $0x1c0] sm:%s4711]
                  %4945 = vst [vmem:[%s4719 + $0x340] sm:%s4711] %v4944
                  %v4946 = vld [vmem:[%s4718 + $0x1c4] sm:%s4711]
                  %4947 = vst [vmem:[%s4719 + $0x344] sm:%s4711] %v4946
                  %v4948 = vld [vmem:[%s4718 + $0x1c8] sm:%s4711]
                  %4949 = vst [vmem:[%s4719 + $0x348] sm:%s4711] %v4948
                  %v4950 = vld [vmem:[%s4718 + $0x1cc] sm:%s4711]
                  %4951 = vst [vmem:[%s4719 + $0x34c] sm:%s4711] %v4950
                  %v4952 = vld [vmem:[%s4718 + $0x1d0] sm:%s4711]
                  %4953 = vst [vmem:[%s4719 + $0x350] sm:%s4711] %v4952
                  %v4954 = vld [vmem:[%s4718 + $0x1d4] sm:%s4711]
                  %4955 = vst [vmem:[%s4719 + $0x354] sm:%s4711] %v4954
                  %v4956 = vld [vmem:[%s4718 + $0x1d8] sm:%s4711]
                  %4957 = vst [vmem:[%s4719 + $0x358] sm:%s4711] %v4956
                  %v4958 = vld [vmem:[%s4718 + $0x1dc] sm:%s4711]
                  %4959 = vst [vmem:[%s4719 + $0x35c] sm:%s4711] %v4958
                  %v4960 = vld [vmem:[%s4718 + $0x1e0] sm:%s4711]
                  %4961 = vst [vmem:[%s4719 + $0x360] sm:%s4711] %v4960
                  %v4962 = vld [vmem:[%s4718 + $0x1e4] sm:%s4711]
                  %4963 = vst [vmem:[%s4719 + $0x364] sm:%s4711] %v4962
                  %v4964 = vld [vmem:[%s4718 + $0x1e8] sm:%s4711]
                  %4965 = vst [vmem:[%s4719 + $0x368] sm:%s4711] %v4964
                  %v4966 = vld [vmem:[%s4718 + $0x1ec] sm:%s4711]
                  %4967 = vst [vmem:[%s4719 + $0x36c] sm:%s4711] %v4966
                  %v4968 = vld [vmem:[%s4718 + $0x1f0] sm:%s4711]
                  %4969 = vst [vmem:[%s4719 + $0x370] sm:%s4711] %v4968
                  %v4970 = vld [vmem:[%s4718 + $0x1f4] sm:%s4711]
                  %4971 = vst [vmem:[%s4719 + $0x374] sm:%s4711] %v4970
                  %v4972 = vld [vmem:[%s4718 + $0x1f8] sm:%s4711]
                  %4973 = vst [vmem:[%s4719 + $0x378] sm:%s4711] %v4972
                  %v4974 = vld [vmem:[%s4718 + $0x1fc] sm:%s4711]
                  %4975 = vst [vmem:[%s4719 + $0x37c] sm:%s4711] %v4974
                $region201: #{tpu_custom_call.1} parent=188 // loop_footer
                  %s4717 = sadd.s32 1, %s4713
                $region202: #{tpu_custom_call.1} parent=188 // loop_footer_branch
                  %4712 = sbr.rel target = $region198
                $region203: #{tpu_custom_call.1} parent=188 // loop_exit
                  _
              $region189: #{tpu_custom_call.1} parent=173 // pred_fallthru
                _
            $region174: #{tpu_custom_call.1} parent=169 // pred_fallthru
              _
            // Predicated region
            $region175: #{tpu_custom_call.1} parent=169 // pred_check
              _
            $region176: #{tpu_custom_call.1} parent=169 // pred_check_branch
              %4433 = sbr.rel (0) target = $region178
            $region177: #{tpu_custom_call.1} parent=169 // pred_region
              %s4435 = ssub.s32 16, 1
              loop: start=0, step=1, limit=1
              $region179: #{tpu_custom_call.1} parent=177 // loop_pre_header
                _
              $region180: #{tpu_custom_call.1} parent=177 // loop_header
                %s4437 = sphi 0, %s4441
                %p4438 = scmp.ge.s32.totalorder %s4437, 1
                %s4442 = sphi %s3305, %s3305
                %s4443 = sphi %s4427, %s4427
              $region181: #{tpu_custom_call.1} parent=177 // loop_header_branch
                %4440 = sbr.rel (%p4438) target = $region185
              $region182: #{tpu_custom_call.1} parent=177 // loop_body
                %v4444 = vld [vmem:[%s4442] sm:%s4435]
                %4445 = vst [vmem:[%s4443] sm:%s4435] %v4444
                %v4446 = vld [vmem:[%s4442 + $0x4] sm:%s4435]
                %4447 = vst [vmem:[%s4443 + $0x4] sm:%s4435] %v4446
                %v4448 = vld [vmem:[%s4442 + $0x8] sm:%s4435]
                %4449 = vst [vmem:[%s4443 + $0x8] sm:%s4435] %v4448
                %v4450 = vld [vmem:[%s4442 + $0xc] sm:%s4435]
                %4451 = vst [vmem:[%s4443 + $0xc] sm:%s4435] %v4450
                %v4452 = vld [vmem:[%s4442 + $0x10] sm:%s4435]
                %4453 = vst [vmem:[%s4443 + $0x10] sm:%s4435] %v4452
                %v4454 = vld [vmem:[%s4442 + $0x14] sm:%s4435]
                %4455 = vst [vmem:[%s4443 + $0x14] sm:%s4435] %v4454
                %v4456 = vld [vmem:[%s4442 + $0x18] sm:%s4435]
                %4457 = vst [vmem:[%s4443 + $0x18] sm:%s4435] %v4456
                %v4458 = vld [vmem:[%s4442 + $0x1c] sm:%s4435]
                %4459 = vst [vmem:[%s4443 + $0x1c] sm:%s4435] %v4458
                %v4460 = vld [vmem:[%s4442 + $0x20] sm:%s4435]
                %4461 = vst [vmem:[%s4443 + $0x20] sm:%s4435] %v4460
                %v4462 = vld [vmem:[%s4442 + $0x24] sm:%s4435]
                %4463 = vst [vmem:[%s4443 + $0x24] sm:%s4435] %v4462
                %v4464 = vld [vmem:[%s4442 + $0x28] sm:%s4435]
                %4465 = vst [vmem:[%s4443 + $0x28] sm:%s4435] %v4464
                %v4466 = vld [vmem:[%s4442 + $0x2c] sm:%s4435]
                %4467 = vst [vmem:[%s4443 + $0x2c] sm:%s4435] %v4466
                %v4468 = vld [vmem:[%s4442 + $0x30] sm:%s4435]
                %4469 = vst [vmem:[%s4443 + $0x30] sm:%s4435] %v4468
                %v4470 = vld [vmem:[%s4442 + $0x34] sm:%s4435]
                %4471 = vst [vmem:[%s4443 + $0x34] sm:%s4435] %v4470
                %v4472 = vld [vmem:[%s4442 + $0x38] sm:%s4435]
                %4473 = vst [vmem:[%s4443 + $0x38] sm:%s4435] %v4472
                %v4474 = vld [vmem:[%s4442 + $0x3c] sm:%s4435]
                %4475 = vst [vmem:[%s4443 + $0x3c] sm:%s4435] %v4474
                %v4476 = vld [vmem:[%s4442 + $0x40] sm:%s4435]
                %4477 = vst [vmem:[%s4443 + $0x40] sm:%s4435] %v4476
                %v4478 = vld [vmem:[%s4442 + $0x44] sm:%s4435]
                %4479 = vst [vmem:[%s4443 + $0x44] sm:%s4435] %v4478
                %v4480 = vld [vmem:[%s4442 + $0x48] sm:%s4435]
                %4481 = vst [vmem:[%s4443 + $0x48] sm:%s4435] %v4480
                %v4482 = vld [vmem:[%s4442 + $0x4c] sm:%s4435]
                %4483 = vst [vmem:[%s4443 + $0x4c] sm:%s4435] %v4482
                %v4484 = vld [vmem:[%s4442 + $0x50] sm:%s4435]
                %4485 = vst [vmem:[%s4443 + $0x50] sm:%s4435] %v4484
                %v4486 = vld [vmem:[%s4442 + $0x54] sm:%s4435]
                %4487 = vst [vmem:[%s4443 + $0x54] sm:%s4435] %v4486
                %v4488 = vld [vmem:[%s4442 + $0x58] sm:%s4435]
                %4489 = vst [vmem:[%s4443 + $0x58] sm:%s4435] %v4488
                %v4490 = vld [vmem:[%s4442 + $0x5c] sm:%s4435]
                %4491 = vst [vmem:[%s4443 + $0x5c] sm:%s4435] %v4490
                %v4492 = vld [vmem:[%s4442 + $0x60] sm:%s4435]
                %4493 = vst [vmem:[%s4443 + $0x60] sm:%s4435] %v4492
                %v4494 = vld [vmem:[%s4442 + $0x64] sm:%s4435]
                %4495 = vst [vmem:[%s4443 + $0x64] sm:%s4435] %v4494
                %v4496 = vld [vmem:[%s4442 + $0x68] sm:%s4435]
                %4497 = vst [vmem:[%s4443 + $0x68] sm:%s4435] %v4496
                %v4498 = vld [vmem:[%s4442 + $0x6c] sm:%s4435]
                %4499 = vst [vmem:[%s4443 + $0x6c] sm:%s4435] %v4498
                %v4500 = vld [vmem:[%s4442 + $0x70] sm:%s4435]
                %4501 = vst [vmem:[%s4443 + $0x70] sm:%s4435] %v4500
                %v4502 = vld [vmem:[%s4442 + $0x74] sm:%s4435]
                %4503 = vst [vmem:[%s4443 + $0x74] sm:%s4435] %v4502
                %v4504 = vld [vmem:[%s4442 + $0x78] sm:%s4435]
                %4505 = vst [vmem:[%s4443 + $0x78] sm:%s4435] %v4504
                %v4506 = vld [vmem:[%s4442 + $0x7c] sm:%s4435]
                %4507 = vst [vmem:[%s4443 + $0x7c] sm:%s4435] %v4506
                %v4508 = vld [vmem:[%s4442 + $0x80] sm:%s4435]
                %4509 = vst [vmem:[%s4443 + $0x100] sm:%s4435] %v4508
                %v4510 = vld [vmem:[%s4442 + $0x84] sm:%s4435]
                %4511 = vst [vmem:[%s4443 + $0x104] sm:%s4435] %v4510
                %v4512 = vld [vmem:[%s4442 + $0x88] sm:%s4435]
                %4513 = vst [vmem:[%s4443 + $0x108] sm:%s4435] %v4512
                %v4514 = vld [vmem:[%s4442 + $0x8c] sm:%s4435]
                %4515 = vst [vmem:[%s4443 + $0x10c] sm:%s4435] %v4514
                %v4516 = vld [vmem:[%s4442 + $0x90] sm:%s4435]
                %4517 = vst [vmem:[%s4443 + $0x110] sm:%s4435] %v4516
                %v4518 = vld [vmem:[%s4442 + $0x94] sm:%s4435]
                %4519 = vst [vmem:[%s4443 + $0x114] sm:%s4435] %v4518
                %v4520 = vld [vmem:[%s4442 + $0x98] sm:%s4435]
                %4521 = vst [vmem:[%s4443 + $0x118] sm:%s4435] %v4520
                %v4522 = vld [vmem:[%s4442 + $0x9c] sm:%s4435]
                %4523 = vst [vmem:[%s4443 + $0x11c] sm:%s4435] %v4522
                %v4524 = vld [vmem:[%s4442 + $0xa0] sm:%s4435]
                %4525 = vst [vmem:[%s4443 + $0x120] sm:%s4435] %v4524
                %v4526 = vld [vmem:[%s4442 + $0xa4] sm:%s4435]
                %4527 = vst [vmem:[%s4443 + $0x124] sm:%s4435] %v4526
                %v4528 = vld [vmem:[%s4442 + $0xa8] sm:%s4435]
                %4529 = vst [vmem:[%s4443 + $0x128] sm:%s4435] %v4528
                %v4530 = vld [vmem:[%s4442 + $0xac] sm:%s4435]
                %4531 = vst [vmem:[%s4443 + $0x12c] sm:%s4435] %v4530
                %v4532 = vld [vmem:[%s4442 + $0xb0] sm:%s4435]
                %4533 = vst [vmem:[%s4443 + $0x130] sm:%s4435] %v4532
                %v4534 = vld [vmem:[%s4442 + $0xb4] sm:%s4435]
                %4535 = vst [vmem:[%s4443 + $0x134] sm:%s4435] %v4534
                %v4536 = vld [vmem:[%s4442 + $0xb8] sm:%s4435]
                %4537 = vst [vmem:[%s4443 + $0x138] sm:%s4435] %v4536
                %v4538 = vld [vmem:[%s4442 + $0xbc] sm:%s4435]
                %4539 = vst [vmem:[%s4443 + $0x13c] sm:%s4435] %v4538
                %v4540 = vld [vmem:[%s4442 + $0xc0] sm:%s4435]
                %4541 = vst [vmem:[%s4443 + $0x140] sm:%s4435] %v4540
                %v4542 = vld [vmem:[%s4442 + $0xc4] sm:%s4435]
                %4543 = vst [vmem:[%s4443 + $0x144] sm:%s4435] %v4542
                %v4544 = vld [vmem:[%s4442 + $0xc8] sm:%s4435]
                %4545 = vst [vmem:[%s4443 + $0x148] sm:%s4435] %v4544
                %v4546 = vld [vmem:[%s4442 + $0xcc] sm:%s4435]
                %4547 = vst [vmem:[%s4443 + $0x14c] sm:%s4435] %v4546
                %v4548 = vld [vmem:[%s4442 + $0xd0] sm:%s4435]
                %4549 = vst [vmem:[%s4443 + $0x150] sm:%s4435] %v4548
                %v4550 = vld [vmem:[%s4442 + $0xd4] sm:%s4435]
                %4551 = vst [vmem:[%s4443 + $0x154] sm:%s4435] %v4550
                %v4552 = vld [vmem:[%s4442 + $0xd8] sm:%s4435]
                %4553 = vst [vmem:[%s4443 + $0x158] sm:%s4435] %v4552
                %v4554 = vld [vmem:[%s4442 + $0xdc] sm:%s4435]
                %4555 = vst [vmem:[%s4443 + $0x15c] sm:%s4435] %v4554
                %v4556 = vld [vmem:[%s4442 + $0xe0] sm:%s4435]
                %4557 = vst [vmem:[%s4443 + $0x160] sm:%s4435] %v4556
                %v4558 = vld [vmem:[%s4442 + $0xe4] sm:%s4435]
                %4559 = vst [vmem:[%s4443 + $0x164] sm:%s4435] %v4558
                %v4560 = vld [vmem:[%s4442 + $0xe8] sm:%s4435]
                %4561 = vst [vmem:[%s4443 + $0x168] sm:%s4435] %v4560
                %v4562 = vld [vmem:[%s4442 + $0xec] sm:%s4435]
                %4563 = vst [vmem:[%s4443 + $0x16c] sm:%s4435] %v4562
                %v4564 = vld [vmem:[%s4442 + $0xf0] sm:%s4435]
                %4565 = vst [vmem:[%s4443 + $0x170] sm:%s4435] %v4564
                %v4566 = vld [vmem:[%s4442 + $0xf4] sm:%s4435]
                %4567 = vst [vmem:[%s4443 + $0x174] sm:%s4435] %v4566
                %v4568 = vld [vmem:[%s4442 + $0xf8] sm:%s4435]
                %4569 = vst [vmem:[%s4443 + $0x178] sm:%s4435] %v4568
                %v4570 = vld [vmem:[%s4442 + $0xfc] sm:%s4435]
                %4571 = vst [vmem:[%s4443 + $0x17c] sm:%s4435] %v4570
                %v4572 = vld [vmem:[%s4442 + $0x100] sm:%s4435]
                %4573 = vst [vmem:[%s4443 + $0x200] sm:%s4435] %v4572
                %v4574 = vld [vmem:[%s4442 + $0x104] sm:%s4435]
                %4575 = vst [vmem:[%s4443 + $0x204] sm:%s4435] %v4574
                %v4576 = vld [vmem:[%s4442 + $0x108] sm:%s4435]
                %4577 = vst [vmem:[%s4443 + $0x208] sm:%s4435] %v4576
                %v4578 = vld [vmem:[%s4442 + $0x10c] sm:%s4435]
                %4579 = vst [vmem:[%s4443 + $0x20c] sm:%s4435] %v4578
                %v4580 = vld [vmem:[%s4442 + $0x110] sm:%s4435]
                %4581 = vst [vmem:[%s4443 + $0x210] sm:%s4435] %v4580
                %v4582 = vld [vmem:[%s4442 + $0x114] sm:%s4435]
                %4583 = vst [vmem:[%s4443 + $0x214] sm:%s4435] %v4582
                %v4584 = vld [vmem:[%s4442 + $0x118] sm:%s4435]
                %4585 = vst [vmem:[%s4443 + $0x218] sm:%s4435] %v4584
                %v4586 = vld [vmem:[%s4442 + $0x11c] sm:%s4435]
                %4587 = vst [vmem:[%s4443 + $0x21c] sm:%s4435] %v4586
                %v4588 = vld [vmem:[%s4442 + $0x120] sm:%s4435]
                %4589 = vst [vmem:[%s4443 + $0x220] sm:%s4435] %v4588
                %v4590 = vld [vmem:[%s4442 + $0x124] sm:%s4435]
                %4591 = vst [vmem:[%s4443 + $0x224] sm:%s4435] %v4590
                %v4592 = vld [vmem:[%s4442 + $0x128] sm:%s4435]
                %4593 = vst [vmem:[%s4443 + $0x228] sm:%s4435] %v4592
                %v4594 = vld [vmem:[%s4442 + $0x12c] sm:%s4435]
                %4595 = vst [vmem:[%s4443 + $0x22c] sm:%s4435] %v4594
                %v4596 = vld [vmem:[%s4442 + $0x130] sm:%s4435]
                %4597 = vst [vmem:[%s4443 + $0x230] sm:%s4435] %v4596
                %v4598 = vld [vmem:[%s4442 + $0x134] sm:%s4435]
                %4599 = vst [vmem:[%s4443 + $0x234] sm:%s4435] %v4598
                %v4600 = vld [vmem:[%s4442 + $0x138] sm:%s4435]
                %4601 = vst [vmem:[%s4443 + $0x238] sm:%s4435] %v4600
                %v4602 = vld [vmem:[%s4442 + $0x13c] sm:%s4435]
                %4603 = vst [vmem:[%s4443 + $0x23c] sm:%s4435] %v4602
                %v4604 = vld [vmem:[%s4442 + $0x140] sm:%s4435]
                %4605 = vst [vmem:[%s4443 + $0x240] sm:%s4435] %v4604
                %v4606 = vld [vmem:[%s4442 + $0x144] sm:%s4435]
                %4607 = vst [vmem:[%s4443 + $0x244] sm:%s4435] %v4606
                %v4608 = vld [vmem:[%s4442 + $0x148] sm:%s4435]
                %4609 = vst [vmem:[%s4443 + $0x248] sm:%s4435] %v4608
                %v4610 = vld [vmem:[%s4442 + $0x14c] sm:%s4435]
                %4611 = vst [vmem:[%s4443 + $0x24c] sm:%s4435] %v4610
                %v4612 = vld [vmem:[%s4442 + $0x150] sm:%s4435]
                %4613 = vst [vmem:[%s4443 + $0x250] sm:%s4435] %v4612
                %v4614 = vld [vmem:[%s4442 + $0x154] sm:%s4435]
                %4615 = vst [vmem:[%s4443 + $0x254] sm:%s4435] %v4614
                %v4616 = vld [vmem:[%s4442 + $0x158] sm:%s4435]
                %4617 = vst [vmem:[%s4443 + $0x258] sm:%s4435] %v4616
                %v4618 = vld [vmem:[%s4442 + $0x15c] sm:%s4435]
                %4619 = vst [vmem:[%s4443 + $0x25c] sm:%s4435] %v4618
                %v4620 = vld [vmem:[%s4442 + $0x160] sm:%s4435]
                %4621 = vst [vmem:[%s4443 + $0x260] sm:%s4435] %v4620
                %v4622 = vld [vmem:[%s4442 + $0x164] sm:%s4435]
                %4623 = vst [vmem:[%s4443 + $0x264] sm:%s4435] %v4622
                %v4624 = vld [vmem:[%s4442 + $0x168] sm:%s4435]
                %4625 = vst [vmem:[%s4443 + $0x268] sm:%s4435] %v4624
                %v4626 = vld [vmem:[%s4442 + $0x16c] sm:%s4435]
                %4627 = vst [vmem:[%s4443 + $0x26c] sm:%s4435] %v4626
                %v4628 = vld [vmem:[%s4442 + $0x170] sm:%s4435]
                %4629 = vst [vmem:[%s4443 + $0x270] sm:%s4435] %v4628
                %v4630 = vld [vmem:[%s4442 + $0x174] sm:%s4435]
                %4631 = vst [vmem:[%s4443 + $0x274] sm:%s4435] %v4630
                %v4632 = vld [vmem:[%s4442 + $0x178] sm:%s4435]
                %4633 = vst [vmem:[%s4443 + $0x278] sm:%s4435] %v4632
                %v4634 = vld [vmem:[%s4442 + $0x17c] sm:%s4435]
                %4635 = vst [vmem:[%s4443 + $0x27c] sm:%s4435] %v4634
                %v4636 = vld [vmem:[%s4442 + $0x180] sm:%s4435]
                %4637 = vst [vmem:[%s4443 + $0x300] sm:%s4435] %v4636
                %v4638 = vld [vmem:[%s4442 + $0x184] sm:%s4435]
                %4639 = vst [vmem:[%s4443 + $0x304] sm:%s4435] %v4638
                %v4640 = vld [vmem:[%s4442 + $0x188] sm:%s4435]
                %4641 = vst [vmem:[%s4443 + $0x308] sm:%s4435] %v4640
                %v4642 = vld [vmem:[%s4442 + $0x18c] sm:%s4435]
                %4643 = vst [vmem:[%s4443 + $0x30c] sm:%s4435] %v4642
                %v4644 = vld [vmem:[%s4442 + $0x190] sm:%s4435]
                %4645 = vst [vmem:[%s4443 + $0x310] sm:%s4435] %v4644
                %v4646 = vld [vmem:[%s4442 + $0x194] sm:%s4435]
                %4647 = vst [vmem:[%s4443 + $0x314] sm:%s4435] %v4646
                %v4648 = vld [vmem:[%s4442 + $0x198] sm:%s4435]
                %4649 = vst [vmem:[%s4443 + $0x318] sm:%s4435] %v4648
                %v4650 = vld [vmem:[%s4442 + $0x19c] sm:%s4435]
                %4651 = vst [vmem:[%s4443 + $0x31c] sm:%s4435] %v4650
                %v4652 = vld [vmem:[%s4442 + $0x1a0] sm:%s4435]
                %4653 = vst [vmem:[%s4443 + $0x320] sm:%s4435] %v4652
                %v4654 = vld [vmem:[%s4442 + $0x1a4] sm:%s4435]
                %4655 = vst [vmem:[%s4443 + $0x324] sm:%s4435] %v4654
                %v4656 = vld [vmem:[%s4442 + $0x1a8] sm:%s4435]
                %4657 = vst [vmem:[%s4443 + $0x328] sm:%s4435] %v4656
                %v4658 = vld [vmem:[%s4442 + $0x1ac] sm:%s4435]
                %4659 = vst [vmem:[%s4443 + $0x32c] sm:%s4435] %v4658
                %v4660 = vld [vmem:[%s4442 + $0x1b0] sm:%s4435]
                %4661 = vst [vmem:[%s4443 + $0x330] sm:%s4435] %v4660
                %v4662 = vld [vmem:[%s4442 + $0x1b4] sm:%s4435]
                %4663 = vst [vmem:[%s4443 + $0x334] sm:%s4435] %v4662
                %v4664 = vld [vmem:[%s4442 + $0x1b8] sm:%s4435]
                %4665 = vst [vmem:[%s4443 + $0x338] sm:%s4435] %v4664
                %v4666 = vld [vmem:[%s4442 + $0x1bc] sm:%s4435]
                %4667 = vst [vmem:[%s4443 + $0x33c] sm:%s4435] %v4666
                %v4668 = vld [vmem:[%s4442 + $0x1c0] sm:%s4435]
                %4669 = vst [vmem:[%s4443 + $0x340] sm:%s4435] %v4668
                %v4670 = vld [vmem:[%s4442 + $0x1c4] sm:%s4435]
                %4671 = vst [vmem:[%s4443 + $0x344] sm:%s4435] %v4670
                %v4672 = vld [vmem:[%s4442 + $0x1c8] sm:%s4435]
                %4673 = vst [vmem:[%s4443 + $0x348] sm:%s4435] %v4672
                %v4674 = vld [vmem:[%s4442 + $0x1cc] sm:%s4435]
                %4675 = vst [vmem:[%s4443 + $0x34c] sm:%s4435] %v4674
                %v4676 = vld [vmem:[%s4442 + $0x1d0] sm:%s4435]
                %4677 = vst [vmem:[%s4443 + $0x350] sm:%s4435] %v4676
                %v4678 = vld [vmem:[%s4442 + $0x1d4] sm:%s4435]
                %4679 = vst [vmem:[%s4443 + $0x354] sm:%s4435] %v4678
                %v4680 = vld [vmem:[%s4442 + $0x1d8] sm:%s4435]
                %4681 = vst [vmem:[%s4443 + $0x358] sm:%s4435] %v4680
                %v4682 = vld [vmem:[%s4442 + $0x1dc] sm:%s4435]
                %4683 = vst [vmem:[%s4443 + $0x35c] sm:%s4435] %v4682
                %v4684 = vld [vmem:[%s4442 + $0x1e0] sm:%s4435]
                %4685 = vst [vmem:[%s4443 + $0x360] sm:%s4435] %v4684
                %v4686 = vld [vmem:[%s4442 + $0x1e4] sm:%s4435]
                %4687 = vst [vmem:[%s4443 + $0x364] sm:%s4435] %v4686
                %v4688 = vld [vmem:[%s4442 + $0x1e8] sm:%s4435]
                %4689 = vst [vmem:[%s4443 + $0x368] sm:%s4435] %v4688
                %v4690 = vld [vmem:[%s4442 + $0x1ec] sm:%s4435]
                %4691 = vst [vmem:[%s4443 + $0x36c] sm:%s4435] %v4690
                %v4692 = vld [vmem:[%s4442 + $0x1f0] sm:%s4435]
                %4693 = vst [vmem:[%s4443 + $0x370] sm:%s4435] %v4692
                %v4694 = vld [vmem:[%s4442 + $0x1f4] sm:%s4435]
                %4695 = vst [vmem:[%s4443 + $0x374] sm:%s4435] %v4694
                %v4696 = vld [vmem:[%s4442 + $0x1f8] sm:%s4435]
                %4697 = vst [vmem:[%s4443 + $0x378] sm:%s4435] %v4696
                %v4698 = vld [vmem:[%s4442 + $0x1fc] sm:%s4435]
                %4699 = vst [vmem:[%s4443 + $0x37c] sm:%s4435] %v4698
              $region183: #{tpu_custom_call.1} parent=177 // loop_footer
                %s4441 = sadd.s32 1, %s4437
              $region184: #{tpu_custom_call.1} parent=177 // loop_footer_branch
                %4436 = sbr.rel target = $region180
              $region185: #{tpu_custom_call.1} parent=177 // loop_exit
                _
            $region178: #{tpu_custom_call.1} parent=169 // pred_fallthru
              _
          $region170: #{tpu_custom_call.1} parent=165 // pred_fallthru
            _
          %4976 = vnop
        $region166: #{tpu_custom_call.1} parent=55 // pred_fallthru
          _
      $region56: #{tpu_custom_call.1} parent=5 // pred_fallthru
        _
      %p4977 = scmp.le.s32.totalorder 2, %s26
      // Predicated region
      $region204: #{tpu_custom_call.1} parent=5 // pred_check
        %p4978 = pneg %p4977
      $region205: #{tpu_custom_call.1} parent=5 // pred_check_branch
        %4980 = sbr.rel (%p4978) target = $region207
      $region206: #{tpu_custom_call.1} parent=5 // pred_region
        %s4981 = ssub.s32 %s26, 2
        // Predicated region
        $region208: #{tpu_custom_call.1} parent=206 // pred_check
          %p4982 = pneg %p279
        $region209: #{tpu_custom_call.1} parent=206 // pred_check_branch
          %4984 = sbr.rel (%p4982) target = $region211
        $region210: #{tpu_custom_call.1} parent=206 // pred_region
          %s4985 = sand.u32 %s264, 1
          %s4986 = sand.u32 %s264, 1
          %s4987 = smul.addr %s4986, 512
          %s4988 = scalar_lea.vmem [#allocation12], %s4987
        $region211: #{tpu_custom_call.1} parent=206 // pred_fallthru
          _
        // Predicated region
        $region212: #{tpu_custom_call.1} parent=206 // pred_check
          %p4989 = pneg %p307
        $region213: #{tpu_custom_call.1} parent=206 // pred_check_branch
          %4991 = sbr.rel (%p4989) target = $region215
        $region214: #{tpu_custom_call.1} parent=206 // pred_region
          %s4992 = sand.u32 %s292, 1
          %s4993 = sand.u32 %s292, 1
          %s4994 = smul.addr %s4993, 512
          %s4995 = scalar_lea.vmem [#allocation13], %s4994
        $region215: #{tpu_custom_call.1} parent=206 // pred_fallthru
          _
        // Predicated region
        $region216: #{tpu_custom_call.1} parent=206 // pred_check
          %p4996 = pneg %p335
        $region217: #{tpu_custom_call.1} parent=206 // pred_check_branch
          %4998 = sbr.rel (%p4996) target = $region219
        $region218: #{tpu_custom_call.1} parent=206 // pred_region
          %s4999 = sand.u32 %s320, 1
          %s5000 = sand.u32 %s320, 1
          %s5001 = smul.addr %s5000, 512
          %s5002 = scalar_lea.vmem [#allocation14], %s5001
        $region219: #{tpu_custom_call.1} parent=206 // pred_fallthru
          _
      $region207: #{tpu_custom_call.1} parent=5 // pred_fallthru
        _
    $region6: #{tpu_custom_call.1} parent=1 // loop_footer
      %s30 = sadd.s32 1, %s26
    $region7: #{tpu_custom_call.1} parent=1 // loop_footer_branch
      %25 = sbr.rel target = $region3
    $region8: #{tpu_custom_call.1} parent=1 // loop_exit
      _
    %5003 = vsyncpa [#allocation3], 1
    %s5004 = scalar_lea.sflag [#allocation3], 1
    %5005 = vsyncpa %s5004, 1
    %5006 = vsyncpa [#allocation5], 1
    %s5007 = scalar_lea.sflag [#allocation5], 1
    %5008 = vsyncpa %s5007, 1
    %5009 = vsyncpa [#allocation8], 1
    %5010 = vsyncpa [#allocation11], 1

</llo_original>
